<compile_context>
chip_gen: v7x
topology: tpu7x:2x2x1
jax: 0.10.0
libtpu: 0.0.40
codegen_flags: <defaults>
</compile_context>

<pallas_src>
import functools

import jax
import jax.numpy as jnp
from jax.experimental import pallas as pl
from jax.experimental.pallas import tpu as pltpu

LEAKY_SLOPE = 0.01   # InPlaceABNSync default activation = leaky_relu(0.01)
BN_EPS = 1e-5


def _round_up(x, m):
    return (x + m - 1) // m * m


# ----------------------------------------------------------------------------
# Pallas kernel: fused 3x3 conv (bias-free) + BN (running stats) + leaky-relu
# ----------------------------------------------------------------------------
def _conv3x3_bn_lrelu_kernel(x_hbm, w_ref, s_ref, b_ref, o_ref,
                             xbuf, acc_ref, sem, *, w_resident):
    # x_hbm : (N, Hp+2, Wpad, Cin_pad) bf16 zero-padded input, left in HBM (pl.ANY)
    # w_ref : (n_cin, 9, TC, Cout_pad) bf16 raw conv weight
    #         - w_resident: whole array resident in VMEM, indexed with the Cin
    #           grid index; else a (1, 9, TC, Cout_pad) pipelined block.
    # s_ref : (1, Cout_pad) f32 BN scale  (gamma * rsqrt(var + eps))
    # b_ref : (1, Cout_pad) f32 BN shift  (beta - mean * scale)
    # o_ref : (1, TH, Wpad, Cout_pad) bf16 output block
    # xbuf  : (2, TH+2, Wpad, TC) bf16 double-buffered halo window (scratch)
    # acc_ref: (TH*Wpad, Cout_pad) f32 accumulator (persists across the Cin axis)
    # sem   : DMA semaphores, one per window slot
    n = pl.program_id(0)
    h = pl.program_id(1)
    c = pl.program_id(2)
    n_cin = pl.num_programs(2)

    _, th_p2, wpad, tc = xbuf.shape
    th = th_p2 - 2
    rows = th * wpad                        # flat row-major spatial extent

    def window_copy(ci, slot):
        # (TH+2, Wpad, TC) halo window of this spatial tile / Cin tile.
        src = x_hbm.at[n,
                       pl.ds(h * th, th + 2),
                       pl.ds(0, wpad),
                       pl.ds(ci * tc, tc)]
        return pltpu.make_async_copy(src, xbuf.at[slot], sem.at[slot])

    slot = c % 2

    # First Cin step of this spatial tile: start its window DMA and zero the
    # accumulator while the DMA is in flight.
    # TODO(synk): prefetching the *next spatial tile's* first window at
    # c == n_cin-1 would also hide this cold DMA, but predicting the next grid
    # point is unsafe when the "parallel" axes are sharded across TensorCores.
    @pl.when(c == 0)
    def _():
        window_copy(0, 0).start()
        acc_ref[...] = jnp.zeros_like(acc_ref)

    # Wait for this step's window (started here for c == 0, at step c-1 else).
    window_copy(c, slot).wait()

    # Prefetch the next Cin window into the other slot while we compute.
    @pl.when(c + 1 < n_cin)
    def _():
        window_copy(c + 1, 1 - slot).start()

    # Load each kh slab straight from the scratch window (no full-window
    # materialization).  Wpad is a multiple of 16 so the (TH, Wpad) -> rows
    # flatten is a layout-free reshape.
    xks = [xbuf[slot, pl.ds(kh, th)].reshape(rows, tc) for kh in range(3)]

    wc = c if w_resident else 0             # Cin block inside the weight ref

    contrib = None
    for kw in range(3):
        part = None
        for kh in range(3):
            m = jnp.dot(xks[kh], w_ref[wc, 3 * kh + kw],
                        preferred_element_type=jnp.float32)
            part = m if part is None else part + m
        # kw shift via an XLU roll of the f32 matmul output; wrap-around rows
        # land in the zero-padded don't-care columns (col 0 / cols >= W+1).
        shift = (1 - kw) % rows
        if shift:
            part = pltpu.roll(part, shift, axis=0)
        contrib = part if contrib is None else contrib + part
    acc_ref[...] += contrib

    # Epilogue on the last Cin step: BN affine (f32) + leaky_relu, bf16 store.
    @pl.when(c == n_cin - 1)
    def _():
        y = acc_ref[...] * s_ref[...] + b_ref[...]
        y = jnp.where(y >= 0, y, LEAKY_SLOPE * y)
        o_ref[...] = y.reshape(o_ref.shape).astype(o_ref.dtype)


def conv3x3_bn_lrelu_pallas(pieces, w_hwio, gamma, beta, mean, var,
                            *, tile_h=32, tile_cin=1024):
    """'Same' 3x3 conv (no bias) over concat(pieces, -1) + BN + leaky_relu.

    pieces: list of NHWC arrays sharing (N, H, W); their channels are treated
    as one concatenated input.  The concat / halo pad / bf16 cast are fused
    into a single padded staging buffer.  Returns a bf16 NHWC array.
    """
    N, H, W = (int(d) for d in pieces[0].shape[:3])
    Cin = sum(int(p.shape[-1]) for p in pieces)
    Cout = int(w_hwio.shape[-1])
    assert tuple(w_hwio.shape[:2]) == (3, 3) and int(w_hwio.shape[2]) == Cin

    # ---- geometry -----------------------------------------------------------
    c_out_pad = _round_up(Cout, 128)              # lane-dense output channels
    w_pad = _round_up(W + 2, 16)                  # bf16 sublane-aligned width
    assert w_pad >= W + 2                         # roll wrap must hit padding

    # Per-generation VMEM budget, with headroom for compiler temporaries
    # (v5e/v6e: ~105 MiB of 128; v7x: ~52 MiB of 64).
    try:
        vmem_cap = int(pltpu.get_tpu_info().vmem_capacity_bytes)
    except Exception:
        vmem_cap = 64 << 20                       # conservative fallback
    budget = max(32 << 20, int(vmem_cap * 0.82))

    def vmem_estimate(th_, tc_, resident):
        rows = th_ * w_pad
        cinp = _round_up(Cin, tc_)
        win = 2 * (th_ + 2) * w_pad * tc_ * 2             # halo double-buffer
        acc = rows * c_out_pad * 4                        # f32 accumulator
        outb = 2 * rows * c_out_pad * 2                   # bf16 output blocks
        wgt = (9 * cinp * c_out_pad * 2 if resident       # resident weight
               else 2 * 9 * tc_ * c_out_pad * 2)          # tiled, double-buffered
        tmp = 3 * rows * tc_ * 2 + 2 * rows * c_out_pad * 4  # kernel temporaries
        return win + acc + outb + wgt + tmp

    # Tile selection: hold the full weight VMEM-resident when it fits
    # (v5e/v6e); otherwise fall back to a Cin-tiled pipelined weight (v7x at
    # large Cin) while keeping the spatial tile as large as possible.
    th = max(1, min(tile_h, H))
    tc = min(_round_up(tile_cin, 128), _round_up(Cin, 128))
    w_resident = True
    while vmem_estimate(th, tc, w_resident) > budget:
        if (w_resident and th <= 16
                and vmem_estimate(th, tc, False) <= budget):
            w_resident = False
        elif th > 8:
            th = max(8, th // 2)
        elif tc > 256:
            tc = max(256, tc // 2)
        elif w_resident:
            w_resident = False
        else:
            break                                  # smallest config; let it ride
    # TODO(synk): on v7x (2 TensorCores) keep n_h >= 2 so the "parallel" h axis
    # can be sharded across cores; needs a reliable per-chip core-count query.

    c_in_pad = _round_up(Cin, tc)
    n_cin = c_in_pad // tc
    h_pad = _round_up(H, th)
    n_h = h_pad // th

    # ---- parameters ----------------------------------------------------------
    # BN scale stays in f32 and is applied in the epilogue (folding it into the
    # bf16 weight would amplify quantization error); the raw conv weight is
    # padded, regrouped per Cin tile and cast to bf16.
    scale = (gamma / jnp.sqrt(var + BN_EPS)).astype(jnp.float32)
    bn_shift = (beta - mean * scale).astype(jnp.float32)

    w_f = jnp.pad(w_hwio.astype(jnp.float32),
                  ((0, 0), (0, 0), (0, c_in_pad - Cin), (0, c_out_pad - Cout)))
    w_f = (w_f.reshape(9, n_cin, tc, c_out_pad)
              .transpose(1, 0, 2, 3)               # (n_cin, 9, tc, Cout_pad)
              .astype(jnp.bfloat16))
    s_f = jnp.pad(scale, (0, c_out_pad - Cout)).reshape(1, c_out_pad)
    b_f = jnp.pad(bn_shift, (0, c_out_pad - Cout)).reshape(1, c_out_pad)

    # ---- staging buffer: fused channel-concat + halo pad + bf16 cast ---------
    xp = jnp.zeros((N, h_pad + 2, w_pad, c_in_pad), jnp.bfloat16)
    off = 0
    for p in pieces:
        xp = jax.lax.dynamic_update_slice(xp, p.astype(jnp.bfloat16),
                                          (0, 1, 1, off))
        off += int(p.shape[-1])

    # ---- specs ----------------------------------------------------------------
    if w_resident:
        # Whole weight copied to VMEM once for the whole kernel (no per-tile
        # re-streaming); the kernel indexes it with the Cin grid index.
        w_spec = pl.BlockSpec(memory_space=pltpu.MemorySpace.VMEM)
    else:
        # Cin-tiled weight block (double-buffered by the pipeline).
        w_spec = pl.BlockSpec((1, 9, tc, c_out_pad),
                              lambda n, h, c: (c, 0, 0, 0))

    kernel = functools.partial(_conv3x3_bn_lrelu_kernel, w_resident=w_resident)

    out = pl.pallas_call(
        kernel,
        out_shape=jax.ShapeDtypeStruct((N, h_pad, w_pad, c_out_pad),
                                       jnp.bfloat16),
        grid_spec=pltpu.PrefetchScalarGridSpec(
            num_scalar_prefetch=0,
            grid=(N, n_h, n_cin),
            in_specs=[
                pl.BlockSpec(memory_space=pl.ANY),              # padded input, HBM
                w_spec,                                         # conv weight
                pl.BlockSpec((1, c_out_pad), lambda n, h, c: (0, 0)),   # BN scale
                pl.BlockSpec((1, c_out_pad), lambda n, h, c: (0, 0)),   # BN shift
            ],
            out_specs=pl.BlockSpec((1, th, w_pad, c_out_pad),
                                   lambda n, h, c: (n, h, 0, 0)),
            scratch_shapes=[
                pltpu.VMEM((2, th + 2, w_pad, tc), jnp.bfloat16),
                pltpu.VMEM((th * w_pad, c_out_pad), jnp.float32),
                pltpu.SemaphoreType.DMA((2,)),
            ]),
        compiler_params=pltpu.CompilerParams(
            dimension_semantics=("parallel", "parallel", "arbitrary"),
            vmem_limit_bytes=int(budget)),
    )(xp, w_f, s_f, b_f)

    # Slice off alignment padding (H tail, W halo/alignment, Cout lanes).
    # Padded rows/cols hold leaky_relu(shift); only the slice below may be used.
    return out[:, :H, 1:W + 1, :Cout]


# ----------------------------------------------------------------------------
# Plain-JAX glue (tiny tensors: pooled maps are at most 6x6)
# ----------------------------------------------------------------------------
def adaptive_avg_pool_nhwc(x, out_size):
    """PyTorch AdaptiveAvgPool2d: bin i spans [floor(i*H/s), ceil((i+1)*H/s))."""
    N, H, W, C = x.shape
    s = out_size
    rows = []
    for i in range(s):
        h0, h1 = (i * H) // s, -(-((i + 1) * H) // s)
        cols = []
        for j in range(s):
            w0, w1 = (j * W) // s, -(-((j + 1) * W) // s)
            cols.append(jnp.mean(x[:, h0:h1, w0:w1, :], axis=(1, 2)))
        rows.append(jnp.stack(cols, axis=1))            # (N, s, C)
    return jnp.stack(rows, axis=1)                      # (N, s, s, C)


def bilinear_upsample_align_corners(x, out_h, out_w):
    """F.interpolate(mode='bilinear', align_corners=True) on NHWC."""
    n, h, w, c = x.shape
    r = (jnp.zeros((out_h,), jnp.float32) if h == 1
         else jnp.arange(out_h, dtype=jnp.float32) * (h - 1) / (out_h - 1))
    s = (jnp.zeros((out_w,), jnp.float32) if w == 1
         else jnp.arange(out_w, dtype=jnp.float32) * (w - 1) / (out_w - 1))
    r0 = jnp.floor(r).astype(jnp.int32)
    c0 = jnp.floor(s).astype(jnp.int32)
    r1 = jnp.minimum(r0 + 1, h - 1)
    c1 = jnp.minimum(c0 + 1, w - 1)
    fr = (r - r0)[None, :, None, None]
    fc = (s - c0)[None, None, :, None]
    x_r0, x_r1 = x[:, r0, :, :], x[:, r1, :, :]
    top = x_r0[:, :, c0, :] * (1 - fc) + x_r0[:, :, c1, :] * fc
    bot = x_r1[:, :, c0, :] * (1 - fc) + x_r1[:, :, c1, :] * fc
    return top * (1 - fr) + bot * fr


def run_stage(x_nhwc, size, params, out_h, out_w):
    # TODO(synk): stages stay in plain JAX (pooled maps are <= 6x6, negligible).
    w_1x1, gamma, beta, mean, var = params
    pooled = adaptive_avg_pool_nhwc(x_nhwc, size)            # (N, s, s, Cin)
    y = jnp.einsum('nhwc,co->nhwo', pooled, w_1x1)           # 1x1 conv, no bias
    scale = gamma / jnp.sqrt(var + BN_EPS)
    y = y * scale + (beta - mean * scale)                    # BN (running stats)
    y = jnp.where(y >= 0, y, LEAKY_SLOPE * y)                # leaky_relu(0.01)
    return bilinear_upsample_align_corners(y, out_h, out_w)


def build_priors(feats_nchw, stage_params, sizes):
    x = jnp.transpose(feats_nchw, (0, 2, 3, 1))              # NCHW -> NHWC
    N, H, W, C = x.shape
    priors = [run_stage(x, sz, p, H, W) for sz, p in zip(sizes, stage_params)]
    priors.append(x)
    return priors                                            # list of NHWC pieces


def psp_module_forward(feats_nchw, stage_params, bottleneck_params, sizes):
    priors = build_priors(feats_nchw, stage_params, sizes)
    wb, gb, bb, mb, vb = bottleneck_params
    out_nhwc = conv3x3_bn_lrelu_pallas(priors, wb, gb, bb, mb, vb)
    # Dropout2d(0.1) is identity in eval mode.
    return jnp.transpose(out_nhwc, (0, 3, 1, 2)).astype(feats_nchw.dtype)


# Pure-JAX reference of the bottleneck conv path (same bf16 rounding of the
# inputs / raw weights as the kernel, f32 math, f32 BN affine).
def _bottleneck_ref(cat_nhwc, w, gamma, beta, mean, var):
    scale = gamma / jnp.sqrt(var + BN_EPS)
    w_b = w.astype(jnp.bfloat16).astype(jnp.float32)
    x_b = cat_nhwc.astype(jnp.bfloat16).astype(jnp.float32)
    y = jax.lax.conv_general_dilated(
        x_b, w_b, window_strides=(1, 1), padding='SAME',
        dimension_numbers=('NHWC', 'HWIO', 'NHWC'),
        precision=jax.lax.Precision.HIGHEST)
    y = y * scale + (beta - mean * scale)
    return jnp.where(y >= 0, y, LEAKY_SLOPE * y)


if __name__ == "__main__":
    N, C, H, W = 2, 4, 16, 16          # features=4
    OUT = 8                            # out_features (small synthetic)
    SIZES = (1, 2, 3, 6)

    keys = iter(jax.random.split(jax.random.PRNGKey(0), 64))
    feats = jax.random.normal(next(keys), (N, C, H, W), jnp.float32)

    # Deterministic synthetic parameters (conv weights + BN stats per block).
    stage_params = []
    for _ in SIZES:
        w = 0.1 * jax.random.normal(next(keys), (C, OUT), jnp.float32)
        gamma = 1.0 + 0.1 * jax.random.normal(next(keys), (OUT,), jnp.float32)
        beta = 0.1 * jax.random.normal(next(keys), (OUT,), jnp.float32)
        mean = 0.1 * jax.random.normal(next(keys), (OUT,), jnp.float32)
        var = jnp.abs(jax.random.normal(next(keys), (OUT,), jnp.float32)) + 0.5
        stage_params.append((w, gamma, beta, mean, var))

    cin_b = C + len(SIZES) * OUT
    wb = 0.05 * jax.random.normal(next(keys), (3, 3, cin_b, OUT), jnp.float32)
    gb = 1.0 + 0.1 * jax.random.normal(next(keys), (OUT,), jnp.float32)
    bb = 0.1 * jax.random.normal(next(keys), (OUT,), jnp.float32)
    mb = 0.1 * jax.random.normal(next(keys), (OUT,), jnp.float32)
    vb = jnp.abs(jax.random.normal(next(keys), (OUT,), jnp.float32)) + 0.5
    bottleneck_params = (wb, gb, bb, mb, vb)

    fwd = jax.jit(lambda f: psp_module_forward(f, stage_params,
                                               bottleneck_params, SIZES))
    out = jax.block_until_ready(fwd(feats))
    assert out.shape == (N, OUT, H, W), out.shape

    # Sanity check: Pallas fused conv matches a lax.conv reference computed on
    # the same bf16-rounded operands (tolerance covers the bf16 output store).
    priors = build_priors(feats, stage_params, SIZES)
    cat = jnp.concatenate(priors, axis=-1)
    ref = _bottleneck_ref(cat, wb, gb, bb, mb, vb)
    got = jnp.transpose(out, (0, 2, 3, 1)).astype(jnp.float32)
    err = float(jnp.max(jnp.abs(ref - got)))
    tol = 3e-3 + 8e-3 * float(jnp.max(jnp.abs(ref)))
    assert err < tol, (err, tol)

    print("KERNEL_OK")
</pallas_src>

<mosaic_0001>
module attributes {stable_mosaic.version = 11 : i64} {
  func.func @_conv3x3_bn_lrelu_kernel(%arg0: i32, %arg1: i32, %arg2: i32, %arg3: memref<2x18x32x128xbf16, #tpu.memory_space<any>>, %arg4: memref<1x9x128x128xbf16, #tpu.memory_space<vmem>>, %arg5: memref<1x128xf32, #tpu.memory_space<vmem>>, %arg6: memref<1x128xf32, #tpu.memory_space<vmem>>, %arg7: memref<1x16x32x128xbf16, #tpu.memory_space<vmem>>, %arg8: memref<2x18x32x128xbf16, #tpu.memory_space<vmem>>, %arg9: memref<512x128xf32, #tpu.memory_space<vmem>>, %arg10: memref<2x!tpu.dma_semaphore, #tpu.memory_space<semaphore_mem>>) attributes {dimension_semantics = [#tpu.dimension_semantics<parallel>, #tpu.dimension_semantics<parallel>, #tpu.dimension_semantics<arbitrary>], iteration_bounds = array<i64: 2, 1, 1>, scalar_prefetch = 0 : i64, scratch_operands = 3 : i64, tpu.core_type = #tpu.core_type<tc>, window_params = [{}, {pipeline_mode = #tpu.pipeline_mode<synchronous>, transform_indices = @transform_1, window_bounds = array<i64: 1, 9, 128, 128>}, {pipeline_mode = #tpu.pipeline_mode<synchronous>, transform_indices = @transform_2, window_bounds = array<i64: 1, 128>}, {pipeline_mode = #tpu.pipeline_mode<synchronous>, transform_indices = @transform_3, window_bounds = array<i64: 1, 128>}, {transform_indices = @transform_4, window_bounds = array<i64: 1, 16, 32, 128>}]} {
    %c2_i32 = arith.constant 2 : i32
    %c0_i32 = arith.constant 0 : i32
    %0 = arith.cmpi eq, %c2_i32, %c0_i32 : i32
    %c1_i32 = arith.constant 1 : i32
    %1 = arith.select %0, %c1_i32, %c2_i32 : i32
    %2 = arith.remsi %arg2, %1 : i32
    %c0_i32_0 = arith.constant 0 : i32
    %3 = arith.cmpi ne, %2, %c0_i32_0 : i32
    %c0_i32_1 = arith.constant 0 : i32
    %4 = arith.cmpi slt, %2, %c0_i32_1 : i32
    %c0_i32_2 = arith.constant 0 : i32
    %5 = arith.cmpi slt, %1, %c0_i32_2 : i32
    %6 = arith.xori %4, %5 : i1
    %7 = arith.andi %6, %3 : i1
    %8 = arith.addi %2, %1 : i32
    %9 = arith.select %7, %8, %2 : i32
    %c0_i32_3 = arith.constant 0 : i32
    %10 = arith.cmpi eq, %arg2, %c0_i32_3 : i32
    %11 = arith.extui %10 : i1 to i32
    %c0_i32_4 = arith.constant 0 : i32
    %12 = arith.cmpi ne, %11, %c0_i32_4 : i32
    scf.if %12 {
      %c16_i32_54 = arith.constant 16 : i32
      %89 = arith.muli %arg1, %c16_i32_54 : i32
      %c0_i32_55 = arith.constant 0 : i32
      %c0_i32_56 = arith.constant 0 : i32
      %c0_i32_57 = arith.constant 0 : i32
      %c0_i32_58 = arith.constant 0 : i32
      %90 = tpu.memref_slice %arg3[%arg0, %89, %c0_i32_57, %c0_i32_58] : memref<2x18x32x128xbf16, #tpu.memory_space<any>> -> memref<1x18x32x128xbf16, #tpu.memory_space<any>>
      %91 = tpu.memref_squeeze %90 : memref<1x18x32x128xbf16, #tpu.memory_space<any>> -> memref<18x32x128xbf16, #tpu.memory_space<any>>
      %c0_i32_59 = arith.constant 0 : i32
      %c0_i32_60 = arith.constant 0 : i32
      %c0_i32_61 = arith.constant 0 : i32
      %92 = tpu.memref_slice %arg8[%c0_i32_55, %c0_i32_59, %c0_i32_60, %c0_i32_61] : memref<2x18x32x128xbf16, #tpu.memory_space<vmem>> -> memref<1x18x32x128xbf16, #tpu.memory_space<vmem>>
      %93 = tpu.memref_squeeze %92 : memref<1x18x32x128xbf16, #tpu.memory_space<vmem>> -> memref<18x32x128xbf16, #tpu.memory_space<vmem>>
      %94 = tpu.memref_slice %arg10[%c0_i32_56] : memref<2x!tpu.dma_semaphore, #tpu.memory_space<semaphore_mem>> -> memref<1x!tpu.dma_semaphore, #tpu.memory_space<semaphore_mem>>
      %95 = tpu.memref_squeeze %94 : memref<1x!tpu.dma_semaphore, #tpu.memory_space<semaphore_mem>> -> memref<!tpu.dma_semaphore, #tpu.memory_space<semaphore_mem>>
      tpu.enqueue_dma source(%91 : memref<18x32x128xbf16, #tpu.memory_space<any>>) target(%93 : memref<18x32x128xbf16, #tpu.memory_space<vmem>>) target_semaphore(%95 : memref<!tpu.dma_semaphore, #tpu.memory_space<semaphore_mem>>)
      %cst_62 = arith.constant 0.000000e+00 : f32
      %96 = vector.broadcast %cst_62 : f32 to vector<512x128xf32>
      %c0_63 = arith.constant 0 : index
      %c0_64 = arith.constant 0 : index
      %97 = vector.load %arg9[%c0_63, %c0_64] : memref<512x128xf32, #tpu.memory_space<vmem>>, vector<512x128xf32>
      tpu.vector_store %arg9[%c0_63, %c0_64], %96 {strides = array<i32>} : memref<512x128xf32, #tpu.memory_space<vmem>>, vector<512x128xf32>,
    } else {
    }
    %c16_i32 = arith.constant 16 : i32
    %13 = arith.muli %arg1, %c16_i32 : i32
    %c128_i32 = arith.constant 128 : i32
    %14 = arith.muli %arg2, %c128_i32 : i32
    %c0_i32_5 = arith.constant 0 : i32
    %15 = tpu.memref_slice %arg3[%arg0, %13, %c0_i32_5, %14] : memref<2x18x32x128xbf16, #tpu.memory_space<any>> -> memref<1x18x32x128xbf16, #tpu.memory_space<any>>
    %16 = tpu.memref_squeeze %15 : memref<1x18x32x128xbf16, #tpu.memory_space<any>> -> memref<18x32x128xbf16, #tpu.memory_space<any>>
    %c0_i32_6 = arith.constant 0 : i32
    %c0_i32_7 = arith.constant 0 : i32
    %c0_i32_8 = arith.constant 0 : i32
    %17 = tpu.memref_slice %arg8[%9, %c0_i32_6, %c0_i32_7, %c0_i32_8] : memref<2x18x32x128xbf16, #tpu.memory_space<vmem>> -> memref<1x18x32x128xbf16, #tpu.memory_space<vmem>>
    %18 = tpu.memref_squeeze %17 : memref<1x18x32x128xbf16, #tpu.memory_space<vmem>> -> memref<18x32x128xbf16, #tpu.memory_space<vmem>>
    %19 = tpu.memref_slice %arg10[%9] : memref<2x!tpu.dma_semaphore, #tpu.memory_space<semaphore_mem>> -> memref<1x!tpu.dma_semaphore, #tpu.memory_space<semaphore_mem>>
    %20 = tpu.memref_squeeze %19 : memref<1x!tpu.dma_semaphore, #tpu.memory_space<semaphore_mem>> -> memref<!tpu.dma_semaphore, #tpu.memory_space<semaphore_mem>>
    tpu.wait_dma2 semaphore(%20 : memref<!tpu.dma_semaphore, #tpu.memory_space<semaphore_mem>>) src(%16 : memref<18x32x128xbf16, #tpu.memory_space<any>>) dst(%18 : memref<18x32x128xbf16, #tpu.memory_space<vmem>>)
    %c1_i32_9 = arith.constant 1 : i32
    %21 = arith.addi %arg2, %c1_i32_9 : i32
    %c1_i32_10 = arith.constant 1 : i32
    %22 = arith.cmpi slt, %21, %c1_i32_10 : i32
    %23 = arith.extui %22 : i1 to i32
    %c0_i32_11 = arith.constant 0 : i32
    %24 = arith.cmpi ne, %23, %c0_i32_11 : i32
    scf.if %24 {
      %c1_i32_54 = arith.constant 1 : i32
      %89 = arith.addi %arg2, %c1_i32_54 : i32
      %c1_i32_55 = arith.constant 1 : i32
      %90 = arith.subi %c1_i32_55, %9 : i32
      %c16_i32_56 = arith.constant 16 : i32
      %91 = arith.muli %arg1, %c16_i32_56 : i32
      %c128_i32_57 = arith.constant 128 : i32
      %92 = arith.muli %89, %c128_i32_57 : i32
      %c0_i32_58 = arith.constant 0 : i32
      %93 = tpu.memref_slice %arg3[%arg0, %91, %c0_i32_58, %92] : memref<2x18x32x128xbf16, #tpu.memory_space<any>> -> memref<1x18x32x128xbf16, #tpu.memory_space<any>>
      %94 = tpu.memref_squeeze %93 : memref<1x18x32x128xbf16, #tpu.memory_space<any>> -> memref<18x32x128xbf16, #tpu.memory_space<any>>
      %c0_i32_59 = arith.constant 0 : i32
      %c0_i32_60 = arith.constant 0 : i32
      %c0_i32_61 = arith.constant 0 : i32
      %95 = tpu.memref_slice %arg8[%90, %c0_i32_59, %c0_i32_60, %c0_i32_61] : memref<2x18x32x128xbf16, #tpu.memory_space<vmem>> -> memref<1x18x32x128xbf16, #tpu.memory_space<vmem>>
      %96 = tpu.memref_squeeze %95 : memref<1x18x32x128xbf16, #tpu.memory_space<vmem>> -> memref<18x32x128xbf16, #tpu.memory_space<vmem>>
      %97 = tpu.memref_slice %arg10[%90] : memref<2x!tpu.dma_semaphore, #tpu.memory_space<semaphore_mem>> -> memref<1x!tpu.dma_semaphore, #tpu.memory_space<semaphore_mem>>
      %98 = tpu.memref_squeeze %97 : memref<1x!tpu.dma_semaphore, #tpu.memory_space<semaphore_mem>> -> memref<!tpu.dma_semaphore, #tpu.memory_space<semaphore_mem>>
      tpu.enqueue_dma source(%94 : memref<18x32x128xbf16, #tpu.memory_space<any>>) target(%96 : memref<18x32x128xbf16, #tpu.memory_space<vmem>>) target_semaphore(%98 : memref<!tpu.dma_semaphore, #tpu.memory_space<semaphore_mem>>)
    } else {
    }
    %25 = arith.index_cast %9 : i32 to index
    %c0 = arith.constant 0 : index
    %c0_12 = arith.constant 0 : index
    %c0_13 = arith.constant 0 : index
    %26 = vector.load %arg8[%25, %c0, %c0_12, %c0_13] : memref<2x18x32x128xbf16, #tpu.memory_space<vmem>>, vector<1x16x32x128xbf16>
    %27 = vector.shape_cast %26 : vector<1x16x32x128xbf16> to vector<16x32x128xbf16>
    %28 = vector.shape_cast %27 : vector<16x32x128xbf16> to vector<512x128xbf16>
    %29 = arith.index_cast %9 : i32 to index
    %c1 = arith.constant 1 : index
    %c0_14 = arith.constant 0 : index
    %c0_15 = arith.constant 0 : index
    %30 = vector.load %arg8[%29, %c1, %c0_14, %c0_15] : memref<2x18x32x128xbf16, #tpu.memory_space<vmem>>, vector<1x16x32x128xbf16>
    %31 = vector.shape_cast %30 : vector<1x16x32x128xbf16> to vector<16x32x128xbf16>
    %32 = vector.shape_cast %31 : vector<16x32x128xbf16> to vector<512x128xbf16>
    %33 = arith.index_cast %9 : i32 to index
    %c2 = arith.constant 2 : index
    %c0_16 = arith.constant 0 : index
    %c0_17 = arith.constant 0 : index
    %34 = vector.load %arg8[%33, %c2, %c0_16, %c0_17] : memref<2x18x32x128xbf16, #tpu.memory_space<vmem>>, vector<1x16x32x128xbf16>
    %35 = vector.shape_cast %34 : vector<1x16x32x128xbf16> to vector<16x32x128xbf16>
    %36 = vector.shape_cast %35 : vector<16x32x128xbf16> to vector<512x128xbf16>
    %37 = arith.index_cast %arg2 : i32 to index
    %c0_18 = arith.constant 0 : index
    %c0_19 = arith.constant 0 : index
    %c0_20 = arith.constant 0 : index
    %38 = vector.load %arg4[%37, %c0_18, %c0_19, %c0_20] : memref<1x9x128x128xbf16, #tpu.memory_space<vmem>>, vector<1x1x128x128xbf16>
    %39 = vector.shape_cast %38 : vector<1x1x128x128xbf16> to vector<128x128xbf16>
    %cst = arith.constant dense<0.000000e+00> : vector<512x128xf32>
    %40 = tpu.matmul %28, %39, %cst {dimension_numbers = #tpu.dot_dimension_numbers<[1], [0], [0], [1], [0, 0, 1, 1], [], []>} : vector<512x128xbf16>, vector<128x128xbf16>, vector<512x128xf32> -> vector<512x128xf32>
    %41 = arith.index_cast %arg2 : i32 to index
    %c3 = arith.constant 3 : index
    %c0_21 = arith.constant 0 : index
    %c0_22 = arith.constant 0 : index
    %42 = vector.load %arg4[%41, %c3, %c0_21, %c0_22] : memref<1x9x128x128xbf16, #tpu.memory_space<vmem>>, vector<1x1x128x128xbf16>
    %43 = vector.shape_cast %42 : vector<1x1x128x128xbf16> to vector<128x128xbf16>
    %cst_23 = arith.constant dense<0.000000e+00> : vector<512x128xf32>
    %44 = tpu.matmul %32, %43, %cst_23 {dimension_numbers = #tpu.dot_dimension_numbers<[1], [0], [0], [1], [0, 0, 1, 1], [], []>} : vector<512x128xbf16>, vector<128x128xbf16>, vector<512x128xf32> -> vector<512x128xf32>
    %45 = arith.addf %40, %44 : vector<512x128xf32>
    %46 = arith.index_cast %arg2 : i32 to index
    %c6 = arith.constant 6 : index
    %c0_24 = arith.constant 0 : index
    %c0_25 = arith.constant 0 : index
    %47 = vector.load %arg4[%46, %c6, %c0_24, %c0_25] : memref<1x9x128x128xbf16, #tpu.memory_space<vmem>>, vector<1x1x128x128xbf16>
    %48 = vector.shape_cast %47 : vector<1x1x128x128xbf16> to vector<128x128xbf16>
    %cst_26 = arith.constant dense<0.000000e+00> : vector<512x128xf32>
    %49 = tpu.matmul %36, %48, %cst_26 {dimension_numbers = #tpu.dot_dimension_numbers<[1], [0], [0], [1], [0, 0, 1, 1], [], []>} : vector<512x128xbf16>, vector<128x128xbf16>, vector<512x128xf32> -> vector<512x128xf32>
    %50 = arith.addf %45, %49 : vector<512x128xf32>
    %c1_i32_27 = arith.constant 1 : i32
    %51 = tpu.dynamic_rotate %50 by %c1_i32_27 dim 0 : vector<512x128xf32>, i32 -> vector<512x128xf32>
    %52 = arith.index_cast %arg2 : i32 to index
    %c1_28 = arith.constant 1 : index
    %c0_29 = arith.constant 0 : index
    %c0_30 = arith.constant 0 : index
    %53 = vector.load %arg4[%52, %c1_28, %c0_29, %c0_30] : memref<1x9x128x128xbf16, #tpu.memory_space<vmem>>, vector<1x1x128x128xbf16>
    %54 = vector.shape_cast %53 : vector<1x1x128x128xbf16> to vector<128x128xbf16>
    %cst_31 = arith.constant dense<0.000000e+00> : vector<512x128xf32>
    %55 = tpu.matmul %28, %54, %cst_31 {dimension_numbers = #tpu.dot_dimension_numbers<[1], [0], [0], [1], [0, 0, 1, 1], [], []>} : vector<512x128xbf16>, vector<128x128xbf16>, vector<512x128xf32> -> vector<512x128xf32>
    %56 = arith.index_cast %arg2 : i32 to index
    %c4 = arith.constant 4 : index
    %c0_32 = arith.constant 0 : index
    %c0_33 = arith.constant 0 : index
    %57 = vector.load %arg4[%56, %c4, %c0_32, %c0_33] : memref<1x9x128x128xbf16, #tpu.memory_space<vmem>>, vector<1x1x128x128xbf16>
    %58 = vector.shape_cast %57 : vector<1x1x128x128xbf16> to vector<128x128xbf16>
    %cst_34 = arith.constant dense<0.000000e+00> : vector<512x128xf32>
    %59 = tpu.matmul %32, %58, %cst_34 {dimension_numbers = #tpu.dot_dimension_numbers<[1], [0], [0], [1], [0, 0, 1, 1], [], []>} : vector<512x128xbf16>, vector<128x128xbf16>, vector<512x128xf32> -> vector<512x128xf32>
    %60 = arith.addf %55, %59 : vector<512x128xf32>
    %61 = arith.index_cast %arg2 : i32 to index
    %c7 = arith.constant 7 : index
    %c0_35 = arith.constant 0 : index
    %c0_36 = arith.constant 0 : index
    %62 = vector.load %arg4[%61, %c7, %c0_35, %c0_36] : memref<1x9x128x128xbf16, #tpu.memory_space<vmem>>, vector<1x1x128x128xbf16>
    %63 = vector.shape_cast %62 : vector<1x1x128x128xbf16> to vector<128x128xbf16>
    %cst_37 = arith.constant dense<0.000000e+00> : vector<512x128xf32>
    %64 = tpu.matmul %36, %63, %cst_37 {dimension_numbers = #tpu.dot_dimension_numbers<[1], [0], [0], [1], [0, 0, 1, 1], [], []>} : vector<512x128xbf16>, vector<128x128xbf16>, vector<512x128xf32> -> vector<512x128xf32>
    %65 = arith.addf %60, %64 : vector<512x128xf32>
    %66 = arith.addf %51, %65 : vector<512x128xf32>
    %67 = arith.index_cast %arg2 : i32 to index
    %c2_38 = arith.constant 2 : index
    %c0_39 = arith.constant 0 : index
    %c0_40 = arith.constant 0 : index
    %68 = vector.load %arg4[%67, %c2_38, %c0_39, %c0_40] : memref<1x9x128x128xbf16, #tpu.memory_space<vmem>>, vector<1x1x128x128xbf16>
    %69 = vector.shape_cast %68 : vector<1x1x128x128xbf16> to vector<128x128xbf16>
    %cst_41 = arith.constant dense<0.000000e+00> : vector<512x128xf32>
    %70 = tpu.matmul %28, %69, %cst_41 {dimension_numbers = #tpu.dot_dimension_numbers<[1], [0], [0], [1], [0, 0, 1, 1], [], []>} : vector<512x128xbf16>, vector<128x128xbf16>, vector<512x128xf32> -> vector<512x128xf32>
    %71 = arith.index_cast %arg2 : i32 to index
    %c5 = arith.constant 5 : index
    %c0_42 = arith.constant 0 : index
    %c0_43 = arith.constant 0 : index
    %72 = vector.load %arg4[%71, %c5, %c0_42, %c0_43] : memref<1x9x128x128xbf16, #tpu.memory_space<vmem>>, vector<1x1x128x128xbf16>
    %73 = vector.shape_cast %72 : vector<1x1x128x128xbf16> to vector<128x128xbf16>
    %cst_44 = arith.constant dense<0.000000e+00> : vector<512x128xf32>
    %74 = tpu.matmul %32, %73, %cst_44 {dimension_numbers = #tpu.dot_dimension_numbers<[1], [0], [0], [1], [0, 0, 1, 1], [], []>} : vector<512x128xbf16>, vector<128x128xbf16>, vector<512x128xf32> -> vector<512x128xf32>
    %75 = arith.addf %70, %74 : vector<512x128xf32>
    %76 = arith.index_cast %arg2 : i32 to index
    %c8 = arith.constant 8 : index
    %c0_45 = arith.constant 0 : index
    %c0_46 = arith.constant 0 : index
    %77 = vector.load %arg4[%76, %c8, %c0_45, %c0_46] : memref<1x9x128x128xbf16, #tpu.memory_space<vmem>>, vector<1x1x128x128xbf16>
    %78 = vector.shape_cast %77 : vector<1x1x128x128xbf16> to vector<128x128xbf16>
    %cst_47 = arith.constant dense<0.000000e+00> : vector<512x128xf32>
    %79 = tpu.matmul %36, %78, %cst_47 {dimension_numbers = #tpu.dot_dimension_numbers<[1], [0], [0], [1], [0, 0, 1, 1], [], []>} : vector<512x128xbf16>, vector<128x128xbf16>, vector<512x128xf32> -> vector<512x128xf32>
    %80 = arith.addf %75, %79 : vector<512x128xf32>
    %c511_i32 = arith.constant 511 : i32
    %81 = tpu.dynamic_rotate %80 by %c511_i32 dim 0 : vector<512x128xf32>, i32 -> vector<512x128xf32>
    %82 = arith.addf %66, %81 : vector<512x128xf32>
    %c0_48 = arith.constant 0 : index
    %c0_49 = arith.constant 0 : index
    %83 = vector.load %arg9[%c0_48, %c0_49] : memref<512x128xf32, #tpu.memory_space<vmem>>, vector<512x128xf32>
    %84 = arith.addf %83, %82 : vector<512x128xf32>
    %c0_50 = arith.constant 0 : index
    %c0_51 = arith.constant 0 : index
    %85 = vector.load %arg9[%c0_50, %c0_51] : memref<512x128xf32, #tpu.memory_space<vmem>>, vector<512x128xf32>
    tpu.vector_store %arg9[%c0_50, %c0_51], %84 {strides = array<i32>} : memref<512x128xf32, #tpu.memory_space<vmem>>, vector<512x128xf32>,
    %c0_i32_52 = arith.constant 0 : i32
    %86 = arith.cmpi eq, %arg2, %c0_i32_52 : i32
    %87 = arith.extui %86 : i1 to i32
    %c0_i32_53 = arith.constant 0 : i32
    %88 = arith.cmpi ne, %87, %c0_i32_53 : i32
    scf.if %88 {
      %c0_54 = arith.constant 0 : index
      %c0_55 = arith.constant 0 : index
      %89 = vector.load %arg9[%c0_54, %c0_55] : memref<512x128xf32, #tpu.memory_space<vmem>>, vector<512x128xf32>
      %c0_56 = arith.constant 0 : index
      %c0_57 = arith.constant 0 : index
      %90 = vector.load %arg5[%c0_56, %c0_57] : memref<1x128xf32, #tpu.memory_space<vmem>>, vector<1x128xf32>
      %91 = vector.broadcast %90 : vector<1x128xf32> to vector<512x128xf32>
      %92 = arith.mulf %89, %91 : vector<512x128xf32>
      %c0_58 = arith.constant 0 : index
      %c0_59 = arith.constant 0 : index
      %93 = vector.load %arg6[%c0_58, %c0_59] : memref<1x128xf32, #tpu.memory_space<vmem>>, vector<1x128xf32>
      %94 = vector.broadcast %93 : vector<1x128xf32> to vector<512x128xf32>
      %95 = arith.addf %92, %94 : vector<512x128xf32>
      %cst_60 = arith.constant 0.000000e+00 : f32
      %96 = vector.broadcast %cst_60 : f32 to vector<512x128xf32>
      %97 = arith.cmpf oge, %95, %96 : vector<512x128xf32>
      %cst_61 = arith.constant 0.00999999977 : f32
      %98 = vector.broadcast %cst_61 : f32 to vector<512x128xf32>
      %99 = arith.mulf %98, %95 : vector<512x128xf32>
      %100 = arith.select %97, %95, %99 : vector<512x128xi1>, vector<512x128xf32>
      %101 = vector.shape_cast %100 : vector<512x128xf32> to vector<1x16x32x128xf32>
      %102 = arith.truncf %101 : vector<1x16x32x128xf32> to vector<1x16x32x128xbf16>
      %c0_62 = arith.constant 0 : index
      %c0_63 = arith.constant 0 : index
      %c0_64 = arith.constant 0 : index
      %c0_65 = arith.constant 0 : index
      %103 = vector.load %arg7[%c0_62, %c0_63, %c0_64, %c0_65] : memref<1x16x32x128xbf16, #tpu.memory_space<vmem>>, vector<1x16x32x128xbf16>
      tpu.vector_store %arg7[%c0_62, %c0_63, %c0_64, %c0_65], %102 {strides = array<i32>} : memref<1x16x32x128xbf16, #tpu.memory_space<vmem>>, vector<1x16x32x128xbf16>,
    } else {
    }
    return
  }
  func.func @transform_1(%arg0: i32, %arg1: i32, %arg2: i32) -> (i32, i32, i32, i32) {
    %c0_i32 = arith.constant 0 : i32
    %c0_i32_0 = arith.constant 0 : i32
    %c0_i32_1 = arith.constant 0 : i32
    %c0_i32_2 = arith.constant 0 : i32
    %c0_i32_3 = arith.constant 0 : i32
    return %c0_i32, %c0_i32_0, %c0_i32_1, %c0_i32_2 : i32, i32, i32, i32
  }
  func.func @transform_2(%arg0: i32, %arg1: i32, %arg2: i32) -> (i32, i32) {
    %c0_i32 = arith.constant 0 : i32
    %c0_i32_0 = arith.constant 0 : i32
    %c0_i32_1 = arith.constant 0 : i32
    return %c0_i32, %c0_i32_0 : i32, i32
  }
  func.func @transform_3(%arg0: i32, %arg1: i32, %arg2: i32) -> (i32, i32) {
    %c0_i32 = arith.constant 0 : i32
    %c0_i32_0 = arith.constant 0 : i32
    %c0_i32_1 = arith.constant 0 : i32
    return %c0_i32, %c0_i32_0 : i32, i32
  }
  func.func @transform_4(%arg0: i32, %arg1: i32, %arg2: i32) -> (i32, i32, i32, i32) {
    %c0_i32 = arith.constant 0 : i32
    %c0_i32_0 = arith.constant 0 : i32
    %c0_i32_1 = arith.constant 0 : i32
    return %arg0, %arg1, %c0_i32, %c0_i32_0 : i32, i32, i32, i32
  }
}

</mosaic_0001>

<llo_original>
// kernel: _lambda_.1
$region0: #{_lambda_.1}
  #allocation0 [shape = 'u32[]', space=smem, size = 0x4, offset = 0x4, fixed_abs, tag = 'smem constant byte address 0x4 - core index']
  #allocation1 [shape = 'u32[144,128]{1,0:T(1,128)}', space=vmem, size = 0x12000, scoped, tag = 'internal scratch']
  #allocation2 [shape = 'bf16[2,18,32,128]{3,2,1,0:T(16,128)(2,1)}', space=vmem, size = 0x48000, scoped, tag = 'scratch operand']
  #allocation3 [shape = 'f32[512,128]{1,0:T(8,128)}', space=vmem, size = 0x40000, scoped, tag = 'scratch operand']
  #allocation4 [shape = 's32[2]{0}', space=sflag, size = 0x8, scoped, tag = 'scratch operand']
  #allocation5 [shape = 's32[]', space=sflag, size = 0x4, offset = 0, fixed_abs, tag = 'sflag constant byte address 0x0 - dummy sync flag']
  #allocation6 [shape = 's32[]', space=sflag, size = 0x4, offset = 0, fixed_abs, tag = 'sflag constant byte address 0x0 - dummy sync flag']
  %s0 = inlined_call_operand.vmem [shape: bf16[2,18,32,128], index: 0, kind: input, shape index: {}]
  %s1 = inlined_call_operand.vmem [shape: bf16[1,9,128,128], index: 1, kind: input, shape index: {}]
  %s2 = inlined_call_operand.vmem [shape: f32[1,128], index: 2, kind: input, shape index: {}]
  %s3 = inlined_call_operand.vmem [shape: f32[1,128], index: 3, kind: input, shape index: {}]
  %s4 = inlined_call_operand.vmem [shape: bf16[2,16,32,128], index: 4, kind: output, shape index: {}]
  %s5 = sld [smem:[#allocation0]]
  $region125: #{_lambda_.1} parent=0
    _
  %s7 = ssub.s32 1, %s5
  %s8 = scalar_select 0, %s7, %s5
  loop: start=0, step=1, limit=4
  $region2: #{_lambda_.1} parent=0 // loop_pre_header
    _
  $region3: #{_lambda_.1} parent=0 // loop_header
    %s10 = sphi 0, %s14
    %p11 = scmp.ge.s32.totalorder %s10, 4
    %s17 = sphi 0, %s36
    %s18 = sphi 0, %s32
    %s19 = sphi 0, %s28
    %s20 = sphi 0, %s17
    %s21 = sphi 0, %s18
    %s22 = sphi 0, %s19
    %s23 = sphi 0, %s20
    %s24 = sphi 0, %s21
    %s25 = sphi 0, %s22
    %s37 = sphi 0, %s37
    %s39 = sphi 0, %s37
    %s40 = sphi 0, %s39
    %s54 = sphi 0, %s40
    %s58 = sphi 0, %s58
    %s60 = sphi 0, %s58
    %s61 = sphi 0, %s60
    %s75 = sphi 0, %s61
    %s79 = sphi 0, %s79
    %s81 = sphi 0, %s79
    %s82 = sphi 0, %s81
    %s96 = sphi 0, %s82
    %s104 = sphi 0, %s106
    %s107 = sphi 0, %s104
    %s108 = sphi 0, %s107
    %s124 = sphi 0, %s108
  $region4: #{_lambda_.1} parent=0 // loop_header_branch
    %13 = sbr.rel (%p11) target = $region8
  $region5: #{_lambda_.1} parent=0 // loop_body
    %s15 = ssub.s32 %s10, 1
    %s16 = ssub.s32 %s10, 2
    %s26 = sadd.s32 1, %s19
    %p27 = scmp.ge.s32.totalorder %s26, 1
    %s28 = scalar_select %p27, 0, %s26
    %s29 = sadd.s32 1, %s18
    %s30 = scalar_select %p27, %s29, %s18
    %p31 = scmp.ge.s32.totalorder %s30, 1
    %s32 = scalar_select %p31, 0, %s30
    %s33 = sadd.s32 1, %s17
    %s34 = scalar_select %p31, %s33, %s17
    %p35 = scmp.ge.s32.totalorder %s34, 2
    %s36 = scalar_select %p35, 0, %s34
    %s38 = sadd.s32 %s37, 1
    %p41 = scmp.eq.s32.totalorder %s10, 1
    %p42 = scmp.ne.s32.totalorder %s37, %s39
    %p43 = scmp.eq.s32.totalorder %s10, 0
    %p44 = por %p42, %p43
    %p45 = scmp.ne.s32.totalorder %s37, %s39
    %p46 = scmp.eq.s32.totalorder %s15, 1
    %p47 = por %p45, %p46
    %p48 = scmp.ne.s32.totalorder %s39, %s40
    %p49 = scmp.eq.s32.totalorder %s15, 0
    %p50 = por %p48, %p49
    %p51 = scmp.ne.s32.totalorder %s39, %s40
    %p52 = scmp.eq.s32.totalorder %s16, 1
    %p53 = por %p51, %p52
    %p55 = scmp.ne.s32.totalorder %s40, %s54
    %p56 = scmp.eq.s32.totalorder %s16, 0
    %p57 = por %p55, %p56
    %s59 = sadd.s32 %s58, 1
    %p62 = scmp.eq.s32.totalorder %s10, 1
    %p63 = scmp.ne.s32.totalorder %s58, %s60
    %p64 = scmp.eq.s32.totalorder %s10, 0
    %p65 = por %p63, %p64
    %p66 = scmp.ne.s32.totalorder %s58, %s60
    %p67 = scmp.eq.s32.totalorder %s15, 1
    %p68 = por %p66, %p67
    %p69 = scmp.ne.s32.totalorder %s60, %s61
    %p70 = scmp.eq.s32.totalorder %s15, 0
    %p71 = por %p69, %p70
    %p72 = scmp.ne.s32.totalorder %s60, %s61
    %p73 = scmp.eq.s32.totalorder %s16, 1
    %p74 = por %p72, %p73
    %p76 = scmp.ne.s32.totalorder %s61, %s75
    %p77 = scmp.eq.s32.totalorder %s16, 0
    %p78 = por %p76, %p77
    %s80 = sadd.s32 %s79, 1
    %p83 = scmp.eq.s32.totalorder %s10, 1
    %p84 = scmp.ne.s32.totalorder %s79, %s81
    %p85 = scmp.eq.s32.totalorder %s10, 0
    %p86 = por %p84, %p85
    %p87 = scmp.ne.s32.totalorder %s79, %s81
    %p88 = scmp.eq.s32.totalorder %s15, 1
    %p89 = por %p87, %p88
    %p90 = scmp.ne.s32.totalorder %s81, %s82
    %p91 = scmp.eq.s32.totalorder %s15, 0
    %p92 = por %p90, %p91
    %p93 = scmp.ne.s32.totalorder %s81, %s82
    %p94 = scmp.eq.s32.totalorder %s16, 1
    %p95 = por %p93, %p94
    %p97 = scmp.ne.s32.totalorder %s82, %s96
    %p98 = scmp.eq.s32.totalorder %s16, 0
    %p99 = por %p97, %p98
    %s100 = ssub.s32 %s17, %s36
    %s101 = ssub.s32 %s18, %s32
    %s102 = sor.u32 %s100, %s101
    %p103 = scmp.eq.s32.totalorder %s102, 0
    %s105 = sadd.s32 %s104, 1
    %s106 = scalar_select %p103, %s104, %s105
    %p109 = pneg %p103
    %p110 = scmp.eq.s32.totalorder %s10, 1
    %p111 = por %p109, %p110
    %p112 = scmp.ne.s32.totalorder %s104, %s107
    %p113 = scmp.eq.s32.totalorder %s10, 0
    %p114 = por %p112, %p113
    %p115 = scmp.ne.s32.totalorder %s104, %s107
    %p116 = scmp.eq.s32.totalorder %s15, 1
    %p117 = por %p115, %p116
    %p118 = scmp.ne.s32.totalorder %s107, %s108
    %p119 = scmp.eq.s32.totalorder %s15, 0
    %p120 = por %p118, %p119
    %p121 = scmp.ne.s32.totalorder %s107, %s108
    %p122 = scmp.eq.s32.totalorder %s16, 1
    %p123 = por %p121, %p122
    %p125 = scmp.ne.s32.totalorder %s108, %s124
    %p126 = scmp.eq.s32.totalorder %s16, 0
    %p127 = por %p125, %p126
    %p128 = scmp.le.s32.totalorder 1, %s10
    %p129 = scmp.lt.s32.totalorder %s10, 3
    %p130 = pnand %p128, %p129
    %p131 = pneg %p130
    // Predicated region
    $region9: #{_lambda_.1} parent=5 // pred_check
      _
    $region10: #{_lambda_.1} parent=5 // pred_check_branch
      %133 = sbr.rel (%p130) target = $region12
    $region11: #{_lambda_.1} parent=5 // pred_region
      %s134 = ssub.s32 %s10, 1
      // Predicated region
      $region13: #{_lambda_.1} parent=11 // pred_check
        %p135 = pneg %p50
      $region14: #{_lambda_.1} parent=11 // pred_check_branch
        %137 = sbr.rel (%p135) target = $region16
      $region15: #{_lambda_.1} parent=11 // pred_region
        _
      $region16: #{_lambda_.1} parent=11 // pred_fallthru
        _
      // Predicated region
      $region17: #{_lambda_.1} parent=11 // pred_check
        %p138 = pneg %p71
      $region18: #{_lambda_.1} parent=11 // pred_check_branch
        %140 = sbr.rel (%p138) target = $region20
      $region19: #{_lambda_.1} parent=11 // pred_region
        _
      $region20: #{_lambda_.1} parent=11 // pred_fallthru
        _
      // Predicated region
      $region21: #{_lambda_.1} parent=11 // pred_check
        %p141 = pneg %p92
      $region22: #{_lambda_.1} parent=11 // pred_check_branch
        %143 = sbr.rel (%p141) target = $region24
      $region23: #{_lambda_.1} parent=11 // pred_region
        _
      $region24: #{_lambda_.1} parent=11 // pred_fallthru
        _
    $region12: #{_lambda_.1} parent=5 // pred_fallthru
      _
    %p144 = scmp.lt.s32.totalorder %s10, 2
    // Predicated region
    $region25: #{_lambda_.1} parent=5 // pred_check
      %p145 = pneg %p144
    $region26: #{_lambda_.1} parent=5 // pred_check_branch
      %147 = sbr.rel (%p145) target = $region28
    $region27: #{_lambda_.1} parent=5 // pred_region
      _
    $region28: #{_lambda_.1} parent=5 // pred_fallthru
      _
    %p148 = scmp.le.s32.totalorder 1, %s10
    %p149 = scmp.lt.s32.totalorder %s10, 3
    %p150 = pnand %p148, %p149
    %p151 = pneg %p150
    // Predicated region
    $region29: #{_lambda_.1} parent=5 // pred_check
      _
    $region30: #{_lambda_.1} parent=5 // pred_check_branch
      %153 = sbr.rel (%p150) target = $region32
    $region31: #{_lambda_.1} parent=5 // pred_region
      %s154 = ssub.s32 %s10, 1
      %p155 = pneg %p50
      %p156 = pneg %p47
      %p157 = pneg %p71
      %p158 = pneg %p68
      %p159 = pneg %p92
      %p160 = pneg %p89
      %p161 = pneg %p120
      %p162 = pneg %p117
      %s163 = smul.u32 16, %s21
      %p164 = scmp.lt.s32.totalorder %s20, 1
      %s165 = scalar_select %p164, %s20, 1
      %p166 = scmp.lt.s32.totalorder %s163, 15
      %s167 = scalar_select %p166, %s163, 15
      %s168 = smul.addr %s167, 4
      %s169 = smul.addr %s165, 64
      %s170 = sadd.s32 %s168, %s169
      %s171 = smul.addr %s170, 4
      %s172 = scalar_lea.vmem %s4, %s171
      %s173 = smul.u32 16, %s21
      %p174 = scmp.lt.s32.totalorder %s20, 1
      %s175 = scalar_select %p174, %s20, 1
      %p176 = scmp.lt.s32.totalorder %s173, 15
      %s177 = scalar_select %p176, %s173, 15
      %s178 = smul.addr %s177, 4
      %s179 = smul.addr %s175, 64
      %s180 = sadd.s32 %s178, %s179
      %s181 = smul.addr %s180, 4
      %s182 = scalar_lea.vmem %s4, %s181
      %s183 = smul.u32 16, %s21
      %p185 = scmp.lt.s32.totalorder %s22, 0
      %s186 = ssub.s32 0, %s22
      %s187 = scalar_select %p185, %s186, %s22
      %s188 = sand.u32 %s187, 1
      %s189 = ssub.s32 0, %s188
      %s190 = scalar_select %p185, %s189, %s188
      %p191 = scmp.ne.s32.totalorder %s190, 0
      %p192 = scmp.lt.s32.totalorder %s190, 0
      %p193 = pnand %p192, %p191
      %p194 = pneg %p193
      %s195 = sadd.s32 %s190, 2
      %s196 = scalar_select %p194, %s195, %s190
      %p197 = scmp.eq.s32.totalorder %s22, 0
      // Predicated region
      $region33: #{_lambda_.1} parent=31 // pred_check
        %p198 = pneg %p197
      $region34: #{_lambda_.1} parent=31 // pred_check_branch
        %200 = sbr.rel (%p198) target = $region36
      $region35: #{_lambda_.1} parent=31 // pred_region
        %s201 = smul.u32 %s21, 16
        %s202 = smul.u32 %s201, 4
        %s203 = smul.u32 %s20, 72
        %s204 = sadd.s32 %s202, %s203
        %s205 = smul.addr %s204, 4
        %s206 = scalar_lea.vmem %s0, %s205
        %p208 = scmp.lt.u32.totalorder 288, 8
        %p209 = pneg %p208
        // Predicated region
        $region37: #{_lambda_.1} parent=35 // pred_check
          _
        $region38: #{_lambda_.1} parent=35 // pred_check_branch
          %211 = sbr.rel (%p208) target = $region40
        $region39: #{_lambda_.1} parent=35 // pred_region
          %s226 = sand.u32 288, 7
          %p227 = scmp.eq.s32.totalorder %s226, 0
          // Predicated region
          $region52: #{_lambda_.1} parent=39 // pred_check
            %p228 = pneg %p227
          $region53: #{_lambda_.1} parent=39 // pred_check_branch
            %230 = sbr.rel (%p228) target = $region55
          $region54: #{_lambda_.1} parent=39 // pred_region
            loop: start=0, step=1, limit=1
            $region56: #{_lambda_.1} parent=54 // loop_pre_header
              _
            $region57: #{_lambda_.1} parent=54 // loop_header
              %s232 = sphi 0, %s236
              %p233 = scmp.ge.s32.totalorder %s232, 1
              %s237 = sphi %s206, %s206
              %s238 = sphi [#allocation2], [#allocation2]
            $region58: #{_lambda_.1} parent=54 // loop_header_branch
              %235 = sbr.rel (%p233) target = $region62
            $region59: #{_lambda_.1} parent=54 // loop_body
              %v239 = vld [vmem:[%s237] sm:$0xff]
              %240 = vst [vmem:[%s238] sm:$0xff] %v239
              %v241 = vld [vmem:[%s237 + $0x8] sm:$0xff]
              %242 = vst [vmem:[%s238 + $0x8] sm:$0xff] %v241
              %v243 = vld [vmem:[%s237 + $0x10] sm:$0xff]
              %244 = vst [vmem:[%s238 + $0x10] sm:$0xff] %v243
              %v245 = vld [vmem:[%s237 + $0x18] sm:$0xff]
              %246 = vst [vmem:[%s238 + $0x18] sm:$0xff] %v245
              %v247 = vld [vmem:[%s237 + $0x20] sm:$0xff]
              %248 = vst [vmem:[%s238 + $0x20] sm:$0xff] %v247
              %v249 = vld [vmem:[%s237 + $0x28] sm:$0xff]
              %250 = vst [vmem:[%s238 + $0x28] sm:$0xff] %v249
              %v251 = vld [vmem:[%s237 + $0x30] sm:$0xff]
              %252 = vst [vmem:[%s238 + $0x30] sm:$0xff] %v251
              %v253 = vld [vmem:[%s237 + $0x38] sm:$0xff]
              %254 = vst [vmem:[%s238 + $0x38] sm:$0xff] %v253
              %v255 = vld [vmem:[%s237 + $0x40] sm:$0xff]
              %256 = vst [vmem:[%s238 + $0x40] sm:$0xff] %v255
              %v257 = vld [vmem:[%s237 + $0x48] sm:$0xff]
              %258 = vst [vmem:[%s238 + $0x48] sm:$0xff] %v257
              %v259 = vld [vmem:[%s237 + $0x50] sm:$0xff]
              %260 = vst [vmem:[%s238 + $0x50] sm:$0xff] %v259
              %v261 = vld [vmem:[%s237 + $0x58] sm:$0xff]
              %262 = vst [vmem:[%s238 + $0x58] sm:$0xff] %v261
              %v263 = vld [vmem:[%s237 + $0x60] sm:$0xff]
              %264 = vst [vmem:[%s238 + $0x60] sm:$0xff] %v263
              %v265 = vld [vmem:[%s237 + $0x68] sm:$0xff]
              %266 = vst [vmem:[%s238 + $0x68] sm:$0xff] %v265
              %v267 = vld [vmem:[%s237 + $0x70] sm:$0xff]
              %268 = vst [vmem:[%s238 + $0x70] sm:$0xff] %v267
              %v269 = vld [vmem:[%s237 + $0x78] sm:$0xff]
              %270 = vst [vmem:[%s238 + $0x78] sm:$0xff] %v269
              %v271 = vld [vmem:[%s237 + $0x80] sm:$0xff]
              %272 = vst [vmem:[%s238 + $0x80] sm:$0xff] %v271
              %v273 = vld [vmem:[%s237 + $0x88] sm:$0xff]
              %274 = vst [vmem:[%s238 + $0x88] sm:$0xff] %v273
              %v275 = vld [vmem:[%s237 + $0x90] sm:$0xff]
              %276 = vst [vmem:[%s238 + $0x90] sm:$0xff] %v275
              %v277 = vld [vmem:[%s237 + $0x98] sm:$0xff]
              %278 = vst [vmem:[%s238 + $0x98] sm:$0xff] %v277
              %v279 = vld [vmem:[%s237 + $0xa0] sm:$0xff]
              %280 = vst [vmem:[%s238 + $0xa0] sm:$0xff] %v279
              %v281 = vld [vmem:[%s237 + $0xa8] sm:$0xff]
              %282 = vst [vmem:[%s238 + $0xa8] sm:$0xff] %v281
              %v283 = vld [vmem:[%s237 + $0xb0] sm:$0xff]
              %284 = vst [vmem:[%s238 + $0xb0] sm:$0xff] %v283
              %v285 = vld [vmem:[%s237 + $0xb8] sm:$0xff]
              %286 = vst [vmem:[%s238 + $0xb8] sm:$0xff] %v285
              %v287 = vld [vmem:[%s237 + $0xc0] sm:$0xff]
              %288 = vst [vmem:[%s238 + $0xc0] sm:$0xff] %v287
              %v289 = vld [vmem:[%s237 + $0xc8] sm:$0xff]
              %290 = vst [vmem:[%s238 + $0xc8] sm:$0xff] %v289
              %v291 = vld [vmem:[%s237 + $0xd0] sm:$0xff]
              %292 = vst [vmem:[%s238 + $0xd0] sm:$0xff] %v291
              %v293 = vld [vmem:[%s237 + $0xd8] sm:$0xff]
              %294 = vst [vmem:[%s238 + $0xd8] sm:$0xff] %v293
              %v295 = vld [vmem:[%s237 + $0xe0] sm:$0xff]
              %296 = vst [vmem:[%s238 + $0xe0] sm:$0xff] %v295
              %v297 = vld [vmem:[%s237 + $0xe8] sm:$0xff]
              %298 = vst [vmem:[%s238 + $0xe8] sm:$0xff] %v297
              %v299 = vld [vmem:[%s237 + $0xf0] sm:$0xff]
              %300 = vst [vmem:[%s238 + $0xf0] sm:$0xff] %v299
              %v301 = vld [vmem:[%s237 + $0xf8] sm:$0xff]
              %302 = vst [vmem:[%s238 + $0xf8] sm:$0xff] %v301
              %v303 = vld [vmem:[%s237 + $0x100] sm:$0xff]
              %304 = vst [vmem:[%s238 + $0x100] sm:$0xff] %v303
              %v305 = vld [vmem:[%s237 + $0x108] sm:$0xff]
              %306 = vst [vmem:[%s238 + $0x108] sm:$0xff] %v305
              %v307 = vld [vmem:[%s237 + $0x110] sm:$0xff]
              %308 = vst [vmem:[%s238 + $0x110] sm:$0xff] %v307
              %v309 = vld [vmem:[%s237 + $0x118] sm:$0xff]
              %310 = vst [vmem:[%s238 + $0x118] sm:$0xff] %v309
            $region60: #{_lambda_.1} parent=54 // loop_footer
              %s236 = sadd.s32 1, %s232
            $region61: #{_lambda_.1} parent=54 // loop_footer_branch
              %231 = sbr.rel target = $region57
            $region62: #{_lambda_.1} parent=54 // loop_exit
              _
          $region55: #{_lambda_.1} parent=39 // pred_fallthru
            _
          %p311 = pneg %p227
          // Predicated region
          $region63: #{_lambda_.1} parent=39 // pred_check
            _
          $region64: #{_lambda_.1} parent=39 // pred_check_branch
            %313 = sbr.rel (%p227) target = $region66
          $region65: #{_lambda_.1} parent=39 // pred_region
            %s314 = sand.u32 288, 7
          $region66: #{_lambda_.1} parent=39 // pred_fallthru
            _
        $region40: #{_lambda_.1} parent=35 // pred_fallthru
          _
        // Predicated region
        $region41: #{_lambda_.1} parent=35 // pred_check
          %p212 = pneg %p208
        $region42: #{_lambda_.1} parent=35 // pred_check_branch
          %214 = sbr.rel (%p212) target = $region44
        $region43: #{_lambda_.1} parent=35 // pred_region
          %s215 = sshllo.u32 0, 288
          loop: start=0, step=1, limit=1
          $region45: #{_lambda_.1} parent=43 // loop_pre_header
            _
          $region46: #{_lambda_.1} parent=43 // loop_header
            %s217 = sphi 0, %s221
            %p218 = scmp.ge.s32.totalorder %s217, 1
            %s222 = sphi %s206, %s206
            %s223 = sphi [#allocation2], [#allocation2]
          $region47: #{_lambda_.1} parent=43 // loop_header_branch
            %220 = sbr.rel (%p218) target = $region51
          $region48: #{_lambda_.1} parent=43 // loop_body
            %v224 = vld [vmem:[%s222] sm:%s215]
            %225 = vst [vmem:[%s223] sm:%s215] %v224
          $region49: #{_lambda_.1} parent=43 // loop_footer
            %s221 = sadd.s32 1, %s217
          $region50: #{_lambda_.1} parent=43 // loop_footer_branch
            %216 = sbr.rel target = $region46
          $region51: #{_lambda_.1} parent=43 // loop_exit
            _
        $region44: #{_lambda_.1} parent=35 // pred_fallthru
          _
        // Predicated region
        $region67: #{_lambda_.1} parent=35 // pred_check
          _
        $region68: #{_lambda_.1} parent=35 // pred_check_branch
          %317 = sbr.rel (0) target = $region70
        $region69: #{_lambda_.1} parent=35 // pred_region
          %318 = vsyncadd [#allocation4], 4608
        $region70: #{_lambda_.1} parent=35 // pred_fallthru
          _
        %319 = vst [vmem:[#allocation3] sm:$0xff] 0.0
        %320 = vst [vmem:[#allocation3 + $0x8] sm:$0xff] 0.0
        %321 = vst [vmem:[#allocation3 + $0x10] sm:$0xff] 0.0
        %322 = vst [vmem:[#allocation3 + $0x18] sm:$0xff] 0.0
        %323 = vst [vmem:[#allocation3 + $0x20] sm:$0xff] 0.0
        %324 = vst [vmem:[#allocation3 + $0x28] sm:$0xff] 0.0
        %325 = vst [vmem:[#allocation3 + $0x30] sm:$0xff] 0.0
        %326 = vst [vmem:[#allocation3 + $0x38] sm:$0xff] 0.0
        %327 = vst [vmem:[#allocation3 + $0x40] sm:$0xff] 0.0
        %328 = vst [vmem:[#allocation3 + $0x48] sm:$0xff] 0.0
        %329 = vst [vmem:[#allocation3 + $0x50] sm:$0xff] 0.0
        %330 = vst [vmem:[#allocation3 + $0x58] sm:$0xff] 0.0
        %331 = vst [vmem:[#allocation3 + $0x60] sm:$0xff] 0.0
        %332 = vst [vmem:[#allocation3 + $0x68] sm:$0xff] 0.0
        %333 = vst [vmem:[#allocation3 + $0x70] sm:$0xff] 0.0
        %334 = vst [vmem:[#allocation3 + $0x78] sm:$0xff] 0.0
        %335 = vst [vmem:[#allocation3 + $0x80] sm:$0xff] 0.0
        %336 = vst [vmem:[#allocation3 + $0x88] sm:$0xff] 0.0
        %337 = vst [vmem:[#allocation3 + $0x90] sm:$0xff] 0.0
        %338 = vst [vmem:[#allocation3 + $0x98] sm:$0xff] 0.0
        %339 = vst [vmem:[#allocation3 + $0xa0] sm:$0xff] 0.0
        %340 = vst [vmem:[#allocation3 + $0xa8] sm:$0xff] 0.0
        %341 = vst [vmem:[#allocation3 + $0xb0] sm:$0xff] 0.0
        %342 = vst [vmem:[#allocation3 + $0xb8] sm:$0xff] 0.0
        %343 = vst [vmem:[#allocation3 + $0xc0] sm:$0xff] 0.0
        %344 = vst [vmem:[#allocation3 + $0xc8] sm:$0xff] 0.0
        %345 = vst [vmem:[#allocation3 + $0xd0] sm:$0xff] 0.0
        %346 = vst [vmem:[#allocation3 + $0xd8] sm:$0xff] 0.0
        %347 = vst [vmem:[#allocation3 + $0xe0] sm:$0xff] 0.0
        %348 = vst [vmem:[#allocation3 + $0xe8] sm:$0xff] 0.0
        %349 = vst [vmem:[#allocation3 + $0xf0] sm:$0xff] 0.0
        %350 = vst [vmem:[#allocation3 + $0xf8] sm:$0xff] 0.0
        %351 = vst [vmem:[#allocation3 + $0x100] sm:$0xff] 0.0
        %352 = vst [vmem:[#allocation3 + $0x108] sm:$0xff] 0.0
        %353 = vst [vmem:[#allocation3 + $0x110] sm:$0xff] 0.0
        %354 = vst [vmem:[#allocation3 + $0x118] sm:$0xff] 0.0
        %355 = vst [vmem:[#allocation3 + $0x120] sm:$0xff] 0.0
        %356 = vst [vmem:[#allocation3 + $0x128] sm:$0xff] 0.0
        %357 = vst [vmem:[#allocation3 + $0x130] sm:$0xff] 0.0
        %358 = vst [vmem:[#allocation3 + $0x138] sm:$0xff] 0.0
        %359 = vst [vmem:[#allocation3 + $0x140] sm:$0xff] 0.0
        %360 = vst [vmem:[#allocation3 + $0x148] sm:$0xff] 0.0
        %361 = vst [vmem:[#allocation3 + $0x150] sm:$0xff] 0.0
        %362 = vst [vmem:[#allocation3 + $0x158] sm:$0xff] 0.0
        %363 = vst [vmem:[#allocation3 + $0x160] sm:$0xff] 0.0
        %364 = vst [vmem:[#allocation3 + $0x168] sm:$0xff] 0.0
        %365 = vst [vmem:[#allocation3 + $0x170] sm:$0xff] 0.0
        %366 = vst [vmem:[#allocation3 + $0x178] sm:$0xff] 0.0
        %367 = vst [vmem:[#allocation3 + $0x180] sm:$0xff] 0.0
        %368 = vst [vmem:[#allocation3 + $0x188] sm:$0xff] 0.0
        %369 = vst [vmem:[#allocation3 + $0x190] sm:$0xff] 0.0
        %370 = vst [vmem:[#allocation3 + $0x198] sm:$0xff] 0.0
        %371 = vst [vmem:[#allocation3 + $0x1a0] sm:$0xff] 0.0
        %372 = vst [vmem:[#allocation3 + $0x1a8] sm:$0xff] 0.0
        %373 = vst [vmem:[#allocation3 + $0x1b0] sm:$0xff] 0.0
        %374 = vst [vmem:[#allocation3 + $0x1b8] sm:$0xff] 0.0
        %375 = vst [vmem:[#allocation3 + $0x1c0] sm:$0xff] 0.0
        %376 = vst [vmem:[#allocation3 + $0x1c8] sm:$0xff] 0.0
        %377 = vst [vmem:[#allocation3 + $0x1d0] sm:$0xff] 0.0
        %378 = vst [vmem:[#allocation3 + $0x1d8] sm:$0xff] 0.0
        %379 = vst [vmem:[#allocation3 + $0x1e0] sm:$0xff] 0.0
        %380 = vst [vmem:[#allocation3 + $0x1e8] sm:$0xff] 0.0
        %381 = vst [vmem:[#allocation3 + $0x1f0] sm:$0xff] 0.0
        %382 = vst [vmem:[#allocation3 + $0x1f8] sm:$0xff] 0.0
      $region36: #{_lambda_.1} parent=31 // pred_fallthru
        _
      %s383 = smul.u32 %s21, 16
      %s384 = scalar_lea.sflag [#allocation4], %s196
      %s385 = smul.u32 4, 18
      %s386 = smul.u32 %s385, 4
      %s387 = smul.u32 %s386, 1
      %s388 = sshll.u32 %s387, 4
      %389 = dma.done %s384, %s388
      %s390 = sadd.s32 %s22, 1
      %p391 = scmp.lt.s32.totalorder %s390, 1
      // Predicated region
      $region71: #{_lambda_.1} parent=31 // pred_check
        %p392 = pneg %p391
      $region72: #{_lambda_.1} parent=31 // pred_check_branch
        %394 = sbr.rel (%p392) target = $region74
      $region73: #{_lambda_.1} parent=31 // pred_region
        %s395 = ssub.s32 1, %s196
        %s396 = smul.u32 %s390, 128
        %s397 = sshra.s32 %s396, 7
        %s398 = sand.u32 %s396, 127
        %s399 = smul.u32 %s383, 4
        %s400 = sadd.s32 %s397, %s399
        %s401 = smul.u32 %s20, 72
        %s402 = sadd.s32 %s400, %s401
        %s403 = smul.addr %s402, 4
        %s404 = scalar_lea.vmem %s0, %s403
        %s405 = smul.u32 %s395, 36
        %s406 = smul.addr %s405, 8
        %s407 = scalar_lea.vmem [#allocation2], %s406
        %s408 = scalar_lea.sflag [#allocation4], %s395
        %p410 = scmp.lt.u32.totalorder 288, 8
        %p411 = pneg %p410
        // Predicated region
        $region75: #{_lambda_.1} parent=73 // pred_check
          _
        $region76: #{_lambda_.1} parent=73 // pred_check_branch
          %413 = sbr.rel (%p410) target = $region78
        $region77: #{_lambda_.1} parent=73 // pred_region
          %s428 = sand.u32 288, 7
          %p429 = scmp.eq.s32.totalorder %s428, 0
          // Predicated region
          $region90: #{_lambda_.1} parent=77 // pred_check
            %p430 = pneg %p429
          $region91: #{_lambda_.1} parent=77 // pred_check_branch
            %432 = sbr.rel (%p430) target = $region93
          $region92: #{_lambda_.1} parent=77 // pred_region
            loop: start=0, step=1, limit=1
            $region94: #{_lambda_.1} parent=92 // loop_pre_header
              _
            $region95: #{_lambda_.1} parent=92 // loop_header
              %s434 = sphi 0, %s438
              %p435 = scmp.ge.s32.totalorder %s434, 1
              %s439 = sphi %s404, %s404
              %s440 = sphi %s407, %s407
            $region96: #{_lambda_.1} parent=92 // loop_header_branch
              %437 = sbr.rel (%p435) target = $region100
            $region97: #{_lambda_.1} parent=92 // loop_body
              %v441 = vld [vmem:[%s439] sm:$0xff]
              %442 = vst [vmem:[%s440] sm:$0xff] %v441
              %v443 = vld [vmem:[%s439 + $0x8] sm:$0xff]
              %444 = vst [vmem:[%s440 + $0x8] sm:$0xff] %v443
              %v445 = vld [vmem:[%s439 + $0x10] sm:$0xff]
              %446 = vst [vmem:[%s440 + $0x10] sm:$0xff] %v445
              %v447 = vld [vmem:[%s439 + $0x18] sm:$0xff]
              %448 = vst [vmem:[%s440 + $0x18] sm:$0xff] %v447
              %v449 = vld [vmem:[%s439 + $0x20] sm:$0xff]
              %450 = vst [vmem:[%s440 + $0x20] sm:$0xff] %v449
              %v451 = vld [vmem:[%s439 + $0x28] sm:$0xff]
              %452 = vst [vmem:[%s440 + $0x28] sm:$0xff] %v451
              %v453 = vld [vmem:[%s439 + $0x30] sm:$0xff]
              %454 = vst [vmem:[%s440 + $0x30] sm:$0xff] %v453
              %v455 = vld [vmem:[%s439 + $0x38] sm:$0xff]
              %456 = vst [vmem:[%s440 + $0x38] sm:$0xff] %v455
              %v457 = vld [vmem:[%s439 + $0x40] sm:$0xff]
              %458 = vst [vmem:[%s440 + $0x40] sm:$0xff] %v457
              %v459 = vld [vmem:[%s439 + $0x48] sm:$0xff]
              %460 = vst [vmem:[%s440 + $0x48] sm:$0xff] %v459
              %v461 = vld [vmem:[%s439 + $0x50] sm:$0xff]
              %462 = vst [vmem:[%s440 + $0x50] sm:$0xff] %v461
              %v463 = vld [vmem:[%s439 + $0x58] sm:$0xff]
              %464 = vst [vmem:[%s440 + $0x58] sm:$0xff] %v463
              %v465 = vld [vmem:[%s439 + $0x60] sm:$0xff]
              %466 = vst [vmem:[%s440 + $0x60] sm:$0xff] %v465
              %v467 = vld [vmem:[%s439 + $0x68] sm:$0xff]
              %468 = vst [vmem:[%s440 + $0x68] sm:$0xff] %v467
              %v469 = vld [vmem:[%s439 + $0x70] sm:$0xff]
              %470 = vst [vmem:[%s440 + $0x70] sm:$0xff] %v469
              %v471 = vld [vmem:[%s439 + $0x78] sm:$0xff]
              %472 = vst [vmem:[%s440 + $0x78] sm:$0xff] %v471
              %v473 = vld [vmem:[%s439 + $0x80] sm:$0xff]
              %474 = vst [vmem:[%s440 + $0x80] sm:$0xff] %v473
              %v475 = vld [vmem:[%s439 + $0x88] sm:$0xff]
              %476 = vst [vmem:[%s440 + $0x88] sm:$0xff] %v475
              %v477 = vld [vmem:[%s439 + $0x90] sm:$0xff]
              %478 = vst [vmem:[%s440 + $0x90] sm:$0xff] %v477
              %v479 = vld [vmem:[%s439 + $0x98] sm:$0xff]
              %480 = vst [vmem:[%s440 + $0x98] sm:$0xff] %v479
              %v481 = vld [vmem:[%s439 + $0xa0] sm:$0xff]
              %482 = vst [vmem:[%s440 + $0xa0] sm:$0xff] %v481
              %v483 = vld [vmem:[%s439 + $0xa8] sm:$0xff]
              %484 = vst [vmem:[%s440 + $0xa8] sm:$0xff] %v483
              %v485 = vld [vmem:[%s439 + $0xb0] sm:$0xff]
              %486 = vst [vmem:[%s440 + $0xb0] sm:$0xff] %v485
              %v487 = vld [vmem:[%s439 + $0xb8] sm:$0xff]
              %488 = vst [vmem:[%s440 + $0xb8] sm:$0xff] %v487
              %v489 = vld [vmem:[%s439 + $0xc0] sm:$0xff]
              %490 = vst [vmem:[%s440 + $0xc0] sm:$0xff] %v489
              %v491 = vld [vmem:[%s439 + $0xc8] sm:$0xff]
              %492 = vst [vmem:[%s440 + $0xc8] sm:$0xff] %v491
              %v493 = vld [vmem:[%s439 + $0xd0] sm:$0xff]
              %494 = vst [vmem:[%s440 + $0xd0] sm:$0xff] %v493
              %v495 = vld [vmem:[%s439 + $0xd8] sm:$0xff]
              %496 = vst [vmem:[%s440 + $0xd8] sm:$0xff] %v495
              %v497 = vld [vmem:[%s439 + $0xe0] sm:$0xff]
              %498 = vst [vmem:[%s440 + $0xe0] sm:$0xff] %v497
              %v499 = vld [vmem:[%s439 + $0xe8] sm:$0xff]
              %500 = vst [vmem:[%s440 + $0xe8] sm:$0xff] %v499
              %v501 = vld [vmem:[%s439 + $0xf0] sm:$0xff]
              %502 = vst [vmem:[%s440 + $0xf0] sm:$0xff] %v501
              %v503 = vld [vmem:[%s439 + $0xf8] sm:$0xff]
              %504 = vst [vmem:[%s440 + $0xf8] sm:$0xff] %v503
              %v505 = vld [vmem:[%s439 + $0x100] sm:$0xff]
              %506 = vst [vmem:[%s440 + $0x100] sm:$0xff] %v505
              %v507 = vld [vmem:[%s439 + $0x108] sm:$0xff]
              %508 = vst [vmem:[%s440 + $0x108] sm:$0xff] %v507
              %v509 = vld [vmem:[%s439 + $0x110] sm:$0xff]
              %510 = vst [vmem:[%s440 + $0x110] sm:$0xff] %v509
              %v511 = vld [vmem:[%s439 + $0x118] sm:$0xff]
              %512 = vst [vmem:[%s440 + $0x118] sm:$0xff] %v511
            $region98: #{_lambda_.1} parent=92 // loop_footer
              %s438 = sadd.s32 1, %s434
            $region99: #{_lambda_.1} parent=92 // loop_footer_branch
              %433 = sbr.rel target = $region95
            $region100: #{_lambda_.1} parent=92 // loop_exit
              _
          $region93: #{_lambda_.1} parent=77 // pred_fallthru
            _
          %p513 = pneg %p429
          // Predicated region
          $region101: #{_lambda_.1} parent=77 // pred_check
            _
          $region102: #{_lambda_.1} parent=77 // pred_check_branch
            %515 = sbr.rel (%p429) target = $region104
          $region103: #{_lambda_.1} parent=77 // pred_region
            %s516 = sand.u32 288, 7
          $region104: #{_lambda_.1} parent=77 // pred_fallthru
            _
        $region78: #{_lambda_.1} parent=73 // pred_fallthru
          _
        // Predicated region
        $region79: #{_lambda_.1} parent=73 // pred_check
          %p414 = pneg %p410
        $region80: #{_lambda_.1} parent=73 // pred_check_branch
          %416 = sbr.rel (%p414) target = $region82
        $region81: #{_lambda_.1} parent=73 // pred_region
          %s417 = sshllo.u32 0, 288
          loop: start=0, step=1, limit=1
          $region83: #{_lambda_.1} parent=81 // loop_pre_header
            _
          $region84: #{_lambda_.1} parent=81 // loop_header
            %s419 = sphi 0, %s423
            %p420 = scmp.ge.s32.totalorder %s419, 1
            %s424 = sphi %s404, %s404
            %s425 = sphi %s407, %s407
          $region85: #{_lambda_.1} parent=81 // loop_header_branch
            %422 = sbr.rel (%p420) target = $region89
          $region86: #{_lambda_.1} parent=81 // loop_body
            %v426 = vld [vmem:[%s424] sm:%s417]
            %427 = vst [vmem:[%s425] sm:%s417] %v426
          $region87: #{_lambda_.1} parent=81 // loop_footer
            %s423 = sadd.s32 1, %s419
          $region88: #{_lambda_.1} parent=81 // loop_footer_branch
            %418 = sbr.rel target = $region84
          $region89: #{_lambda_.1} parent=81 // loop_exit
            _
        $region82: #{_lambda_.1} parent=73 // pred_fallthru
          _
        // Predicated region
        $region105: #{_lambda_.1} parent=73 // pred_check
          _
        $region106: #{_lambda_.1} parent=73 // pred_check_branch
          %519 = sbr.rel (0) target = $region108
        $region107: #{_lambda_.1} parent=73 // pred_region
          %520 = vsyncadd %s408, 4608
        $region108: #{_lambda_.1} parent=73 // pred_fallthru
          _
      $region74: #{_lambda_.1} parent=31 // pred_fallthru
        _
      %s521 = smul.u32 %s196, 36
      %s522 = smul.addr %s521, 8
      %s523 = scalar_lea.vmem [#allocation2], %s522
      %v524 = vld [vmem:[%s523] sm:$0xff]
      %v525 = vld [vmem:[%s523 + $0x8] sm:$0xff]
      %v526 = vld [vmem:[%s523 + $0x10] sm:$0xff]
      %v527 = vld [vmem:[%s523 + $0x18] sm:$0xff]
      %v528 = vld [vmem:[%s523 + $0x20] sm:$0xff]
      %v529 = vld [vmem:[%s523 + $0x28] sm:$0xff]
      %v530 = vld [vmem:[%s523 + $0x30] sm:$0xff]
      %v531 = vld [vmem:[%s523 + $0x38] sm:$0xff]
      %v532 = vld [vmem:[%s523 + $0x40] sm:$0xff]
      %v533 = vld [vmem:[%s523 + $0x48] sm:$0xff]
      %v534 = vld [vmem:[%s523 + $0x50] sm:$0xff]
      %v535 = vld [vmem:[%s523 + $0x58] sm:$0xff]
      %v536 = vld [vmem:[%s523 + $0x60] sm:$0xff]
      %v537 = vld [vmem:[%s523 + $0x68] sm:$0xff]
      %v538 = vld [vmem:[%s523 + $0x70] sm:$0xff]
      %v539 = vld [vmem:[%s523 + $0x78] sm:$0xff]
      %v540 = vld [vmem:[%s523 + $0x80] sm:$0xff]
      %v541 = vld [vmem:[%s523 + $0x88] sm:$0xff]
      %v542 = vld [vmem:[%s523 + $0x90] sm:$0xff]
      %v543 = vld [vmem:[%s523 + $0x98] sm:$0xff]
      %v544 = vld [vmem:[%s523 + $0xa0] sm:$0xff]
      %v545 = vld [vmem:[%s523 + $0xa8] sm:$0xff]
      %v546 = vld [vmem:[%s523 + $0xb0] sm:$0xff]
      %v547 = vld [vmem:[%s523 + $0xb8] sm:$0xff]
      %v548 = vld [vmem:[%s523 + $0xc0] sm:$0xff]
      %v549 = vld [vmem:[%s523 + $0xc8] sm:$0xff]
      %v550 = vld [vmem:[%s523 + $0xd0] sm:$0xff]
      %v551 = vld [vmem:[%s523 + $0xd8] sm:$0xff]
      %v552 = vld [vmem:[%s523 + $0xe0] sm:$0xff]
      %v553 = vld [vmem:[%s523 + $0xe8] sm:$0xff]
      %v554 = vld [vmem:[%s523 + $0xf0] sm:$0xff]
      %v555 = vld [vmem:[%s523 + $0xf8] sm:$0xff]
      %s556 = sadd.s32 2, %s521
      %s557 = smul.addr %s556, 8
      %s558 = scalar_lea.vmem [#allocation2], %s557
      %v559 = vld [vmem:[%s558] sm:$0xff]
      %v560 = vld [vmem:[%s558 + $0x8] sm:$0xff]
      %v561 = vld [vmem:[%s558 + $0x10] sm:$0xff]
      %v562 = vld [vmem:[%s558 + $0x18] sm:$0xff]
      %v563 = vld [vmem:[%s558 + $0x20] sm:$0xff]
      %v564 = vld [vmem:[%s558 + $0x28] sm:$0xff]
      %v565 = vld [vmem:[%s558 + $0x30] sm:$0xff]
      %v566 = vld [vmem:[%s558 + $0x38] sm:$0xff]
      %v567 = vld [vmem:[%s558 + $0x40] sm:$0xff]
      %v568 = vld [vmem:[%s558 + $0x48] sm:$0xff]
      %v569 = vld [vmem:[%s558 + $0x50] sm:$0xff]
      %v570 = vld [vmem:[%s558 + $0x58] sm:$0xff]
      %v571 = vld [vmem:[%s558 + $0x60] sm:$0xff]
      %v572 = vld [vmem:[%s558 + $0x68] sm:$0xff]
      %v573 = vld [vmem:[%s558 + $0x70] sm:$0xff]
      %v574 = vld [vmem:[%s558 + $0x78] sm:$0xff]
      %v575 = vld [vmem:[%s558 + $0x80] sm:$0xff]
      %v576 = vld [vmem:[%s558 + $0x88] sm:$0xff]
      %v577 = vld [vmem:[%s558 + $0x90] sm:$0xff]
      %v578 = vld [vmem:[%s558 + $0x98] sm:$0xff]
      %v579 = vld [vmem:[%s558 + $0xa0] sm:$0xff]
      %v580 = vld [vmem:[%s558 + $0xa8] sm:$0xff]
      %v581 = vld [vmem:[%s558 + $0xb0] sm:$0xff]
      %v582 = vld [vmem:[%s558 + $0xb8] sm:$0xff]
      %v583 = vld [vmem:[%s558 + $0xc0] sm:$0xff]
      %v584 = vld [vmem:[%s558 + $0xc8] sm:$0xff]
      %v585 = vld [vmem:[%s558 + $0xd0] sm:$0xff]
      %v586 = vld [vmem:[%s558 + $0xd8] sm:$0xff]
      %v587 = vld [vmem:[%s558 + $0xe0] sm:$0xff]
      %v588 = vld [vmem:[%s558 + $0xe8] sm:$0xff]
      %v589 = vld [vmem:[%s558 + $0xf0] sm:$0xff]
      %v590 = vld [vmem:[%s558 + $0xf8] sm:$0xff]
      %s591 = sadd.s32 4, %s521
      %s592 = smul.addr %s591, 8
      %s593 = scalar_lea.vmem [#allocation2], %s592
      %v594 = vld [vmem:[%s593] sm:$0xff]
      %v595 = vld [vmem:[%s593 + $0x8] sm:$0xff]
      %v596 = vld [vmem:[%s593 + $0x10] sm:$0xff]
      %v597 = vld [vmem:[%s593 + $0x18] sm:$0xff]
      %v598 = vld [vmem:[%s593 + $0x20] sm:$0xff]
      %v599 = vld [vmem:[%s593 + $0x28] sm:$0xff]
      %v600 = vld [vmem:[%s593 + $0x30] sm:$0xff]
      %v601 = vld [vmem:[%s593 + $0x38] sm:$0xff]
      %v602 = vld [vmem:[%s593 + $0x40] sm:$0xff]
      %v603 = vld [vmem:[%s593 + $0x48] sm:$0xff]
      %v604 = vld [vmem:[%s593 + $0x50] sm:$0xff]
      %v605 = vld [vmem:[%s593 + $0x58] sm:$0xff]
      %v606 = vld [vmem:[%s593 + $0x60] sm:$0xff]
      %v607 = vld [vmem:[%s593 + $0x68] sm:$0xff]
      %v608 = vld [vmem:[%s593 + $0x70] sm:$0xff]
      %v609 = vld [vmem:[%s593 + $0x78] sm:$0xff]
      %v610 = vld [vmem:[%s593 + $0x80] sm:$0xff]
      %v611 = vld [vmem:[%s593 + $0x88] sm:$0xff]
      %v612 = vld [vmem:[%s593 + $0x90] sm:$0xff]
      %v613 = vld [vmem:[%s593 + $0x98] sm:$0xff]
      %v614 = vld [vmem:[%s593 + $0xa0] sm:$0xff]
      %v615 = vld [vmem:[%s593 + $0xa8] sm:$0xff]
      %v616 = vld [vmem:[%s593 + $0xb0] sm:$0xff]
      %v617 = vld [vmem:[%s593 + $0xb8] sm:$0xff]
      %v618 = vld [vmem:[%s593 + $0xc0] sm:$0xff]
      %v619 = vld [vmem:[%s593 + $0xc8] sm:$0xff]
      %v620 = vld [vmem:[%s593 + $0xd0] sm:$0xff]
      %v621 = vld [vmem:[%s593 + $0xd8] sm:$0xff]
      %v622 = vld [vmem:[%s593 + $0xe0] sm:$0xff]
      %v623 = vld [vmem:[%s593 + $0xe8] sm:$0xff]
      %v624 = vld [vmem:[%s593 + $0xf0] sm:$0xff]
      %v625 = vld [vmem:[%s593 + $0xf8] sm:$0xff]
      %s626 = smul.u32 %s22, 144
      %s627 = smul.addr %s626, 4
      %s628 = scalar_lea.vmem %s1, %s627
      %v629 = vld [vmem:[%s628] sm:$0xf]
      %v630 = vld [vmem:[%s628 + $0x4] sm:$0xf]
      %v631 = vld [vmem:[%s628 + $0x8] sm:$0xf]
      %v632 = vld [vmem:[%s628 + $0xc] sm:$0xf]
      %v633 = vld [vmem:[%s628 + $0x10] sm:$0xf]
      %v634 = vld [vmem:[%s628 + $0x14] sm:$0xf]
      %v635 = vld [vmem:[%s628 + $0x18] sm:$0xf]
      %v636 = vld [vmem:[%s628 + $0x1c] sm:$0xf]
      %v637 = vld [vmem:[%s628 + $0x20] sm:$0xf]
      %v638 = vld [vmem:[%s628 + $0x24] sm:$0xf]
      %v639 = vld [vmem:[%s628 + $0x28] sm:$0xf]
      %v640 = vld [vmem:[%s628 + $0x2c] sm:$0xf]
      %v641 = vld [vmem:[%s628 + $0x30] sm:$0xf]
      %v642 = vld [vmem:[%s628 + $0x34] sm:$0xf]
      %v643 = vld [vmem:[%s628 + $0x38] sm:$0xf]
      %v644 = vld [vmem:[%s628 + $0x3c] sm:$0xf]
      %s645 = sadd.s32 48, %s626
      %s646 = smul.addr %s645, 4
      %s647 = scalar_lea.vmem %s1, %s646
      %v648 = vld [vmem:[%s647] sm:$0xf]
      %v649 = vld [vmem:[%s647 + $0x4] sm:$0xf]
      %v650 = vld [vmem:[%s647 + $0x8] sm:$0xf]
      %v651 = vld [vmem:[%s647 + $0xc] sm:$0xf]
      %v652 = vld [vmem:[%s647 + $0x10] sm:$0xf]
      %v653 = vld [vmem:[%s647 + $0x14] sm:$0xf]
      %v654 = vld [vmem:[%s647 + $0x18] sm:$0xf]
      %v655 = vld [vmem:[%s647 + $0x1c] sm:$0xf]
      %v656 = vld [vmem:[%s647 + $0x20] sm:$0xf]
      %v657 = vld [vmem:[%s647 + $0x24] sm:$0xf]
      %v658 = vld [vmem:[%s647 + $0x28] sm:$0xf]
      %v659 = vld [vmem:[%s647 + $0x2c] sm:$0xf]
      %v660 = vld [vmem:[%s647 + $0x30] sm:$0xf]
      %v661 = vld [vmem:[%s647 + $0x34] sm:$0xf]
      %v662 = vld [vmem:[%s647 + $0x38] sm:$0xf]
      %v663 = vld [vmem:[%s647 + $0x3c] sm:$0xf]
      %v680 = vunpack.c.l.b16 %v648
      %v681 = vunpack.c.l.b16 %v649
      %v682 = vunpack.c.l.b16 %v650
      %v683 = vunpack.c.l.b16 %v651
      %v684 = vunpack.c.l.b16 %v652
      %v685 = vunpack.c.l.b16 %v653
      %v686 = vunpack.c.l.b16 %v654
      %v687 = vunpack.c.l.b16 %v655
      %v688 = vunpack.c.l.b16 %v656
      %v689 = vunpack.c.l.b16 %v657
      %v690 = vunpack.c.l.b16 %v658
      %v691 = vunpack.c.l.b16 %v659
      %v692 = vunpack.c.l.b16 %v660
      %v693 = vunpack.c.l.b16 %v661
      %v694 = vunpack.c.l.b16 %v662
      %v695 = vunpack.c.l.b16 %v663
      %v696 = vpack.c.b16 %v681, %v680
      %v697 = vpack.c.b16 %v683, %v682
      %v698 = vpack.c.b16 %v685, %v684
      %v699 = vpack.c.b16 %v687, %v686
      %v700 = vpack.c.b16 %v689, %v688
      %v701 = vpack.c.b16 %v691, %v690
      %v702 = vpack.c.b16 %v693, %v692
      %v703 = vpack.c.b16 %v695, %v694
      %712 = vmatprep.subr.bf16.mxu0 0
      %713 = vmatpush1.bf16.msra.mxu0 %v696
      %714 = vmatprep.subr.bf16.mxu0 0
      %715 = vmatpush1.bf16.msra.mxu0 %v697
      %716 = vmatprep.subr.bf16.mxu0 0
      %717 = vmatpush1.bf16.msra.mxu0 %v698
      %718 = vmatprep.subr.bf16.mxu0 0
      %719 = vmatpush1.bf16.msra.mxu0 %v699
      %720 = vmatprep.subr.bf16.mxu0 0
      %721 = vmatpush1.bf16.msra.mxu0 %v700
      %722 = vmatprep.subr.bf16.mxu0 0
      %723 = vmatpush1.bf16.msra.mxu0 %v701
      %724 = vmatprep.subr.bf16.mxu0 0
      %725 = vmatpush1.bf16.msra.mxu0 %v702
      %726 = vmatprep.subr.bf16.mxu0 0
      %727 = vmatpush1.bf16.msra.mxu0 %v703
      %728 = vmatprep.subr.bf16.mxu0 0
      %729 = vmatpush1.bf16.msra.mxu0 0
      %730 = vmatprep.subr.bf16.mxu0 0
      %731 = vmatpush1.bf16.msra.mxu0 0
      %732 = vmatprep.subr.bf16.mxu0 0
      %733 = vmatpush1.bf16.msra.mxu0 0
      %734 = vmatprep.subr.bf16.mxu0 0
      %735 = vmatpush1.bf16.msra.mxu0 0
      %736 = vmatprep.subr.bf16.mxu0 0
      %737 = vmatpush1.bf16.msra.mxu0 0
      %738 = vmatprep.subr.bf16.mxu0 0
      %739 = vmatpush1.bf16.msra.mxu0 0
      %740 = vmatprep.subr.bf16.mxu0 0
      %741 = vmatpush1.bf16.msra.mxu0 0
      %742 = vmatprep.subr.bf16.mxu0 0
      %743 = vmatpush1.bf16.msra.mxu0 0
      %744 = vmatprep.mubr.bf16.mxu0 0
      %745 = vmatmul.mubr.bf16.gmra.mrb[0].mxu0 %v559
      %v746 = vpop.f32.mrb[0].mxu0
      %v747 = vadd.f32 0.0, %v746
      %v748 = vpop.f32.mrb[0].mxu0
      %v749 = vpop.f32.mrb[0].mxu0
      %v750 = vadd.f32 0.0, %v749
      %v751 = vpop.f32.mrb[0].mxu0
      %752 = vmatprep.mubr.bf16.mxu0 0
      %753 = vmatmul.mubr.bf16.gmra.mrb[0].mxu0 %v560
      %v754 = vpop.f32.mrb[0].mxu0
      %v755 = vadd.f32 0.0, %v754
      %v756 = vpop.f32.mrb[0].mxu0
      %v757 = vpop.f32.mrb[0].mxu0
      %v758 = vadd.f32 0.0, %v757
      %v759 = vpop.f32.mrb[0].mxu0
      %760 = vmatprep.mubr.bf16.mxu0 0
      %761 = vmatmul.mubr.bf16.gmra.mrb[0].mxu0 %v561
      %v762 = vpop.f32.mrb[0].mxu0
      %v763 = vadd.f32 0.0, %v762
      %v764 = vpop.f32.mrb[0].mxu0
      %v765 = vpop.f32.mrb[0].mxu0
      %v766 = vadd.f32 0.0, %v765
      %v767 = vpop.f32.mrb[0].mxu0
      %768 = vmatprep.mubr.bf16.mxu0 0
      %769 = vmatmul.mubr.bf16.gmra.mrb[0].mxu0 %v562
      %v770 = vpop.f32.mrb[0].mxu0
      %v771 = vadd.f32 0.0, %v770
      %v772 = vpop.f32.mrb[0].mxu0
      %v773 = vpop.f32.mrb[0].mxu0
      %v774 = vadd.f32 0.0, %v773
      %v775 = vpop.f32.mrb[0].mxu0
      %776 = vmatprep.mubr.bf16.mxu0 0
      %777 = vmatmul.mubr.bf16.gmra.mrb[0].mxu0 %v563
      %v778 = vpop.f32.mrb[0].mxu0
      %v779 = vadd.f32 0.0, %v778
      %v780 = vpop.f32.mrb[0].mxu0
      %v781 = vpop.f32.mrb[0].mxu0
      %v782 = vadd.f32 0.0, %v781
      %v783 = vpop.f32.mrb[0].mxu0
      %784 = vmatprep.mubr.bf16.mxu0 0
      %785 = vmatmul.mubr.bf16.gmra.mrb[0].mxu0 %v564
      %v786 = vpop.f32.mrb[0].mxu0
      %v787 = vadd.f32 0.0, %v786
      %v788 = vpop.f32.mrb[0].mxu0
      %v789 = vpop.f32.mrb[0].mxu0
      %v790 = vadd.f32 0.0, %v789
      %v791 = vpop.f32.mrb[0].mxu0
      %792 = vmatprep.mubr.bf16.mxu0 0
      %793 = vmatmul.mubr.bf16.gmra.mrb[0].mxu0 %v565
      %v794 = vpop.f32.mrb[0].mxu0
      %v795 = vadd.f32 0.0, %v794
      %v796 = vpop.f32.mrb[0].mxu0
      %v797 = vpop.f32.mrb[0].mxu0
      %v798 = vadd.f32 0.0, %v797
      %v799 = vpop.f32.mrb[0].mxu0
      %800 = vmatprep.mubr.bf16.mxu0 0
      %801 = vmatmul.mubr.bf16.gmra.mrb[0].mxu0 %v566
      %v802 = vpop.f32.mrb[0].mxu0
      %v803 = vadd.f32 0.0, %v802
      %v804 = vpop.f32.mrb[0].mxu0
      %v805 = vpop.f32.mrb[0].mxu0
      %v806 = vadd.f32 0.0, %v805
      %v807 = vpop.f32.mrb[0].mxu0
      %808 = vmatprep.mubr.bf16.mxu0 0
      %809 = vmatmul.mubr.bf16.gmra.mrb[0].mxu0 %v567
      %v810 = vpop.f32.mrb[0].mxu0
      %v811 = vadd.f32 0.0, %v810
      %v812 = vpop.f32.mrb[0].mxu0
      %v813 = vpop.f32.mrb[0].mxu0
      %v814 = vadd.f32 0.0, %v813
      %v815 = vpop.f32.mrb[0].mxu0
      %816 = vmatprep.mubr.bf16.mxu0 0
      %817 = vmatmul.mubr.bf16.gmra.mrb[0].mxu0 %v568
      %v818 = vpop.f32.mrb[0].mxu0
      %v819 = vadd.f32 0.0, %v818
      %v820 = vpop.f32.mrb[0].mxu0
      %v821 = vpop.f32.mrb[0].mxu0
      %v822 = vadd.f32 0.0, %v821
      %v823 = vpop.f32.mrb[0].mxu0
      %824 = vmatprep.mubr.bf16.mxu0 0
      %825 = vmatmul.mubr.bf16.gmra.mrb[0].mxu0 %v569
      %v826 = vpop.f32.mrb[0].mxu0
      %v827 = vadd.f32 0.0, %v826
      %v828 = vpop.f32.mrb[0].mxu0
      %v829 = vpop.f32.mrb[0].mxu0
      %v830 = vadd.f32 0.0, %v829
      %v831 = vpop.f32.mrb[0].mxu0
      %832 = vmatprep.mubr.bf16.mxu0 0
      %833 = vmatmul.mubr.bf16.gmra.mrb[0].mxu0 %v570
      %v834 = vpop.f32.mrb[0].mxu0
      %v835 = vadd.f32 0.0, %v834
      %v836 = vpop.f32.mrb[0].mxu0
      %v837 = vpop.f32.mrb[0].mxu0
      %v838 = vadd.f32 0.0, %v837
      %v839 = vpop.f32.mrb[0].mxu0
      %840 = vmatprep.mubr.bf16.mxu0 0
      %841 = vmatmul.mubr.bf16.gmra.mrb[0].mxu0 %v571
      %v842 = vpop.f32.mrb[0].mxu0
      %v843 = vadd.f32 0.0, %v842
      %v844 = vpop.f32.mrb[0].mxu0
      %v845 = vpop.f32.mrb[0].mxu0
      %v846 = vadd.f32 0.0, %v845
      %v847 = vpop.f32.mrb[0].mxu0
      %848 = vmatprep.mubr.bf16.mxu0 0
      %849 = vmatmul.mubr.bf16.gmra.mrb[0].mxu0 %v572
      %v850 = vpop.f32.mrb[0].mxu0
      %v851 = vadd.f32 0.0, %v850
      %v852 = vpop.f32.mrb[0].mxu0
      %v853 = vpop.f32.mrb[0].mxu0
      %v854 = vadd.f32 0.0, %v853
      %v855 = vpop.f32.mrb[0].mxu0
      %856 = vmatprep.mubr.bf16.mxu0 0
      %857 = vmatmul.mubr.bf16.gmra.mrb[0].mxu0 %v573
      %v858 = vpop.f32.mrb[0].mxu0
      %v859 = vadd.f32 0.0, %v858
      %v860 = vpop.f32.mrb[0].mxu0
      %v861 = vpop.f32.mrb[0].mxu0
      %v862 = vadd.f32 0.0, %v861
      %v863 = vpop.f32.mrb[0].mxu0
      %864 = vmatprep.mubr.bf16.mxu0 0
      %865 = vmatmul.mubr.bf16.gmra.mrb[0].mxu0 %v574
      %v866 = vpop.f32.mrb[0].mxu0
      %v867 = vadd.f32 0.0, %v866
      %v868 = vpop.f32.mrb[0].mxu0
      %v869 = vpop.f32.mrb[0].mxu0
      %v870 = vadd.f32 0.0, %v869
      %v871 = vpop.f32.mrb[0].mxu0
      %872 = vmatprep.mubr.bf16.mxu0 0
      %873 = vmatmul.mubr.bf16.gmra.mrb[0].mxu0 %v575
      %v874 = vpop.f32.mrb[0].mxu0
      %v875 = vadd.f32 0.0, %v874
      %v876 = vpop.f32.mrb[0].mxu0
      %v877 = vpop.f32.mrb[0].mxu0
      %v878 = vadd.f32 0.0, %v877
      %v879 = vpop.f32.mrb[0].mxu0
      %880 = vmatprep.mubr.bf16.mxu0 0
      %881 = vmatmul.mubr.bf16.gmra.mrb[0].mxu0 %v576
      %v882 = vpop.f32.mrb[0].mxu0
      %v883 = vadd.f32 0.0, %v882
      %v884 = vpop.f32.mrb[0].mxu0
      %v885 = vpop.f32.mrb[0].mxu0
      %v886 = vadd.f32 0.0, %v885
      %v887 = vpop.f32.mrb[0].mxu0
      %888 = vmatprep.mubr.bf16.mxu0 0
      %889 = vmatmul.mubr.bf16.gmra.mrb[0].mxu0 %v577
      %v890 = vpop.f32.mrb[0].mxu0
      %v891 = vadd.f32 0.0, %v890
      %v892 = vpop.f32.mrb[0].mxu0
      %v893 = vpop.f32.mrb[0].mxu0
      %v894 = vadd.f32 0.0, %v893
      %v895 = vpop.f32.mrb[0].mxu0
      %896 = vmatprep.mubr.bf16.mxu0 0
      %897 = vmatmul.mubr.bf16.gmra.mrb[0].mxu0 %v578
      %v898 = vpop.f32.mrb[0].mxu0
      %v899 = vadd.f32 0.0, %v898
      %v900 = vpop.f32.mrb[0].mxu0
      %v901 = vpop.f32.mrb[0].mxu0
      %v902 = vadd.f32 0.0, %v901
      %v903 = vpop.f32.mrb[0].mxu0
      %904 = vmatprep.mubr.bf16.mxu0 0
      %905 = vmatmul.mubr.bf16.gmra.mrb[0].mxu0 %v579
      %v906 = vpop.f32.mrb[0].mxu0
      %v907 = vadd.f32 0.0, %v906
      %v908 = vpop.f32.mrb[0].mxu0
      %v909 = vpop.f32.mrb[0].mxu0
      %v910 = vadd.f32 0.0, %v909
      %v911 = vpop.f32.mrb[0].mxu0
      %912 = vmatprep.mubr.bf16.mxu0 0
      %913 = vmatmul.mubr.bf16.gmra.mrb[0].mxu0 %v580
      %v914 = vpop.f32.mrb[0].mxu0
      %v915 = vadd.f32 0.0, %v914
      %v916 = vpop.f32.mrb[0].mxu0
      %v917 = vpop.f32.mrb[0].mxu0
      %v918 = vadd.f32 0.0, %v917
      %v919 = vpop.f32.mrb[0].mxu0
      %920 = vmatprep.mubr.bf16.mxu0 0
      %921 = vmatmul.mubr.bf16.gmra.mrb[0].mxu0 %v581
      %v922 = vpop.f32.mrb[0].mxu0
      %v923 = vadd.f32 0.0, %v922
      %v924 = vpop.f32.mrb[0].mxu0
      %v925 = vpop.f32.mrb[0].mxu0
      %v926 = vadd.f32 0.0, %v925
      %v927 = vpop.f32.mrb[0].mxu0
      %928 = vmatprep.mubr.bf16.mxu0 0
      %929 = vmatmul.mubr.bf16.gmra.mrb[0].mxu0 %v582
      %v930 = vpop.f32.mrb[0].mxu0
      %v931 = vadd.f32 0.0, %v930
      %v932 = vpop.f32.mrb[0].mxu0
      %v933 = vpop.f32.mrb[0].mxu0
      %v934 = vadd.f32 0.0, %v933
      %v935 = vpop.f32.mrb[0].mxu0
      %936 = vmatprep.mubr.bf16.mxu0 0
      %937 = vmatmul.mubr.bf16.gmra.mrb[0].mxu0 %v583
      %v938 = vpop.f32.mrb[0].mxu0
      %v939 = vadd.f32 0.0, %v938
      %v940 = vpop.f32.mrb[0].mxu0
      %v941 = vpop.f32.mrb[0].mxu0
      %v942 = vadd.f32 0.0, %v941
      %v943 = vpop.f32.mrb[0].mxu0
      %944 = vmatprep.mubr.bf16.mxu0 0
      %945 = vmatmul.mubr.bf16.gmra.mrb[0].mxu0 %v584
      %v946 = vpop.f32.mrb[0].mxu0
      %v947 = vadd.f32 0.0, %v946
      %v948 = vpop.f32.mrb[0].mxu0
      %v949 = vpop.f32.mrb[0].mxu0
      %v950 = vadd.f32 0.0, %v949
      %v951 = vpop.f32.mrb[0].mxu0
      %952 = vmatprep.mubr.bf16.mxu0 0
      %953 = vmatmul.mubr.bf16.gmra.mrb[0].mxu0 %v585
      %v954 = vpop.f32.mrb[0].mxu0
      %v955 = vadd.f32 0.0, %v954
      %v956 = vpop.f32.mrb[0].mxu0
      %v957 = vpop.f32.mrb[0].mxu0
      %v958 = vadd.f32 0.0, %v957
      %v959 = vpop.f32.mrb[0].mxu0
      %960 = vmatprep.mubr.bf16.mxu0 0
      %961 = vmatmul.mubr.bf16.gmra.mrb[0].mxu0 %v586
      %v962 = vpop.f32.mrb[0].mxu0
      %v963 = vadd.f32 0.0, %v962
      %v964 = vpop.f32.mrb[0].mxu0
      %v965 = vpop.f32.mrb[0].mxu0
      %v966 = vadd.f32 0.0, %v965
      %v967 = vpop.f32.mrb[0].mxu0
      %968 = vmatprep.mubr.bf16.mxu0 0
      %969 = vmatmul.mubr.bf16.gmra.mrb[0].mxu0 %v587
      %v970 = vpop.f32.mrb[0].mxu0
      %v971 = vadd.f32 0.0, %v970
      %v972 = vpop.f32.mrb[0].mxu0
      %v973 = vpop.f32.mrb[0].mxu0
      %v974 = vadd.f32 0.0, %v973
      %v975 = vpop.f32.mrb[0].mxu0
      %976 = vmatprep.mubr.bf16.mxu0 0
      %977 = vmatmul.mubr.bf16.gmra.mrb[0].mxu0 %v588
      %v978 = vpop.f32.mrb[0].mxu0
      %v979 = vadd.f32 0.0, %v978
      %v980 = vpop.f32.mrb[0].mxu0
      %v981 = vpop.f32.mrb[0].mxu0
      %v982 = vadd.f32 0.0, %v981
      %v983 = vpop.f32.mrb[0].mxu0
      %984 = vmatprep.mubr.bf16.mxu0 0
      %985 = vmatmul.mubr.bf16.gmra.mrb[0].mxu0 %v589
      %v986 = vpop.f32.mrb[0].mxu0
      %v987 = vadd.f32 0.0, %v986
      %v988 = vpop.f32.mrb[0].mxu0
      %v989 = vpop.f32.mrb[0].mxu0
      %v990 = vadd.f32 0.0, %v989
      %v991 = vpop.f32.mrb[0].mxu0
      %992 = vmatprep.mubr.bf16.mxu0 0
      %993 = vmatmul.mubr.bf16.gmra.mrb[0].mxu0 %v590
      %v994 = vpop.f32.mrb[0].mxu0
      %v995 = vadd.f32 0.0, %v994
      %v996 = vpop.f32.mrb[0].mxu0
      %v997 = vpop.f32.mrb[0].mxu0
      %v998 = vadd.f32 0.0, %v997
      %v999 = vpop.f32.mrb[0].mxu0
      %1000 = vdwg.mxu0
      %v1017 = vunpack.c.l.b16 %v629
      %v1018 = vunpack.c.l.b16 %v630
      %v1019 = vunpack.c.l.b16 %v631
      %v1020 = vunpack.c.l.b16 %v632
      %v1021 = vunpack.c.l.b16 %v633
      %v1022 = vunpack.c.l.b16 %v634
      %v1023 = vunpack.c.l.b16 %v635
      %v1024 = vunpack.c.l.b16 %v636
      %v1025 = vunpack.c.l.b16 %v637
      %v1026 = vunpack.c.l.b16 %v638
      %v1027 = vunpack.c.l.b16 %v639
      %v1028 = vunpack.c.l.b16 %v640
      %v1029 = vunpack.c.l.b16 %v641
      %v1030 = vunpack.c.l.b16 %v642
      %v1031 = vunpack.c.l.b16 %v643
      %v1032 = vunpack.c.l.b16 %v644
      %v1033 = vpack.c.b16 %v1018, %v1017
      %v1034 = vpack.c.b16 %v1020, %v1019
      %v1035 = vpack.c.b16 %v1022, %v1021
      %v1036 = vpack.c.b16 %v1024, %v1023
      %v1037 = vpack.c.b16 %v1026, %v1025
      %v1038 = vpack.c.b16 %v1028, %v1027
      %v1039 = vpack.c.b16 %v1030, %v1029
      %v1040 = vpack.c.b16 %v1032, %v1031
      %1049 = vmatprep.subr.bf16.mxu0 0
      %1050 = vmatpush1.bf16.msra.mxu0 %v1033
      %1051 = vmatprep.subr.bf16.mxu0 0
      %1052 = vmatpush1.bf16.msra.mxu0 %v1034
      %1053 = vmatprep.subr.bf16.mxu0 0
      %1054 = vmatpush1.bf16.msra.mxu0 %v1035
      %1055 = vmatprep.subr.bf16.mxu0 0
      %1056 = vmatpush1.bf16.msra.mxu0 %v1036
      %1057 = vmatprep.subr.bf16.mxu0 0
      %1058 = vmatpush1.bf16.msra.mxu0 %v1037
      %1059 = vmatprep.subr.bf16.mxu0 0
      %1060 = vmatpush1.bf16.msra.mxu0 %v1038
      %1061 = vmatprep.subr.bf16.mxu0 0
      %1062 = vmatpush1.bf16.msra.mxu0 %v1039
      %1063 = vmatprep.subr.bf16.mxu0 0
      %1064 = vmatpush1.bf16.msra.mxu0 %v1040
      %1065 = vmatprep.subr.bf16.mxu0 0
      %1066 = vmatpush1.bf16.msra.mxu0 0
      %1067 = vmatprep.subr.bf16.mxu0 0
      %1068 = vmatpush1.bf16.msra.mxu0 0
      %1069 = vmatprep.subr.bf16.mxu0 0
      %1070 = vmatpush1.bf16.msra.mxu0 0
      %1071 = vmatprep.subr.bf16.mxu0 0
      %1072 = vmatpush1.bf16.msra.mxu0 0
      %1073 = vmatprep.subr.bf16.mxu0 0
      %1074 = vmatpush1.bf16.msra.mxu0 0
      %1075 = vmatprep.subr.bf16.mxu0 0
      %1076 = vmatpush1.bf16.msra.mxu0 0
      %1077 = vmatprep.subr.bf16.mxu0 0
      %1078 = vmatpush1.bf16.msra.mxu0 0
      %1079 = vmatprep.subr.bf16.mxu0 0
      %1080 = vmatpush1.bf16.msra.mxu0 0
      %1081 = vmatprep.mubr.bf16.mxu0 0
      %1082 = vmatmul.mubr.bf16.gmra.mrb[0].mxu0 %v524
      %v1083 = vpop.f32.mrb[0].mxu0
      %v1084 = vadd.f32 %v747, %v1083
      %v1085 = vpop.f32.mrb[0].mxu0
      %v1086 = vpop.f32.mrb[0].mxu0
      %v1087 = vadd.f32 %v750, %v1086
      %v1088 = vpop.f32.mrb[0].mxu0
      %1089 = vmatprep.mubr.bf16.mxu0 0
      %1090 = vmatmul.mubr.bf16.gmra.mrb[0].mxu0 %v525
      %v1091 = vpop.f32.mrb[0].mxu0
      %v1092 = vadd.f32 %v755, %v1091
      %v1093 = vpop.f32.mrb[0].mxu0
      %v1094 = vpop.f32.mrb[0].mxu0
      %v1095 = vadd.f32 %v758, %v1094
      %v1096 = vpop.f32.mrb[0].mxu0
      %1097 = vmatprep.mubr.bf16.mxu0 0
      %1098 = vmatmul.mubr.bf16.gmra.mrb[0].mxu0 %v526
      %v1099 = vpop.f32.mrb[0].mxu0
      %v1100 = vadd.f32 %v763, %v1099
      %v1101 = vpop.f32.mrb[0].mxu0
      %v1102 = vpop.f32.mrb[0].mxu0
      %v1103 = vadd.f32 %v766, %v1102
      %v1104 = vpop.f32.mrb[0].mxu0
      %1105 = vmatprep.mubr.bf16.mxu0 0
      %1106 = vmatmul.mubr.bf16.gmra.mrb[0].mxu0 %v527
      %v1107 = vpop.f32.mrb[0].mxu0
      %v1108 = vadd.f32 %v771, %v1107
      %v1109 = vpop.f32.mrb[0].mxu0
      %v1110 = vpop.f32.mrb[0].mxu0
      %v1111 = vadd.f32 %v774, %v1110
      %v1112 = vpop.f32.mrb[0].mxu0
      %1113 = vmatprep.mubr.bf16.mxu0 0
      %1114 = vmatmul.mubr.bf16.gmra.mrb[0].mxu0 %v528
      %v1115 = vpop.f32.mrb[0].mxu0
      %v1116 = vadd.f32 %v779, %v1115
      %v1117 = vpop.f32.mrb[0].mxu0
      %v1118 = vpop.f32.mrb[0].mxu0
      %v1119 = vadd.f32 %v782, %v1118
      %v1120 = vpop.f32.mrb[0].mxu0
      %1121 = vmatprep.mubr.bf16.mxu0 0
      %1122 = vmatmul.mubr.bf16.gmra.mrb[0].mxu0 %v529
      %v1123 = vpop.f32.mrb[0].mxu0
      %v1124 = vadd.f32 %v787, %v1123
      %v1125 = vpop.f32.mrb[0].mxu0
      %v1126 = vpop.f32.mrb[0].mxu0
      %v1127 = vadd.f32 %v790, %v1126
      %v1128 = vpop.f32.mrb[0].mxu0
      %1129 = vmatprep.mubr.bf16.mxu0 0
      %1130 = vmatmul.mubr.bf16.gmra.mrb[0].mxu0 %v530
      %v1131 = vpop.f32.mrb[0].mxu0
      %v1132 = vadd.f32 %v795, %v1131
      %v1133 = vpop.f32.mrb[0].mxu0
      %v1134 = vpop.f32.mrb[0].mxu0
      %v1135 = vadd.f32 %v798, %v1134
      %v1136 = vpop.f32.mrb[0].mxu0
      %1137 = vmatprep.mubr.bf16.mxu0 0
      %1138 = vmatmul.mubr.bf16.gmra.mrb[0].mxu0 %v531
      %v1139 = vpop.f32.mrb[0].mxu0
      %v1140 = vadd.f32 %v803, %v1139
      %v1141 = vpop.f32.mrb[0].mxu0
      %v1142 = vpop.f32.mrb[0].mxu0
      %v1143 = vadd.f32 %v806, %v1142
      %v1144 = vpop.f32.mrb[0].mxu0
      %1145 = vmatprep.mubr.bf16.mxu0 0
      %1146 = vmatmul.mubr.bf16.gmra.mrb[0].mxu0 %v532
      %v1147 = vpop.f32.mrb[0].mxu0
      %v1148 = vadd.f32 %v811, %v1147
      %v1149 = vpop.f32.mrb[0].mxu0
      %v1150 = vpop.f32.mrb[0].mxu0
      %v1151 = vadd.f32 %v814, %v1150
      %v1152 = vpop.f32.mrb[0].mxu0
      %1153 = vmatprep.mubr.bf16.mxu0 0
      %1154 = vmatmul.mubr.bf16.gmra.mrb[0].mxu0 %v533
      %v1155 = vpop.f32.mrb[0].mxu0
      %v1156 = vadd.f32 %v819, %v1155
      %v1157 = vpop.f32.mrb[0].mxu0
      %v1158 = vpop.f32.mrb[0].mxu0
      %v1159 = vadd.f32 %v822, %v1158
      %v1160 = vpop.f32.mrb[0].mxu0
      %1161 = vmatprep.mubr.bf16.mxu0 0
      %1162 = vmatmul.mubr.bf16.gmra.mrb[0].mxu0 %v534
      %v1163 = vpop.f32.mrb[0].mxu0
      %v1164 = vadd.f32 %v827, %v1163
      %v1165 = vpop.f32.mrb[0].mxu0
      %v1166 = vpop.f32.mrb[0].mxu0
      %v1167 = vadd.f32 %v830, %v1166
      %v1168 = vpop.f32.mrb[0].mxu0
      %1169 = vmatprep.mubr.bf16.mxu0 0
      %1170 = vmatmul.mubr.bf16.gmra.mrb[0].mxu0 %v535
      %v1171 = vpop.f32.mrb[0].mxu0
      %v1172 = vadd.f32 %v835, %v1171
      %v1173 = vpop.f32.mrb[0].mxu0
      %v1174 = vpop.f32.mrb[0].mxu0
      %v1175 = vadd.f32 %v838, %v1174
      %v1176 = vpop.f32.mrb[0].mxu0
      %1177 = vmatprep.mubr.bf16.mxu0 0
      %1178 = vmatmul.mubr.bf16.gmra.mrb[0].mxu0 %v536
      %v1179 = vpop.f32.mrb[0].mxu0
      %v1180 = vadd.f32 %v843, %v1179
      %v1181 = vpop.f32.mrb[0].mxu0
      %v1182 = vpop.f32.mrb[0].mxu0
      %v1183 = vadd.f32 %v846, %v1182
      %v1184 = vpop.f32.mrb[0].mxu0
      %1185 = vmatprep.mubr.bf16.mxu0 0
      %1186 = vmatmul.mubr.bf16.gmra.mrb[0].mxu0 %v537
      %v1187 = vpop.f32.mrb[0].mxu0
      %v1188 = vadd.f32 %v851, %v1187
      %v1189 = vpop.f32.mrb[0].mxu0
      %v1190 = vpop.f32.mrb[0].mxu0
      %v1191 = vadd.f32 %v854, %v1190
      %v1192 = vpop.f32.mrb[0].mxu0
      %1193 = vmatprep.mubr.bf16.mxu0 0
      %1194 = vmatmul.mubr.bf16.gmra.mrb[0].mxu0 %v538
      %v1195 = vpop.f32.mrb[0].mxu0
      %v1196 = vadd.f32 %v859, %v1195
      %v1197 = vpop.f32.mrb[0].mxu0
      %v1198 = vpop.f32.mrb[0].mxu0
      %v1199 = vadd.f32 %v862, %v1198
      %v1200 = vpop.f32.mrb[0].mxu0
      %1201 = vmatprep.mubr.bf16.mxu0 0
      %1202 = vmatmul.mubr.bf16.gmra.mrb[0].mxu0 %v539
      %v1203 = vpop.f32.mrb[0].mxu0
      %v1204 = vadd.f32 %v867, %v1203
      %v1205 = vpop.f32.mrb[0].mxu0
      %v1206 = vpop.f32.mrb[0].mxu0
      %v1207 = vadd.f32 %v870, %v1206
      %v1208 = vpop.f32.mrb[0].mxu0
      %1209 = vmatprep.mubr.bf16.mxu0 0
      %1210 = vmatmul.mubr.bf16.gmra.mrb[0].mxu0 %v540
      %v1211 = vpop.f32.mrb[0].mxu0
      %v1212 = vadd.f32 %v875, %v1211
      %v1213 = vpop.f32.mrb[0].mxu0
      %v1214 = vpop.f32.mrb[0].mxu0
      %v1215 = vadd.f32 %v878, %v1214
      %v1216 = vpop.f32.mrb[0].mxu0
      %1217 = vmatprep.mubr.bf16.mxu0 0
      %1218 = vmatmul.mubr.bf16.gmra.mrb[0].mxu0 %v541
      %v1219 = vpop.f32.mrb[0].mxu0
      %v1220 = vadd.f32 %v883, %v1219
      %v1221 = vpop.f32.mrb[0].mxu0
      %v1222 = vpop.f32.mrb[0].mxu0
      %v1223 = vadd.f32 %v886, %v1222
      %v1224 = vpop.f32.mrb[0].mxu0
      %1225 = vmatprep.mubr.bf16.mxu0 0
      %1226 = vmatmul.mubr.bf16.gmra.mrb[0].mxu0 %v542
      %v1227 = vpop.f32.mrb[0].mxu0
      %v1228 = vadd.f32 %v891, %v1227
      %v1229 = vpop.f32.mrb[0].mxu0
      %v1230 = vpop.f32.mrb[0].mxu0
      %v1231 = vadd.f32 %v894, %v1230
      %v1232 = vpop.f32.mrb[0].mxu0
      %1233 = vmatprep.mubr.bf16.mxu0 0
      %1234 = vmatmul.mubr.bf16.gmra.mrb[0].mxu0 %v543
      %v1235 = vpop.f32.mrb[0].mxu0
      %v1236 = vadd.f32 %v899, %v1235
      %v1237 = vpop.f32.mrb[0].mxu0
      %v1238 = vpop.f32.mrb[0].mxu0
      %v1239 = vadd.f32 %v902, %v1238
      %v1240 = vpop.f32.mrb[0].mxu0
      %1241 = vmatprep.mubr.bf16.mxu0 0
      %1242 = vmatmul.mubr.bf16.gmra.mrb[0].mxu0 %v544
      %v1243 = vpop.f32.mrb[0].mxu0
      %v1244 = vadd.f32 %v907, %v1243
      %v1245 = vpop.f32.mrb[0].mxu0
      %v1246 = vpop.f32.mrb[0].mxu0
      %v1247 = vadd.f32 %v910, %v1246
      %v1248 = vpop.f32.mrb[0].mxu0
      %1249 = vmatprep.mubr.bf16.mxu0 0
      %1250 = vmatmul.mubr.bf16.gmra.mrb[0].mxu0 %v545
      %v1251 = vpop.f32.mrb[0].mxu0
      %v1252 = vadd.f32 %v915, %v1251
      %v1253 = vpop.f32.mrb[0].mxu0
      %v1254 = vpop.f32.mrb[0].mxu0
      %v1255 = vadd.f32 %v918, %v1254
      %v1256 = vpop.f32.mrb[0].mxu0
      %1257 = vmatprep.mubr.bf16.mxu0 0
      %1258 = vmatmul.mubr.bf16.gmra.mrb[0].mxu0 %v546
      %v1259 = vpop.f32.mrb[0].mxu0
      %v1260 = vadd.f32 %v923, %v1259
      %v1261 = vpop.f32.mrb[0].mxu0
      %v1262 = vpop.f32.mrb[0].mxu0
      %v1263 = vadd.f32 %v926, %v1262
      %v1264 = vpop.f32.mrb[0].mxu0
      %1265 = vmatprep.mubr.bf16.mxu0 0
      %1266 = vmatmul.mubr.bf16.gmra.mrb[0].mxu0 %v547
      %v1267 = vpop.f32.mrb[0].mxu0
      %v1268 = vadd.f32 %v931, %v1267
      %v1269 = vpop.f32.mrb[0].mxu0
      %v1270 = vpop.f32.mrb[0].mxu0
      %v1271 = vadd.f32 %v934, %v1270
      %v1272 = vpop.f32.mrb[0].mxu0
      %1273 = vmatprep.mubr.bf16.mxu0 0
      %1274 = vmatmul.mubr.bf16.gmra.mrb[0].mxu0 %v548
      %v1275 = vpop.f32.mrb[0].mxu0
      %v1276 = vadd.f32 %v939, %v1275
      %v1277 = vpop.f32.mrb[0].mxu0
      %v1278 = vpop.f32.mrb[0].mxu0
      %v1279 = vadd.f32 %v942, %v1278
      %v1280 = vpop.f32.mrb[0].mxu0
      %1281 = vmatprep.mubr.bf16.mxu0 0
      %1282 = vmatmul.mubr.bf16.gmra.mrb[0].mxu0 %v549
      %v1283 = vpop.f32.mrb[0].mxu0
      %v1284 = vadd.f32 %v947, %v1283
      %v1285 = vpop.f32.mrb[0].mxu0
      %v1286 = vpop.f32.mrb[0].mxu0
      %v1287 = vadd.f32 %v950, %v1286
      %v1288 = vpop.f32.mrb[0].mxu0
      %1289 = vmatprep.mubr.bf16.mxu0 0
      %1290 = vmatmul.mubr.bf16.gmra.mrb[0].mxu0 %v550
      %v1291 = vpop.f32.mrb[0].mxu0
      %v1292 = vadd.f32 %v955, %v1291
      %v1293 = vpop.f32.mrb[0].mxu0
      %v1294 = vpop.f32.mrb[0].mxu0
      %v1295 = vadd.f32 %v958, %v1294
      %v1296 = vpop.f32.mrb[0].mxu0
      %1297 = vmatprep.mubr.bf16.mxu0 0
      %1298 = vmatmul.mubr.bf16.gmra.mrb[0].mxu0 %v551
      %v1299 = vpop.f32.mrb[0].mxu0
      %v1300 = vadd.f32 %v963, %v1299
      %v1301 = vpop.f32.mrb[0].mxu0
      %v1302 = vpop.f32.mrb[0].mxu0
      %v1303 = vadd.f32 %v966, %v1302
      %v1304 = vpop.f32.mrb[0].mxu0
      %1305 = vmatprep.mubr.bf16.mxu0 0
      %1306 = vmatmul.mubr.bf16.gmra.mrb[0].mxu0 %v552
      %v1307 = vpop.f32.mrb[0].mxu0
      %v1308 = vadd.f32 %v971, %v1307
      %v1309 = vpop.f32.mrb[0].mxu0
      %v1310 = vpop.f32.mrb[0].mxu0
      %v1311 = vadd.f32 %v974, %v1310
      %v1312 = vpop.f32.mrb[0].mxu0
      %1313 = vmatprep.mubr.bf16.mxu0 0
      %1314 = vmatmul.mubr.bf16.gmra.mrb[0].mxu0 %v553
      %v1315 = vpop.f32.mrb[0].mxu0
      %v1316 = vadd.f32 %v979, %v1315
      %v1317 = vpop.f32.mrb[0].mxu0
      %v1318 = vpop.f32.mrb[0].mxu0
      %v1319 = vadd.f32 %v982, %v1318
      %v1320 = vpop.f32.mrb[0].mxu0
      %1321 = vmatprep.mubr.bf16.mxu0 0
      %1322 = vmatmul.mubr.bf16.gmra.mrb[0].mxu0 %v554
      %v1323 = vpop.f32.mrb[0].mxu0
      %v1324 = vadd.f32 %v987, %v1323
      %v1325 = vpop.f32.mrb[0].mxu0
      %v1326 = vpop.f32.mrb[0].mxu0
      %v1327 = vadd.f32 %v990, %v1326
      %v1328 = vpop.f32.mrb[0].mxu0
      %1329 = vmatprep.mubr.bf16.mxu0 0
      %1330 = vmatmul.mubr.bf16.gmra.mrb[0].mxu0 %v555
      %v1331 = vpop.f32.mrb[0].mxu0
      %v1332 = vadd.f32 %v995, %v1331
      %v1333 = vpop.f32.mrb[0].mxu0
      %v1334 = vpop.f32.mrb[0].mxu0
      %v1335 = vadd.f32 %v998, %v1334
      %v1336 = vpop.f32.mrb[0].mxu0
      %1337 = vdwg.mxu0
      %s1338 = sadd.s32 96, %s626
      %s1339 = smul.addr %s1338, 4
      %s1340 = scalar_lea.vmem %s1, %s1339
      %v1341 = vld [vmem:[%s1340] sm:$0xf]
      %v1342 = vld [vmem:[%s1340 + $0x4] sm:$0xf]
      %v1343 = vld [vmem:[%s1340 + $0x8] sm:$0xf]
      %v1344 = vld [vmem:[%s1340 + $0xc] sm:$0xf]
      %v1345 = vld [vmem:[%s1340 + $0x10] sm:$0xf]
      %v1346 = vld [vmem:[%s1340 + $0x14] sm:$0xf]
      %v1347 = vld [vmem:[%s1340 + $0x18] sm:$0xf]
      %v1348 = vld [vmem:[%s1340 + $0x1c] sm:$0xf]
      %v1349 = vld [vmem:[%s1340 + $0x20] sm:$0xf]
      %v1350 = vld [vmem:[%s1340 + $0x24] sm:$0xf]
      %v1351 = vld [vmem:[%s1340 + $0x28] sm:$0xf]
      %v1352 = vld [vmem:[%s1340 + $0x2c] sm:$0xf]
      %v1353 = vld [vmem:[%s1340 + $0x30] sm:$0xf]
      %v1354 = vld [vmem:[%s1340 + $0x34] sm:$0xf]
      %v1355 = vld [vmem:[%s1340 + $0x38] sm:$0xf]
      %v1356 = vld [vmem:[%s1340 + $0x3c] sm:$0xf]
      %v1373 = vunpack.c.l.b16 %v1341
      %v1374 = vunpack.c.l.b16 %v1342
      %v1375 = vunpack.c.l.b16 %v1343
      %v1376 = vunpack.c.l.b16 %v1344
      %v1377 = vunpack.c.l.b16 %v1345
      %v1378 = vunpack.c.l.b16 %v1346
      %v1379 = vunpack.c.l.b16 %v1347
      %v1380 = vunpack.c.l.b16 %v1348
      %v1381 = vunpack.c.l.b16 %v1349
      %v1382 = vunpack.c.l.b16 %v1350
      %v1383 = vunpack.c.l.b16 %v1351
      %v1384 = vunpack.c.l.b16 %v1352
      %v1385 = vunpack.c.l.b16 %v1353
      %v1386 = vunpack.c.l.b16 %v1354
      %v1387 = vunpack.c.l.b16 %v1355
      %v1388 = vunpack.c.l.b16 %v1356
      %v1389 = vpack.c.b16 %v1374, %v1373
      %v1390 = vpack.c.b16 %v1376, %v1375
      %v1391 = vpack.c.b16 %v1378, %v1377
      %v1392 = vpack.c.b16 %v1380, %v1379
      %v1393 = vpack.c.b16 %v1382, %v1381
      %v1394 = vpack.c.b16 %v1384, %v1383
      %v1395 = vpack.c.b16 %v1386, %v1385
      %v1396 = vpack.c.b16 %v1388, %v1387
      %1405 = vmatprep.subr.bf16.mxu0 0
      %1406 = vmatpush1.bf16.msra.mxu0 %v1389
      %1407 = vmatprep.subr.bf16.mxu0 0
      %1408 = vmatpush1.bf16.msra.mxu0 %v1390
      %1409 = vmatprep.subr.bf16.mxu0 0
      %1410 = vmatpush1.bf16.msra.mxu0 %v1391
      %1411 = vmatprep.subr.bf16.mxu0 0
      %1412 = vmatpush1.bf16.msra.mxu0 %v1392
      %1413 = vmatprep.subr.bf16.mxu0 0
      %1414 = vmatpush1.bf16.msra.mxu0 %v1393
      %1415 = vmatprep.subr.bf16.mxu0 0
      %1416 = vmatpush1.bf16.msra.mxu0 %v1394
      %1417 = vmatprep.subr.bf16.mxu0 0
      %1418 = vmatpush1.bf16.msra.mxu0 %v1395
      %1419 = vmatprep.subr.bf16.mxu0 0
      %1420 = vmatpush1.bf16.msra.mxu0 %v1396
      %1421 = vmatprep.subr.bf16.mxu0 0
      %1422 = vmatpush1.bf16.msra.mxu0 0
      %1423 = vmatprep.subr.bf16.mxu0 0
      %1424 = vmatpush1.bf16.msra.mxu0 0
      %1425 = vmatprep.subr.bf16.mxu0 0
      %1426 = vmatpush1.bf16.msra.mxu0 0
      %1427 = vmatprep.subr.bf16.mxu0 0
      %1428 = vmatpush1.bf16.msra.mxu0 0
      %1429 = vmatprep.subr.bf16.mxu0 0
      %1430 = vmatpush1.bf16.msra.mxu0 0
      %1431 = vmatprep.subr.bf16.mxu0 0
      %1432 = vmatpush1.bf16.msra.mxu0 0
      %1433 = vmatprep.subr.bf16.mxu0 0
      %1434 = vmatpush1.bf16.msra.mxu0 0
      %1435 = vmatprep.subr.bf16.mxu0 0
      %1436 = vmatpush1.bf16.msra.mxu0 0
      %1437 = vmatprep.mubr.bf16.mxu0 0
      %1438 = vmatmul.mubr.bf16.gmra.mrb[0].mxu0 %v594
      %v1439 = vpop.f32.mrb[0].mxu0
      %v1440 = vadd.f32 0.0, %v1439
      %v1441 = vpop.f32.mrb[0].mxu0
      %v1442 = vpop.f32.mrb[0].mxu0
      %v1443 = vadd.f32 0.0, %v1442
      %v1444 = vpop.f32.mrb[0].mxu0
      %1445 = vmatprep.mubr.bf16.mxu0 0
      %1446 = vmatmul.mubr.bf16.gmra.mrb[0].mxu0 %v595
      %v1447 = vpop.f32.mrb[0].mxu0
      %v1448 = vadd.f32 0.0, %v1447
      %v1449 = vpop.f32.mrb[0].mxu0
      %v1450 = vpop.f32.mrb[0].mxu0
      %v1451 = vadd.f32 0.0, %v1450
      %v1452 = vpop.f32.mrb[0].mxu0
      %1453 = vmatprep.mubr.bf16.mxu0 0
      %1454 = vmatmul.mubr.bf16.gmra.mrb[0].mxu0 %v596
      %v1455 = vpop.f32.mrb[0].mxu0
      %v1456 = vadd.f32 0.0, %v1455
      %v1457 = vpop.f32.mrb[0].mxu0
      %v1458 = vpop.f32.mrb[0].mxu0
      %v1459 = vadd.f32 0.0, %v1458
      %v1460 = vpop.f32.mrb[0].mxu0
      %1461 = vmatprep.mubr.bf16.mxu0 0
      %1462 = vmatmul.mubr.bf16.gmra.mrb[0].mxu0 %v597
      %v1463 = vpop.f32.mrb[0].mxu0
      %v1464 = vadd.f32 0.0, %v1463
      %v1465 = vpop.f32.mrb[0].mxu0
      %v1466 = vpop.f32.mrb[0].mxu0
      %v1467 = vadd.f32 0.0, %v1466
      %v1468 = vpop.f32.mrb[0].mxu0
      %1469 = vmatprep.mubr.bf16.mxu0 0
      %1470 = vmatmul.mubr.bf16.gmra.mrb[0].mxu0 %v598
      %v1471 = vpop.f32.mrb[0].mxu0
      %v1472 = vadd.f32 0.0, %v1471
      %v1473 = vpop.f32.mrb[0].mxu0
      %v1474 = vpop.f32.mrb[0].mxu0
      %v1475 = vadd.f32 0.0, %v1474
      %v1476 = vpop.f32.mrb[0].mxu0
      %1477 = vmatprep.mubr.bf16.mxu0 0
      %1478 = vmatmul.mubr.bf16.gmra.mrb[0].mxu0 %v599
      %v1479 = vpop.f32.mrb[0].mxu0
      %v1480 = vadd.f32 0.0, %v1479
      %v1481 = vpop.f32.mrb[0].mxu0
      %v1482 = vpop.f32.mrb[0].mxu0
      %v1483 = vadd.f32 0.0, %v1482
      %v1484 = vpop.f32.mrb[0].mxu0
      %1485 = vmatprep.mubr.bf16.mxu0 0
      %1486 = vmatmul.mubr.bf16.gmra.mrb[0].mxu0 %v600
      %v1487 = vpop.f32.mrb[0].mxu0
      %v1488 = vadd.f32 0.0, %v1487
      %v1489 = vpop.f32.mrb[0].mxu0
      %v1490 = vpop.f32.mrb[0].mxu0
      %v1491 = vadd.f32 0.0, %v1490
      %v1492 = vpop.f32.mrb[0].mxu0
      %1493 = vmatprep.mubr.bf16.mxu0 0
      %1494 = vmatmul.mubr.bf16.gmra.mrb[0].mxu0 %v601
      %v1495 = vpop.f32.mrb[0].mxu0
      %v1496 = vadd.f32 0.0, %v1495
      %v1497 = vpop.f32.mrb[0].mxu0
      %v1498 = vpop.f32.mrb[0].mxu0
      %v1499 = vadd.f32 0.0, %v1498
      %v1500 = vpop.f32.mrb[0].mxu0
      %1501 = vmatprep.mubr.bf16.mxu0 0
      %1502 = vmatmul.mubr.bf16.gmra.mrb[0].mxu0 %v602
      %v1503 = vpop.f32.mrb[0].mxu0
      %v1504 = vadd.f32 0.0, %v1503
      %v1505 = vpop.f32.mrb[0].mxu0
      %v1506 = vpop.f32.mrb[0].mxu0
      %v1507 = vadd.f32 0.0, %v1506
      %v1508 = vpop.f32.mrb[0].mxu0
      %1509 = vmatprep.mubr.bf16.mxu0 0
      %1510 = vmatmul.mubr.bf16.gmra.mrb[0].mxu0 %v603
      %v1511 = vpop.f32.mrb[0].mxu0
      %v1512 = vadd.f32 0.0, %v1511
      %v1513 = vpop.f32.mrb[0].mxu0
      %v1514 = vpop.f32.mrb[0].mxu0
      %v1515 = vadd.f32 0.0, %v1514
      %v1516 = vpop.f32.mrb[0].mxu0
      %1517 = vmatprep.mubr.bf16.mxu0 0
      %1518 = vmatmul.mubr.bf16.gmra.mrb[0].mxu0 %v604
      %v1519 = vpop.f32.mrb[0].mxu0
      %v1520 = vadd.f32 0.0, %v1519
      %v1521 = vpop.f32.mrb[0].mxu0
      %v1522 = vpop.f32.mrb[0].mxu0
      %v1523 = vadd.f32 0.0, %v1522
      %v1524 = vpop.f32.mrb[0].mxu0
      %1525 = vmatprep.mubr.bf16.mxu0 0
      %1526 = vmatmul.mubr.bf16.gmra.mrb[0].mxu0 %v605
      %v1527 = vpop.f32.mrb[0].mxu0
      %v1528 = vadd.f32 0.0, %v1527
      %v1529 = vpop.f32.mrb[0].mxu0
      %v1530 = vpop.f32.mrb[0].mxu0
      %v1531 = vadd.f32 0.0, %v1530
      %v1532 = vpop.f32.mrb[0].mxu0
      %1533 = vmatprep.mubr.bf16.mxu0 0
      %1534 = vmatmul.mubr.bf16.gmra.mrb[0].mxu0 %v606
      %v1535 = vpop.f32.mrb[0].mxu0
      %v1536 = vadd.f32 0.0, %v1535
      %v1537 = vpop.f32.mrb[0].mxu0
      %v1538 = vpop.f32.mrb[0].mxu0
      %v1539 = vadd.f32 0.0, %v1538
      %v1540 = vpop.f32.mrb[0].mxu0
      %1541 = vmatprep.mubr.bf16.mxu0 0
      %1542 = vmatmul.mubr.bf16.gmra.mrb[0].mxu0 %v607
      %v1543 = vpop.f32.mrb[0].mxu0
      %v1544 = vadd.f32 0.0, %v1543
      %v1545 = vpop.f32.mrb[0].mxu0
      %v1546 = vpop.f32.mrb[0].mxu0
      %v1547 = vadd.f32 0.0, %v1546
      %v1548 = vpop.f32.mrb[0].mxu0
      %1549 = vmatprep.mubr.bf16.mxu0 0
      %1550 = vmatmul.mubr.bf16.gmra.mrb[0].mxu0 %v608
      %v1551 = vpop.f32.mrb[0].mxu0
      %v1552 = vadd.f32 0.0, %v1551
      %v1553 = vpop.f32.mrb[0].mxu0
      %v1554 = vpop.f32.mrb[0].mxu0
      %v1555 = vadd.f32 0.0, %v1554
      %v1556 = vpop.f32.mrb[0].mxu0
      %1557 = vmatprep.mubr.bf16.mxu0 0
      %1558 = vmatmul.mubr.bf16.gmra.mrb[0].mxu0 %v609
      %v1559 = vpop.f32.mrb[0].mxu0
      %v1560 = vadd.f32 0.0, %v1559
      %v1561 = vpop.f32.mrb[0].mxu0
      %v1562 = vpop.f32.mrb[0].mxu0
      %v1563 = vadd.f32 0.0, %v1562
      %v1564 = vpop.f32.mrb[0].mxu0
      %1565 = vmatprep.mubr.bf16.mxu0 0
      %1566 = vmatmul.mubr.bf16.gmra.mrb[0].mxu0 %v610
      %v1567 = vpop.f32.mrb[0].mxu0
      %v1568 = vadd.f32 0.0, %v1567
      %v1569 = vpop.f32.mrb[0].mxu0
      %v1570 = vpop.f32.mrb[0].mxu0
      %v1571 = vadd.f32 0.0, %v1570
      %v1572 = vpop.f32.mrb[0].mxu0
      %1573 = vmatprep.mubr.bf16.mxu0 0
      %1574 = vmatmul.mubr.bf16.gmra.mrb[0].mxu0 %v611
      %v1575 = vpop.f32.mrb[0].mxu0
      %v1576 = vadd.f32 0.0, %v1575
      %v1577 = vpop.f32.mrb[0].mxu0
      %v1578 = vpop.f32.mrb[0].mxu0
      %v1579 = vadd.f32 0.0, %v1578
      %v1580 = vpop.f32.mrb[0].mxu0
      %1581 = vmatprep.mubr.bf16.mxu0 0
      %1582 = vmatmul.mubr.bf16.gmra.mrb[0].mxu0 %v612
      %v1583 = vpop.f32.mrb[0].mxu0
      %v1584 = vadd.f32 0.0, %v1583
      %v1585 = vpop.f32.mrb[0].mxu0
      %v1586 = vpop.f32.mrb[0].mxu0
      %v1587 = vadd.f32 0.0, %v1586
      %v1588 = vpop.f32.mrb[0].mxu0
      %1589 = vmatprep.mubr.bf16.mxu0 0
      %1590 = vmatmul.mubr.bf16.gmra.mrb[0].mxu0 %v613
      %v1591 = vpop.f32.mrb[0].mxu0
      %v1592 = vadd.f32 0.0, %v1591
      %v1593 = vpop.f32.mrb[0].mxu0
      %v1594 = vpop.f32.mrb[0].mxu0
      %v1595 = vadd.f32 0.0, %v1594
      %v1596 = vpop.f32.mrb[0].mxu0
      %1597 = vmatprep.mubr.bf16.mxu0 0
      %1598 = vmatmul.mubr.bf16.gmra.mrb[0].mxu0 %v614
      %v1599 = vpop.f32.mrb[0].mxu0
      %v1600 = vadd.f32 0.0, %v1599
      %v1601 = vpop.f32.mrb[0].mxu0
      %v1602 = vpop.f32.mrb[0].mxu0
      %v1603 = vadd.f32 0.0, %v1602
      %v1604 = vpop.f32.mrb[0].mxu0
      %1605 = vmatprep.mubr.bf16.mxu0 0
      %1606 = vmatmul.mubr.bf16.gmra.mrb[0].mxu0 %v615
      %v1607 = vpop.f32.mrb[0].mxu0
      %v1608 = vadd.f32 0.0, %v1607
      %v1609 = vpop.f32.mrb[0].mxu0
      %v1610 = vpop.f32.mrb[0].mxu0
      %v1611 = vadd.f32 0.0, %v1610
      %v1612 = vpop.f32.mrb[0].mxu0
      %1613 = vmatprep.mubr.bf16.mxu0 0
      %1614 = vmatmul.mubr.bf16.gmra.mrb[0].mxu0 %v616
      %v1615 = vpop.f32.mrb[0].mxu0
      %v1616 = vadd.f32 0.0, %v1615
      %v1617 = vpop.f32.mrb[0].mxu0
      %v1618 = vpop.f32.mrb[0].mxu0
      %v1619 = vadd.f32 0.0, %v1618
      %v1620 = vpop.f32.mrb[0].mxu0
      %1621 = vmatprep.mubr.bf16.mxu0 0
      %1622 = vmatmul.mubr.bf16.gmra.mrb[0].mxu0 %v617
      %v1623 = vpop.f32.mrb[0].mxu0
      %v1624 = vadd.f32 0.0, %v1623
      %v1625 = vpop.f32.mrb[0].mxu0
      %v1626 = vpop.f32.mrb[0].mxu0
      %v1627 = vadd.f32 0.0, %v1626
      %v1628 = vpop.f32.mrb[0].mxu0
      %1629 = vmatprep.mubr.bf16.mxu0 0
      %1630 = vmatmul.mubr.bf16.gmra.mrb[0].mxu0 %v618
      %v1631 = vpop.f32.mrb[0].mxu0
      %v1632 = vadd.f32 0.0, %v1631
      %v1633 = vpop.f32.mrb[0].mxu0
      %v1634 = vpop.f32.mrb[0].mxu0
      %v1635 = vadd.f32 0.0, %v1634
      %v1636 = vpop.f32.mrb[0].mxu0
      %1637 = vmatprep.mubr.bf16.mxu0 0
      %1638 = vmatmul.mubr.bf16.gmra.mrb[0].mxu0 %v619
      %v1639 = vpop.f32.mrb[0].mxu0
      %v1640 = vadd.f32 0.0, %v1639
      %v1641 = vpop.f32.mrb[0].mxu0
      %v1642 = vpop.f32.mrb[0].mxu0
      %v1643 = vadd.f32 0.0, %v1642
      %v1644 = vpop.f32.mrb[0].mxu0
      %1645 = vmatprep.mubr.bf16.mxu0 0
      %1646 = vmatmul.mubr.bf16.gmra.mrb[0].mxu0 %v620
      %v1647 = vpop.f32.mrb[0].mxu0
      %v1648 = vadd.f32 0.0, %v1647
      %v1649 = vpop.f32.mrb[0].mxu0
      %v1650 = vpop.f32.mrb[0].mxu0
      %v1651 = vadd.f32 0.0, %v1650
      %v1652 = vpop.f32.mrb[0].mxu0
      %1653 = vmatprep.mubr.bf16.mxu0 0
      %1654 = vmatmul.mubr.bf16.gmra.mrb[0].mxu0 %v621
      %v1655 = vpop.f32.mrb[0].mxu0
      %v1656 = vadd.f32 0.0, %v1655
      %v1657 = vpop.f32.mrb[0].mxu0
      %v1658 = vpop.f32.mrb[0].mxu0
      %v1659 = vadd.f32 0.0, %v1658
      %v1660 = vpop.f32.mrb[0].mxu0
      %1661 = vmatprep.mubr.bf16.mxu0 0
      %1662 = vmatmul.mubr.bf16.gmra.mrb[0].mxu0 %v622
      %v1663 = vpop.f32.mrb[0].mxu0
      %v1664 = vadd.f32 0.0, %v1663
      %v1665 = vpop.f32.mrb[0].mxu0
      %v1666 = vpop.f32.mrb[0].mxu0
      %v1667 = vadd.f32 0.0, %v1666
      %v1668 = vpop.f32.mrb[0].mxu0
      %1669 = vmatprep.mubr.bf16.mxu0 0
      %1670 = vmatmul.mubr.bf16.gmra.mrb[0].mxu0 %v623
      %v1671 = vpop.f32.mrb[0].mxu0
      %v1672 = vadd.f32 0.0, %v1671
      %v1673 = vpop.f32.mrb[0].mxu0
      %v1674 = vpop.f32.mrb[0].mxu0
      %v1675 = vadd.f32 0.0, %v1674
      %v1676 = vpop.f32.mrb[0].mxu0
      %1677 = vmatprep.mubr.bf16.mxu0 0
      %1678 = vmatmul.mubr.bf16.gmra.mrb[0].mxu0 %v624
      %v1679 = vpop.f32.mrb[0].mxu0
      %v1680 = vadd.f32 0.0, %v1679
      %v1681 = vpop.f32.mrb[0].mxu0
      %v1682 = vpop.f32.mrb[0].mxu0
      %v1683 = vadd.f32 0.0, %v1682
      %v1684 = vpop.f32.mrb[0].mxu0
      %1685 = vmatprep.mubr.bf16.mxu0 0
      %1686 = vmatmul.mubr.bf16.gmra.mrb[0].mxu0 %v625
      %v1687 = vpop.f32.mrb[0].mxu0
      %v1688 = vadd.f32 0.0, %v1687
      %v1689 = vpop.f32.mrb[0].mxu0
      %v1690 = vpop.f32.mrb[0].mxu0
      %v1691 = vadd.f32 0.0, %v1690
      %v1692 = vpop.f32.mrb[0].mxu0
      %1693 = vdwg.mxu0
      %v1694 = vadd.f32 %v1084, %v1440
      %v1695 = vadd.f32 %v1087, %v1443
      %v1696 = vadd.f32 %v1092, %v1448
      %v1697 = vadd.f32 %v1095, %v1451
      %v1698 = vadd.f32 %v1100, %v1456
      %v1699 = vadd.f32 %v1103, %v1459
      %v1700 = vadd.f32 %v1108, %v1464
      %v1701 = vadd.f32 %v1111, %v1467
      %v1702 = vadd.f32 %v1116, %v1472
      %v1703 = vadd.f32 %v1119, %v1475
      %v1704 = vadd.f32 %v1124, %v1480
      %v1705 = vadd.f32 %v1127, %v1483
      %v1706 = vadd.f32 %v1132, %v1488
      %v1707 = vadd.f32 %v1135, %v1491
      %v1708 = vadd.f32 %v1140, %v1496
      %v1709 = vadd.f32 %v1143, %v1499
      %v1710 = vadd.f32 %v1148, %v1504
      %v1711 = vadd.f32 %v1151, %v1507
      %v1712 = vadd.f32 %v1156, %v1512
      %v1713 = vadd.f32 %v1159, %v1515
      %v1714 = vadd.f32 %v1164, %v1520
      %v1715 = vadd.f32 %v1167, %v1523
      %v1716 = vadd.f32 %v1172, %v1528
      %v1717 = vadd.f32 %v1175, %v1531
      %v1718 = vadd.f32 %v1180, %v1536
      %v1719 = vadd.f32 %v1183, %v1539
      %v1720 = vadd.f32 %v1188, %v1544
      %v1721 = vadd.f32 %v1191, %v1547
      %v1722 = vadd.f32 %v1196, %v1552
      %v1723 = vadd.f32 %v1199, %v1555
      %v1724 = vadd.f32 %v1204, %v1560
      %v1725 = vadd.f32 %v1207, %v1563
      %v1726 = vadd.f32 %v1212, %v1568
      %v1727 = vadd.f32 %v1215, %v1571
      %v1728 = vadd.f32 %v1220, %v1576
      %v1729 = vadd.f32 %v1223, %v1579
      %v1730 = vadd.f32 %v1228, %v1584
      %v1731 = vadd.f32 %v1231, %v1587
      %v1732 = vadd.f32 %v1236, %v1592
      %v1733 = vadd.f32 %v1239, %v1595
      %v1734 = vadd.f32 %v1244, %v1600
      %v1735 = vadd.f32 %v1247, %v1603
      %v1736 = vadd.f32 %v1252, %v1608
      %v1737 = vadd.f32 %v1255, %v1611
      %v1738 = vadd.f32 %v1260, %v1616
      %v1739 = vadd.f32 %v1263, %v1619
      %v1740 = vadd.f32 %v1268, %v1624
      %v1741 = vadd.f32 %v1271, %v1627
      %v1742 = vadd.f32 %v1276, %v1632
      %v1743 = vadd.f32 %v1279, %v1635
      %v1744 = vadd.f32 %v1284, %v1640
      %v1745 = vadd.f32 %v1287, %v1643
      %v1746 = vadd.f32 %v1292, %v1648
      %v1747 = vadd.f32 %v1295, %v1651
      %v1748 = vadd.f32 %v1300, %v1656
      %v1749 = vadd.f32 %v1303, %v1659
      %v1750 = vadd.f32 %v1308, %v1664
      %v1751 = vadd.f32 %v1311, %v1667
      %v1752 = vadd.f32 %v1316, %v1672
      %v1753 = vadd.f32 %v1319, %v1675
      %v1754 = vadd.f32 %v1324, %v1680
      %v1755 = vadd.f32 %v1327, %v1683
      %v1756 = vadd.f32 %v1332, %v1688
      %v1757 = vadd.f32 %v1335, %v1691
      %v1758 = vrot.slane %v1694, 7
      %v1759 = vrot.slane %v1695, 7
      %v1760 = vrot.slane %v1696, 7
      %v1761 = vrot.slane %v1697, 7
      %v1762 = vrot.slane %v1698, 7
      %v1763 = vrot.slane %v1699, 7
      %v1764 = vrot.slane %v1700, 7
      %v1765 = vrot.slane %v1701, 7
      %v1766 = vrot.slane %v1702, 7
      %v1767 = vrot.slane %v1703, 7
      %v1768 = vrot.slane %v1704, 7
      %v1769 = vrot.slane %v1705, 7
      %v1770 = vrot.slane %v1706, 7
      %v1771 = vrot.slane %v1707, 7
      %v1772 = vrot.slane %v1708, 7
      %v1773 = vrot.slane %v1709, 7
      %v1774 = vrot.slane %v1710, 7
      %v1775 = vrot.slane %v1711, 7
      %v1776 = vrot.slane %v1712, 7
      %v1777 = vrot.slane %v1713, 7
      %v1778 = vrot.slane %v1714, 7
      %v1779 = vrot.slane %v1715, 7
      %v1780 = vrot.slane %v1716, 7
      %v1781 = vrot.slane %v1717, 7
      %v1782 = vrot.slane %v1718, 7
      %v1783 = vrot.slane %v1719, 7
      %v1784 = vrot.slane %v1720, 7
      %v1785 = vrot.slane %v1721, 7
      %v1786 = vrot.slane %v1722, 7
      %v1787 = vrot.slane %v1723, 7
      %v1788 = vrot.slane %v1724, 7
      %v1789 = vrot.slane %v1725, 7
      %v1790 = vrot.slane %v1726, 7
      %v1791 = vrot.slane %v1727, 7
      %v1792 = vrot.slane %v1728, 7
      %v1793 = vrot.slane %v1729, 7
      %v1794 = vrot.slane %v1730, 7
      %v1795 = vrot.slane %v1731, 7
      %v1796 = vrot.slane %v1732, 7
      %v1797 = vrot.slane %v1733, 7
      %v1798 = vrot.slane %v1734, 7
      %v1799 = vrot.slane %v1735, 7
      %v1800 = vrot.slane %v1736, 7
      %v1801 = vrot.slane %v1737, 7
      %v1802 = vrot.slane %v1738, 7
      %v1803 = vrot.slane %v1739, 7
      %v1804 = vrot.slane %v1740, 7
      %v1805 = vrot.slane %v1741, 7
      %v1806 = vrot.slane %v1742, 7
      %v1807 = vrot.slane %v1743, 7
      %v1808 = vrot.slane %v1744, 7
      %v1809 = vrot.slane %v1745, 7
      %v1810 = vrot.slane %v1746, 7
      %v1811 = vrot.slane %v1747, 7
      %v1812 = vrot.slane %v1748, 7
      %v1813 = vrot.slane %v1749, 7
      %v1814 = vrot.slane %v1750, 7
      %v1815 = vrot.slane %v1751, 7
      %v1816 = vrot.slane %v1752, 7
      %v1817 = vrot.slane %v1753, 7
      %v1818 = vrot.slane %v1754, 7
      %v1819 = vrot.slane %v1755, 7
      %v1820 = vrot.slane %v1756, 7
      %v1821 = vrot.slane %v1757, 7
      %v1822 = vlaneseq
      %v1823 = vshrl.u32 %v1822, 7
      %vm1824 = vcmp.lt.s32.totalorder %v1823, 1
      %v1825 = vsel %vm1824, %v1820, %v1821
      %v1826 = vsel %vm1824, %v1819, %v1820
      %v1827 = vsel %vm1824, %v1818, %v1819
      %v1828 = vsel %vm1824, %v1817, %v1818
      %v1829 = vsel %vm1824, %v1816, %v1817
      %v1830 = vsel %vm1824, %v1815, %v1816
      %v1831 = vsel %vm1824, %v1814, %v1815
      %v1832 = vsel %vm1824, %v1813, %v1814
      %v1833 = vsel %vm1824, %v1812, %v1813
      %v1834 = vsel %vm1824, %v1811, %v1812
      %v1835 = vsel %vm1824, %v1810, %v1811
      %v1836 = vsel %vm1824, %v1809, %v1810
      %v1837 = vsel %vm1824, %v1808, %v1809
      %v1838 = vsel %vm1824, %v1807, %v1808
      %v1839 = vsel %vm1824, %v1806, %v1807
      %v1840 = vsel %vm1824, %v1805, %v1806
      %v1841 = vsel %vm1824, %v1804, %v1805
      %v1842 = vsel %vm1824, %v1803, %v1804
      %v1843 = vsel %vm1824, %v1802, %v1803
      %v1844 = vsel %vm1824, %v1801, %v1802
      %v1845 = vsel %vm1824, %v1800, %v1801
      %v1846 = vsel %vm1824, %v1799, %v1800
      %v1847 = vsel %vm1824, %v1798, %v1799
      %v1848 = vsel %vm1824, %v1797, %v1798
      %v1849 = vsel %vm1824, %v1796, %v1797
      %v1850 = vsel %vm1824, %v1795, %v1796
      %v1851 = vsel %vm1824, %v1794, %v1795
      %v1852 = vsel %vm1824, %v1793, %v1794
      %v1853 = vsel %vm1824, %v1792, %v1793
      %v1854 = vsel %vm1824, %v1791, %v1792
      %v1855 = vsel %vm1824, %v1790, %v1791
      %v1856 = vsel %vm1824, %v1789, %v1790
      %v1857 = vsel %vm1824, %v1788, %v1789
      %v1858 = vsel %vm1824, %v1787, %v1788
      %v1859 = vsel %vm1824, %v1786, %v1787
      %v1860 = vsel %vm1824, %v1785, %v1786
      %v1861 = vsel %vm1824, %v1784, %v1785
      %v1862 = vsel %vm1824, %v1783, %v1784
      %v1863 = vsel %vm1824, %v1782, %v1783
      %v1864 = vsel %vm1824, %v1781, %v1782
      %v1865 = vsel %vm1824, %v1780, %v1781
      %v1866 = vsel %vm1824, %v1779, %v1780
      %v1867 = vsel %vm1824, %v1778, %v1779
      %v1868 = vsel %vm1824, %v1777, %v1778
      %v1869 = vsel %vm1824, %v1776, %v1777
      %v1870 = vsel %vm1824, %v1775, %v1776
      %v1871 = vsel %vm1824, %v1774, %v1775
      %v1872 = vsel %vm1824, %v1773, %v1774
      %v1873 = vsel %vm1824, %v1772, %v1773
      %v1874 = vsel %vm1824, %v1771, %v1772
      %v1875 = vsel %vm1824, %v1770, %v1771
      %v1876 = vsel %vm1824, %v1769, %v1770
      %v1877 = vsel %vm1824, %v1768, %v1769
      %v1878 = vsel %vm1824, %v1767, %v1768
      %v1879 = vsel %vm1824, %v1766, %v1767
      %v1880 = vsel %vm1824, %v1765, %v1766
      %v1881 = vsel %vm1824, %v1764, %v1765
      %v1882 = vsel %vm1824, %v1763, %v1764
      %v1883 = vsel %vm1824, %v1762, %v1763
      %v1884 = vsel %vm1824, %v1761, %v1762
      %v1885 = vsel %vm1824, %v1760, %v1761
      %v1886 = vsel %vm1824, %v1759, %v1760
      %v1887 = vsel %vm1824, %v1758, %v1759
      %v1888 = vsel %vm1824, %v1821, %v1758
      %s1889 = sadd.s32 16, %s626
      %s1890 = smul.addr %s1889, 4
      %s1891 = scalar_lea.vmem %s1, %s1890
      %v1892 = vld [vmem:[%s1891] sm:$0xf]
      %v1893 = vld [vmem:[%s1891 + $0x4] sm:$0xf]
      %v1894 = vld [vmem:[%s1891 + $0x8] sm:$0xf]
      %v1895 = vld [vmem:[%s1891 + $0xc] sm:$0xf]
      %v1896 = vld [vmem:[%s1891 + $0x10] sm:$0xf]
      %v1897 = vld [vmem:[%s1891 + $0x14] sm:$0xf]
      %v1898 = vld [vmem:[%s1891 + $0x18] sm:$0xf]
      %v1899 = vld [vmem:[%s1891 + $0x1c] sm:$0xf]
      %v1900 = vld [vmem:[%s1891 + $0x20] sm:$0xf]
      %v1901 = vld [vmem:[%s1891 + $0x24] sm:$0xf]
      %v1902 = vld [vmem:[%s1891 + $0x28] sm:$0xf]
      %v1903 = vld [vmem:[%s1891 + $0x2c] sm:$0xf]
      %v1904 = vld [vmem:[%s1891 + $0x30] sm:$0xf]
      %v1905 = vld [vmem:[%s1891 + $0x34] sm:$0xf]
      %v1906 = vld [vmem:[%s1891 + $0x38] sm:$0xf]
      %v1907 = vld [vmem:[%s1891 + $0x3c] sm:$0xf]
      %s1908 = sadd.s32 64, %s626
      %s1909 = smul.addr %s1908, 4
      %s1910 = scalar_lea.vmem %s1, %s1909
      %v1911 = vld [vmem:[%s1910] sm:$0xf]
      %v1912 = vld [vmem:[%s1910 + $0x4] sm:$0xf]
      %v1913 = vld [vmem:[%s1910 + $0x8] sm:$0xf]
      %v1914 = vld [vmem:[%s1910 + $0xc] sm:$0xf]
      %v1915 = vld [vmem:[%s1910 + $0x10] sm:$0xf]
      %v1916 = vld [vmem:[%s1910 + $0x14] sm:$0xf]
      %v1917 = vld [vmem:[%s1910 + $0x18] sm:$0xf]
      %v1918 = vld [vmem:[%s1910 + $0x1c] sm:$0xf]
      %v1919 = vld [vmem:[%s1910 + $0x20] sm:$0xf]
      %v1920 = vld [vmem:[%s1910 + $0x24] sm:$0xf]
      %v1921 = vld [vmem:[%s1910 + $0x28] sm:$0xf]
      %v1922 = vld [vmem:[%s1910 + $0x2c] sm:$0xf]
      %v1923 = vld [vmem:[%s1910 + $0x30] sm:$0xf]
      %v1924 = vld [vmem:[%s1910 + $0x34] sm:$0xf]
      %v1925 = vld [vmem:[%s1910 + $0x38] sm:$0xf]
      %v1926 = vld [vmem:[%s1910 + $0x3c] sm:$0xf]
      %v1943 = vunpack.c.l.b16 %v1911
      %v1944 = vunpack.c.l.b16 %v1912
      %v1945 = vunpack.c.l.b16 %v1913
      %v1946 = vunpack.c.l.b16 %v1914
      %v1947 = vunpack.c.l.b16 %v1915
      %v1948 = vunpack.c.l.b16 %v1916
      %v1949 = vunpack.c.l.b16 %v1917
      %v1950 = vunpack.c.l.b16 %v1918
      %v1951 = vunpack.c.l.b16 %v1919
      %v1952 = vunpack.c.l.b16 %v1920
      %v1953 = vunpack.c.l.b16 %v1921
      %v1954 = vunpack.c.l.b16 %v1922
      %v1955 = vunpack.c.l.b16 %v1923
      %v1956 = vunpack.c.l.b16 %v1924
      %v1957 = vunpack.c.l.b16 %v1925
      %v1958 = vunpack.c.l.b16 %v1926
      %v1959 = vpack.c.b16 %v1944, %v1943
      %v1960 = vpack.c.b16 %v1946, %v1945
      %v1961 = vpack.c.b16 %v1948, %v1947
      %v1962 = vpack.c.b16 %v1950, %v1949
      %v1963 = vpack.c.b16 %v1952, %v1951
      %v1964 = vpack.c.b16 %v1954, %v1953
      %v1965 = vpack.c.b16 %v1956, %v1955
      %v1966 = vpack.c.b16 %v1958, %v1957
      %1975 = vmatprep.subr.bf16.mxu0 0
      %1976 = vmatpush1.bf16.msra.mxu0 %v1959
      %1977 = vmatprep.subr.bf16.mxu0 0
      %1978 = vmatpush1.bf16.msra.mxu0 %v1960
      %1979 = vmatprep.subr.bf16.mxu0 0
      %1980 = vmatpush1.bf16.msra.mxu0 %v1961
      %1981 = vmatprep.subr.bf16.mxu0 0
      %1982 = vmatpush1.bf16.msra.mxu0 %v1962
      %1983 = vmatprep.subr.bf16.mxu0 0
      %1984 = vmatpush1.bf16.msra.mxu0 %v1963
      %1985 = vmatprep.subr.bf16.mxu0 0
      %1986 = vmatpush1.bf16.msra.mxu0 %v1964
      %1987 = vmatprep.subr.bf16.mxu0 0
      %1988 = vmatpush1.bf16.msra.mxu0 %v1965
      %1989 = vmatprep.subr.bf16.mxu0 0
      %1990 = vmatpush1.bf16.msra.mxu0 %v1966
      %1991 = vmatprep.subr.bf16.mxu0 0
      %1992 = vmatpush1.bf16.msra.mxu0 0
      %1993 = vmatprep.subr.bf16.mxu0 0
      %1994 = vmatpush1.bf16.msra.mxu0 0
      %1995 = vmatprep.subr.bf16.mxu0 0
      %1996 = vmatpush1.bf16.msra.mxu0 0
      %1997 = vmatprep.subr.bf16.mxu0 0
      %1998 = vmatpush1.bf16.msra.mxu0 0
      %1999 = vmatprep.subr.bf16.mxu0 0
      %2000 = vmatpush1.bf16.msra.mxu0 0
      %2001 = vmatprep.subr.bf16.mxu0 0
      %2002 = vmatpush1.bf16.msra.mxu0 0
      %2003 = vmatprep.subr.bf16.mxu0 0
      %2004 = vmatpush1.bf16.msra.mxu0 0
      %2005 = vmatprep.subr.bf16.mxu0 0
      %2006 = vmatpush1.bf16.msra.mxu0 0
      %2007 = vmatprep.mubr.bf16.mxu0 0
      %2008 = vmatmul.mubr.bf16.gmra.mrb[0].mxu0 %v559
      %v2009 = vpop.f32.mrb[0].mxu0
      %v2010 = vadd.f32 0.0, %v2009
      %v2011 = vpop.f32.mrb[0].mxu0
      %v2012 = vpop.f32.mrb[0].mxu0
      %v2013 = vadd.f32 0.0, %v2012
      %v2014 = vpop.f32.mrb[0].mxu0
      %2015 = vmatprep.mubr.bf16.mxu0 0
      %2016 = vmatmul.mubr.bf16.gmra.mrb[0].mxu0 %v560
      %v2017 = vpop.f32.mrb[0].mxu0
      %v2018 = vadd.f32 0.0, %v2017
      %v2019 = vpop.f32.mrb[0].mxu0
      %v2020 = vpop.f32.mrb[0].mxu0
      %v2021 = vadd.f32 0.0, %v2020
      %v2022 = vpop.f32.mrb[0].mxu0
      %2023 = vmatprep.mubr.bf16.mxu0 0
      %2024 = vmatmul.mubr.bf16.gmra.mrb[0].mxu0 %v561
      %v2025 = vpop.f32.mrb[0].mxu0
      %v2026 = vadd.f32 0.0, %v2025
      %v2027 = vpop.f32.mrb[0].mxu0
      %v2028 = vpop.f32.mrb[0].mxu0
      %v2029 = vadd.f32 0.0, %v2028
      %v2030 = vpop.f32.mrb[0].mxu0
      %2031 = vmatprep.mubr.bf16.mxu0 0
      %2032 = vmatmul.mubr.bf16.gmra.mrb[0].mxu0 %v562
      %v2033 = vpop.f32.mrb[0].mxu0
      %v2034 = vadd.f32 0.0, %v2033
      %v2035 = vpop.f32.mrb[0].mxu0
      %v2036 = vpop.f32.mrb[0].mxu0
      %v2037 = vadd.f32 0.0, %v2036
      %v2038 = vpop.f32.mrb[0].mxu0
      %2039 = vmatprep.mubr.bf16.mxu0 0
      %2040 = vmatmul.mubr.bf16.gmra.mrb[0].mxu0 %v563
      %v2041 = vpop.f32.mrb[0].mxu0
      %v2042 = vadd.f32 0.0, %v2041
      %v2043 = vpop.f32.mrb[0].mxu0
      %v2044 = vpop.f32.mrb[0].mxu0
      %v2045 = vadd.f32 0.0, %v2044
      %v2046 = vpop.f32.mrb[0].mxu0
      %2047 = vmatprep.mubr.bf16.mxu0 0
      %2048 = vmatmul.mubr.bf16.gmra.mrb[0].mxu0 %v564
      %v2049 = vpop.f32.mrb[0].mxu0
      %v2050 = vadd.f32 0.0, %v2049
      %v2051 = vpop.f32.mrb[0].mxu0
      %v2052 = vpop.f32.mrb[0].mxu0
      %v2053 = vadd.f32 0.0, %v2052
      %v2054 = vpop.f32.mrb[0].mxu0
      %2055 = vmatprep.mubr.bf16.mxu0 0
      %2056 = vmatmul.mubr.bf16.gmra.mrb[0].mxu0 %v565
      %v2057 = vpop.f32.mrb[0].mxu0
      %v2058 = vadd.f32 0.0, %v2057
      %v2059 = vpop.f32.mrb[0].mxu0
      %v2060 = vpop.f32.mrb[0].mxu0
      %v2061 = vadd.f32 0.0, %v2060
      %v2062 = vpop.f32.mrb[0].mxu0
      %2063 = vmatprep.mubr.bf16.mxu0 0
      %2064 = vmatmul.mubr.bf16.gmra.mrb[0].mxu0 %v566
      %v2065 = vpop.f32.mrb[0].mxu0
      %v2066 = vadd.f32 0.0, %v2065
      %v2067 = vpop.f32.mrb[0].mxu0
      %v2068 = vpop.f32.mrb[0].mxu0
      %v2069 = vadd.f32 0.0, %v2068
      %v2070 = vpop.f32.mrb[0].mxu0
      %2071 = vmatprep.mubr.bf16.mxu0 0
      %2072 = vmatmul.mubr.bf16.gmra.mrb[0].mxu0 %v567
      %v2073 = vpop.f32.mrb[0].mxu0
      %v2074 = vadd.f32 0.0, %v2073
      %v2075 = vpop.f32.mrb[0].mxu0
      %v2076 = vpop.f32.mrb[0].mxu0
      %v2077 = vadd.f32 0.0, %v2076
      %v2078 = vpop.f32.mrb[0].mxu0
      %2079 = vmatprep.mubr.bf16.mxu0 0
      %2080 = vmatmul.mubr.bf16.gmra.mrb[0].mxu0 %v568
      %v2081 = vpop.f32.mrb[0].mxu0
      %v2082 = vadd.f32 0.0, %v2081
      %v2083 = vpop.f32.mrb[0].mxu0
      %v2084 = vpop.f32.mrb[0].mxu0
      %v2085 = vadd.f32 0.0, %v2084
      %v2086 = vpop.f32.mrb[0].mxu0
      %2087 = vmatprep.mubr.bf16.mxu0 0
      %2088 = vmatmul.mubr.bf16.gmra.mrb[0].mxu0 %v569
      %v2089 = vpop.f32.mrb[0].mxu0
      %v2090 = vadd.f32 0.0, %v2089
      %v2091 = vpop.f32.mrb[0].mxu0
      %v2092 = vpop.f32.mrb[0].mxu0
      %v2093 = vadd.f32 0.0, %v2092
      %v2094 = vpop.f32.mrb[0].mxu0
      %2095 = vmatprep.mubr.bf16.mxu0 0
      %2096 = vmatmul.mubr.bf16.gmra.mrb[0].mxu0 %v570
      %v2097 = vpop.f32.mrb[0].mxu0
      %v2098 = vadd.f32 0.0, %v2097
      %v2099 = vpop.f32.mrb[0].mxu0
      %v2100 = vpop.f32.mrb[0].mxu0
      %v2101 = vadd.f32 0.0, %v2100
      %v2102 = vpop.f32.mrb[0].mxu0
      %2103 = vmatprep.mubr.bf16.mxu0 0
      %2104 = vmatmul.mubr.bf16.gmra.mrb[0].mxu0 %v571
      %v2105 = vpop.f32.mrb[0].mxu0
      %v2106 = vadd.f32 0.0, %v2105
      %v2107 = vpop.f32.mrb[0].mxu0
      %v2108 = vpop.f32.mrb[0].mxu0
      %v2109 = vadd.f32 0.0, %v2108
      %v2110 = vpop.f32.mrb[0].mxu0
      %2111 = vmatprep.mubr.bf16.mxu0 0
      %2112 = vmatmul.mubr.bf16.gmra.mrb[0].mxu0 %v572
      %v2113 = vpop.f32.mrb[0].mxu0
      %v2114 = vadd.f32 0.0, %v2113
      %v2115 = vpop.f32.mrb[0].mxu0
      %v2116 = vpop.f32.mrb[0].mxu0
      %v2117 = vadd.f32 0.0, %v2116
      %v2118 = vpop.f32.mrb[0].mxu0
      %2119 = vmatprep.mubr.bf16.mxu0 0
      %2120 = vmatmul.mubr.bf16.gmra.mrb[0].mxu0 %v573
      %v2121 = vpop.f32.mrb[0].mxu0
      %v2122 = vadd.f32 0.0, %v2121
      %v2123 = vpop.f32.mrb[0].mxu0
      %v2124 = vpop.f32.mrb[0].mxu0
      %v2125 = vadd.f32 0.0, %v2124
      %v2126 = vpop.f32.mrb[0].mxu0
      %2127 = vmatprep.mubr.bf16.mxu0 0
      %2128 = vmatmul.mubr.bf16.gmra.mrb[0].mxu0 %v574
      %v2129 = vpop.f32.mrb[0].mxu0
      %v2130 = vadd.f32 0.0, %v2129
      %v2131 = vpop.f32.mrb[0].mxu0
      %v2132 = vpop.f32.mrb[0].mxu0
      %v2133 = vadd.f32 0.0, %v2132
      %v2134 = vpop.f32.mrb[0].mxu0
      %2135 = vmatprep.mubr.bf16.mxu0 0
      %2136 = vmatmul.mubr.bf16.gmra.mrb[0].mxu0 %v575
      %v2137 = vpop.f32.mrb[0].mxu0
      %v2138 = vadd.f32 0.0, %v2137
      %v2139 = vpop.f32.mrb[0].mxu0
      %v2140 = vpop.f32.mrb[0].mxu0
      %v2141 = vadd.f32 0.0, %v2140
      %v2142 = vpop.f32.mrb[0].mxu0
      %2143 = vmatprep.mubr.bf16.mxu0 0
      %2144 = vmatmul.mubr.bf16.gmra.mrb[0].mxu0 %v576
      %v2145 = vpop.f32.mrb[0].mxu0
      %v2146 = vadd.f32 0.0, %v2145
      %v2147 = vpop.f32.mrb[0].mxu0
      %v2148 = vpop.f32.mrb[0].mxu0
      %v2149 = vadd.f32 0.0, %v2148
      %v2150 = vpop.f32.mrb[0].mxu0
      %2151 = vmatprep.mubr.bf16.mxu0 0
      %2152 = vmatmul.mubr.bf16.gmra.mrb[0].mxu0 %v577
      %v2153 = vpop.f32.mrb[0].mxu0
      %v2154 = vadd.f32 0.0, %v2153
      %v2155 = vpop.f32.mrb[0].mxu0
      %v2156 = vpop.f32.mrb[0].mxu0
      %v2157 = vadd.f32 0.0, %v2156
      %v2158 = vpop.f32.mrb[0].mxu0
      %2159 = vmatprep.mubr.bf16.mxu0 0
      %2160 = vmatmul.mubr.bf16.gmra.mrb[0].mxu0 %v578
      %v2161 = vpop.f32.mrb[0].mxu0
      %v2162 = vadd.f32 0.0, %v2161
      %v2163 = vpop.f32.mrb[0].mxu0
      %v2164 = vpop.f32.mrb[0].mxu0
      %v2165 = vadd.f32 0.0, %v2164
      %v2166 = vpop.f32.mrb[0].mxu0
      %2167 = vmatprep.mubr.bf16.mxu0 0
      %2168 = vmatmul.mubr.bf16.gmra.mrb[0].mxu0 %v579
      %v2169 = vpop.f32.mrb[0].mxu0
      %v2170 = vadd.f32 0.0, %v2169
      %v2171 = vpop.f32.mrb[0].mxu0
      %v2172 = vpop.f32.mrb[0].mxu0
      %v2173 = vadd.f32 0.0, %v2172
      %v2174 = vpop.f32.mrb[0].mxu0
      %2175 = vmatprep.mubr.bf16.mxu0 0
      %2176 = vmatmul.mubr.bf16.gmra.mrb[0].mxu0 %v580
      %v2177 = vpop.f32.mrb[0].mxu0
      %v2178 = vadd.f32 0.0, %v2177
      %v2179 = vpop.f32.mrb[0].mxu0
      %v2180 = vpop.f32.mrb[0].mxu0
      %v2181 = vadd.f32 0.0, %v2180
      %v2182 = vpop.f32.mrb[0].mxu0
      %2183 = vmatprep.mubr.bf16.mxu0 0
      %2184 = vmatmul.mubr.bf16.gmra.mrb[0].mxu0 %v581
      %v2185 = vpop.f32.mrb[0].mxu0
      %v2186 = vadd.f32 0.0, %v2185
      %v2187 = vpop.f32.mrb[0].mxu0
      %v2188 = vpop.f32.mrb[0].mxu0
      %v2189 = vadd.f32 0.0, %v2188
      %v2190 = vpop.f32.mrb[0].mxu0
      %2191 = vmatprep.mubr.bf16.mxu0 0
      %2192 = vmatmul.mubr.bf16.gmra.mrb[0].mxu0 %v582
      %v2193 = vpop.f32.mrb[0].mxu0
      %v2194 = vadd.f32 0.0, %v2193
      %v2195 = vpop.f32.mrb[0].mxu0
      %v2196 = vpop.f32.mrb[0].mxu0
      %v2197 = vadd.f32 0.0, %v2196
      %v2198 = vpop.f32.mrb[0].mxu0
      %2199 = vmatprep.mubr.bf16.mxu0 0
      %2200 = vmatmul.mubr.bf16.gmra.mrb[0].mxu0 %v583
      %v2201 = vpop.f32.mrb[0].mxu0
      %v2202 = vadd.f32 0.0, %v2201
      %v2203 = vpop.f32.mrb[0].mxu0
      %v2204 = vpop.f32.mrb[0].mxu0
      %v2205 = vadd.f32 0.0, %v2204
      %v2206 = vpop.f32.mrb[0].mxu0
      %2207 = vmatprep.mubr.bf16.mxu0 0
      %2208 = vmatmul.mubr.bf16.gmra.mrb[0].mxu0 %v584
      %v2209 = vpop.f32.mrb[0].mxu0
      %v2210 = vadd.f32 0.0, %v2209
      %v2211 = vpop.f32.mrb[0].mxu0
      %v2212 = vpop.f32.mrb[0].mxu0
      %v2213 = vadd.f32 0.0, %v2212
      %v2214 = vpop.f32.mrb[0].mxu0
      %2215 = vmatprep.mubr.bf16.mxu0 0
      %2216 = vmatmul.mubr.bf16.gmra.mrb[0].mxu0 %v585
      %v2217 = vpop.f32.mrb[0].mxu0
      %v2218 = vadd.f32 0.0, %v2217
      %v2219 = vpop.f32.mrb[0].mxu0
      %v2220 = vpop.f32.mrb[0].mxu0
      %v2221 = vadd.f32 0.0, %v2220
      %v2222 = vpop.f32.mrb[0].mxu0
      %2223 = vmatprep.mubr.bf16.mxu0 0
      %2224 = vmatmul.mubr.bf16.gmra.mrb[0].mxu0 %v586
      %v2225 = vpop.f32.mrb[0].mxu0
      %v2226 = vadd.f32 0.0, %v2225
      %v2227 = vpop.f32.mrb[0].mxu0
      %v2228 = vpop.f32.mrb[0].mxu0
      %v2229 = vadd.f32 0.0, %v2228
      %v2230 = vpop.f32.mrb[0].mxu0
      %2231 = vmatprep.mubr.bf16.mxu0 0
      %2232 = vmatmul.mubr.bf16.gmra.mrb[0].mxu0 %v587
      %v2233 = vpop.f32.mrb[0].mxu0
      %v2234 = vadd.f32 0.0, %v2233
      %v2235 = vpop.f32.mrb[0].mxu0
      %v2236 = vpop.f32.mrb[0].mxu0
      %v2237 = vadd.f32 0.0, %v2236
      %v2238 = vpop.f32.mrb[0].mxu0
      %2239 = vmatprep.mubr.bf16.mxu0 0
      %2240 = vmatmul.mubr.bf16.gmra.mrb[0].mxu0 %v588
      %v2241 = vpop.f32.mrb[0].mxu0
      %v2242 = vadd.f32 0.0, %v2241
      %v2243 = vpop.f32.mrb[0].mxu0
      %v2244 = vpop.f32.mrb[0].mxu0
      %v2245 = vadd.f32 0.0, %v2244
      %v2246 = vpop.f32.mrb[0].mxu0
      %2247 = vmatprep.mubr.bf16.mxu0 0
      %2248 = vmatmul.mubr.bf16.gmra.mrb[0].mxu0 %v589
      %v2249 = vpop.f32.mrb[0].mxu0
      %v2250 = vadd.f32 0.0, %v2249
      %v2251 = vpop.f32.mrb[0].mxu0
      %v2252 = vpop.f32.mrb[0].mxu0
      %v2253 = vadd.f32 0.0, %v2252
      %v2254 = vpop.f32.mrb[0].mxu0
      %2255 = vmatprep.mubr.bf16.mxu0 0
      %2256 = vmatmul.mubr.bf16.gmra.mrb[0].mxu0 %v590
      %v2257 = vpop.f32.mrb[0].mxu0
      %v2258 = vadd.f32 0.0, %v2257
      %v2259 = vpop.f32.mrb[0].mxu0
      %v2260 = vpop.f32.mrb[0].mxu0
      %v2261 = vadd.f32 0.0, %v2260
      %v2262 = vpop.f32.mrb[0].mxu0
      %2263 = vdwg.mxu0
      %v2280 = vunpack.c.l.b16 %v1892
      %v2281 = vunpack.c.l.b16 %v1893
      %v2282 = vunpack.c.l.b16 %v1894
      %v2283 = vunpack.c.l.b16 %v1895
      %v2284 = vunpack.c.l.b16 %v1896
      %v2285 = vunpack.c.l.b16 %v1897
      %v2286 = vunpack.c.l.b16 %v1898
      %v2287 = vunpack.c.l.b16 %v1899
      %v2288 = vunpack.c.l.b16 %v1900
      %v2289 = vunpack.c.l.b16 %v1901
      %v2290 = vunpack.c.l.b16 %v1902
      %v2291 = vunpack.c.l.b16 %v1903
      %v2292 = vunpack.c.l.b16 %v1904
      %v2293 = vunpack.c.l.b16 %v1905
      %v2294 = vunpack.c.l.b16 %v1906
      %v2295 = vunpack.c.l.b16 %v1907
      %v2296 = vpack.c.b16 %v2281, %v2280
      %v2297 = vpack.c.b16 %v2283, %v2282
      %v2298 = vpack.c.b16 %v2285, %v2284
      %v2299 = vpack.c.b16 %v2287, %v2286
      %v2300 = vpack.c.b16 %v2289, %v2288
      %v2301 = vpack.c.b16 %v2291, %v2290
      %v2302 = vpack.c.b16 %v2293, %v2292
      %v2303 = vpack.c.b16 %v2295, %v2294
      %2312 = vmatprep.subr.bf16.mxu0 0
      %2313 = vmatpush1.bf16.msra.mxu0 %v2296
      %2314 = vmatprep.subr.bf16.mxu0 0
      %2315 = vmatpush1.bf16.msra.mxu0 %v2297
      %2316 = vmatprep.subr.bf16.mxu0 0
      %2317 = vmatpush1.bf16.msra.mxu0 %v2298
      %2318 = vmatprep.subr.bf16.mxu0 0
      %2319 = vmatpush1.bf16.msra.mxu0 %v2299
      %2320 = vmatprep.subr.bf16.mxu0 0
      %2321 = vmatpush1.bf16.msra.mxu0 %v2300
      %2322 = vmatprep.subr.bf16.mxu0 0
      %2323 = vmatpush1.bf16.msra.mxu0 %v2301
      %2324 = vmatprep.subr.bf16.mxu0 0
      %2325 = vmatpush1.bf16.msra.mxu0 %v2302
      %2326 = vmatprep.subr.bf16.mxu0 0
      %2327 = vmatpush1.bf16.msra.mxu0 %v2303
      %2328 = vmatprep.subr.bf16.mxu0 0
      %2329 = vmatpush1.bf16.msra.mxu0 0
      %2330 = vmatprep.subr.bf16.mxu0 0
      %2331 = vmatpush1.bf16.msra.mxu0 0
      %2332 = vmatprep.subr.bf16.mxu0 0
      %2333 = vmatpush1.bf16.msra.mxu0 0
      %2334 = vmatprep.subr.bf16.mxu0 0
      %2335 = vmatpush1.bf16.msra.mxu0 0
      %2336 = vmatprep.subr.bf16.mxu0 0
      %2337 = vmatpush1.bf16.msra.mxu0 0
      %2338 = vmatprep.subr.bf16.mxu0 0
      %2339 = vmatpush1.bf16.msra.mxu0 0
      %2340 = vmatprep.subr.bf16.mxu0 0
      %2341 = vmatpush1.bf16.msra.mxu0 0
      %2342 = vmatprep.subr.bf16.mxu0 0
      %2343 = vmatpush1.bf16.msra.mxu0 0
      %2344 = vmatprep.mubr.bf16.mxu0 0
      %2345 = vmatmul.mubr.bf16.gmra.mrb[0].mxu0 %v524
      %v2346 = vpop.f32.mrb[0].mxu0
      %v2347 = vadd.f32 %v2010, %v2346
      %v2348 = vpop.f32.mrb[0].mxu0
      %v2349 = vpop.f32.mrb[0].mxu0
      %v2350 = vadd.f32 %v2013, %v2349
      %v2351 = vpop.f32.mrb[0].mxu0
      %2352 = vmatprep.mubr.bf16.mxu0 0
      %2353 = vmatmul.mubr.bf16.gmra.mrb[0].mxu0 %v525
      %v2354 = vpop.f32.mrb[0].mxu0
      %v2355 = vadd.f32 %v2018, %v2354
      %v2356 = vpop.f32.mrb[0].mxu0
      %v2357 = vpop.f32.mrb[0].mxu0
      %v2358 = vadd.f32 %v2021, %v2357
      %v2359 = vpop.f32.mrb[0].mxu0
      %2360 = vmatprep.mubr.bf16.mxu0 0
      %2361 = vmatmul.mubr.bf16.gmra.mrb[0].mxu0 %v526
      %v2362 = vpop.f32.mrb[0].mxu0
      %v2363 = vadd.f32 %v2026, %v2362
      %v2364 = vpop.f32.mrb[0].mxu0
      %v2365 = vpop.f32.mrb[0].mxu0
      %v2366 = vadd.f32 %v2029, %v2365
      %v2367 = vpop.f32.mrb[0].mxu0
      %2368 = vmatprep.mubr.bf16.mxu0 0
      %2369 = vmatmul.mubr.bf16.gmra.mrb[0].mxu0 %v527
      %v2370 = vpop.f32.mrb[0].mxu0
      %v2371 = vadd.f32 %v2034, %v2370
      %v2372 = vpop.f32.mrb[0].mxu0
      %v2373 = vpop.f32.mrb[0].mxu0
      %v2374 = vadd.f32 %v2037, %v2373
      %v2375 = vpop.f32.mrb[0].mxu0
      %2376 = vmatprep.mubr.bf16.mxu0 0
      %2377 = vmatmul.mubr.bf16.gmra.mrb[0].mxu0 %v528
      %v2378 = vpop.f32.mrb[0].mxu0
      %v2379 = vadd.f32 %v2042, %v2378
      %v2380 = vpop.f32.mrb[0].mxu0
      %v2381 = vpop.f32.mrb[0].mxu0
      %v2382 = vadd.f32 %v2045, %v2381
      %v2383 = vpop.f32.mrb[0].mxu0
      %2384 = vmatprep.mubr.bf16.mxu0 0
      %2385 = vmatmul.mubr.bf16.gmra.mrb[0].mxu0 %v529
      %v2386 = vpop.f32.mrb[0].mxu0
      %v2387 = vadd.f32 %v2050, %v2386
      %v2388 = vpop.f32.mrb[0].mxu0
      %v2389 = vpop.f32.mrb[0].mxu0
      %v2390 = vadd.f32 %v2053, %v2389
      %v2391 = vpop.f32.mrb[0].mxu0
      %2392 = vmatprep.mubr.bf16.mxu0 0
      %2393 = vmatmul.mubr.bf16.gmra.mrb[0].mxu0 %v530
      %v2394 = vpop.f32.mrb[0].mxu0
      %v2395 = vadd.f32 %v2058, %v2394
      %v2396 = vpop.f32.mrb[0].mxu0
      %v2397 = vpop.f32.mrb[0].mxu0
      %v2398 = vadd.f32 %v2061, %v2397
      %v2399 = vpop.f32.mrb[0].mxu0
      %2400 = vmatprep.mubr.bf16.mxu0 0
      %2401 = vmatmul.mubr.bf16.gmra.mrb[0].mxu0 %v531
      %v2402 = vpop.f32.mrb[0].mxu0
      %v2403 = vadd.f32 %v2066, %v2402
      %v2404 = vpop.f32.mrb[0].mxu0
      %v2405 = vpop.f32.mrb[0].mxu0
      %v2406 = vadd.f32 %v2069, %v2405
      %v2407 = vpop.f32.mrb[0].mxu0
      %2408 = vmatprep.mubr.bf16.mxu0 0
      %2409 = vmatmul.mubr.bf16.gmra.mrb[0].mxu0 %v532
      %v2410 = vpop.f32.mrb[0].mxu0
      %v2411 = vadd.f32 %v2074, %v2410
      %v2412 = vpop.f32.mrb[0].mxu0
      %v2413 = vpop.f32.mrb[0].mxu0
      %v2414 = vadd.f32 %v2077, %v2413
      %v2415 = vpop.f32.mrb[0].mxu0
      %2416 = vmatprep.mubr.bf16.mxu0 0
      %2417 = vmatmul.mubr.bf16.gmra.mrb[0].mxu0 %v533
      %v2418 = vpop.f32.mrb[0].mxu0
      %v2419 = vadd.f32 %v2082, %v2418
      %v2420 = vpop.f32.mrb[0].mxu0
      %v2421 = vpop.f32.mrb[0].mxu0
      %v2422 = vadd.f32 %v2085, %v2421
      %v2423 = vpop.f32.mrb[0].mxu0
      %2424 = vmatprep.mubr.bf16.mxu0 0
      %2425 = vmatmul.mubr.bf16.gmra.mrb[0].mxu0 %v534
      %v2426 = vpop.f32.mrb[0].mxu0
      %v2427 = vadd.f32 %v2090, %v2426
      %v2428 = vpop.f32.mrb[0].mxu0
      %v2429 = vpop.f32.mrb[0].mxu0
      %v2430 = vadd.f32 %v2093, %v2429
      %v2431 = vpop.f32.mrb[0].mxu0
      %2432 = vmatprep.mubr.bf16.mxu0 0
      %2433 = vmatmul.mubr.bf16.gmra.mrb[0].mxu0 %v535
      %v2434 = vpop.f32.mrb[0].mxu0
      %v2435 = vadd.f32 %v2098, %v2434
      %v2436 = vpop.f32.mrb[0].mxu0
      %v2437 = vpop.f32.mrb[0].mxu0
      %v2438 = vadd.f32 %v2101, %v2437
      %v2439 = vpop.f32.mrb[0].mxu0
      %2440 = vmatprep.mubr.bf16.mxu0 0
      %2441 = vmatmul.mubr.bf16.gmra.mrb[0].mxu0 %v536
      %v2442 = vpop.f32.mrb[0].mxu0
      %v2443 = vadd.f32 %v2106, %v2442
      %v2444 = vpop.f32.mrb[0].mxu0
      %v2445 = vpop.f32.mrb[0].mxu0
      %v2446 = vadd.f32 %v2109, %v2445
      %v2447 = vpop.f32.mrb[0].mxu0
      %2448 = vmatprep.mubr.bf16.mxu0 0
      %2449 = vmatmul.mubr.bf16.gmra.mrb[0].mxu0 %v537
      %v2450 = vpop.f32.mrb[0].mxu0
      %v2451 = vadd.f32 %v2114, %v2450
      %v2452 = vpop.f32.mrb[0].mxu0
      %v2453 = vpop.f32.mrb[0].mxu0
      %v2454 = vadd.f32 %v2117, %v2453
      %v2455 = vpop.f32.mrb[0].mxu0
      %2456 = vmatprep.mubr.bf16.mxu0 0
      %2457 = vmatmul.mubr.bf16.gmra.mrb[0].mxu0 %v538
      %v2458 = vpop.f32.mrb[0].mxu0
      %v2459 = vadd.f32 %v2122, %v2458
      %v2460 = vpop.f32.mrb[0].mxu0
      %v2461 = vpop.f32.mrb[0].mxu0
      %v2462 = vadd.f32 %v2125, %v2461
      %v2463 = vpop.f32.mrb[0].mxu0
      %2464 = vmatprep.mubr.bf16.mxu0 0
      %2465 = vmatmul.mubr.bf16.gmra.mrb[0].mxu0 %v539
      %v2466 = vpop.f32.mrb[0].mxu0
      %v2467 = vadd.f32 %v2130, %v2466
      %v2468 = vpop.f32.mrb[0].mxu0
      %v2469 = vpop.f32.mrb[0].mxu0
      %v2470 = vadd.f32 %v2133, %v2469
      %v2471 = vpop.f32.mrb[0].mxu0
      %2472 = vmatprep.mubr.bf16.mxu0 0
      %2473 = vmatmul.mubr.bf16.gmra.mrb[0].mxu0 %v540
      %v2474 = vpop.f32.mrb[0].mxu0
      %v2475 = vadd.f32 %v2138, %v2474
      %v2476 = vpop.f32.mrb[0].mxu0
      %v2477 = vpop.f32.mrb[0].mxu0
      %v2478 = vadd.f32 %v2141, %v2477
      %v2479 = vpop.f32.mrb[0].mxu0
      %2480 = vmatprep.mubr.bf16.mxu0 0
      %2481 = vmatmul.mubr.bf16.gmra.mrb[0].mxu0 %v541
      %v2482 = vpop.f32.mrb[0].mxu0
      %v2483 = vadd.f32 %v2146, %v2482
      %v2484 = vpop.f32.mrb[0].mxu0
      %v2485 = vpop.f32.mrb[0].mxu0
      %v2486 = vadd.f32 %v2149, %v2485
      %v2487 = vpop.f32.mrb[0].mxu0
      %2488 = vmatprep.mubr.bf16.mxu0 0
      %2489 = vmatmul.mubr.bf16.gmra.mrb[0].mxu0 %v542
      %v2490 = vpop.f32.mrb[0].mxu0
      %v2491 = vadd.f32 %v2154, %v2490
      %v2492 = vpop.f32.mrb[0].mxu0
      %v2493 = vpop.f32.mrb[0].mxu0
      %v2494 = vadd.f32 %v2157, %v2493
      %v2495 = vpop.f32.mrb[0].mxu0
      %2496 = vmatprep.mubr.bf16.mxu0 0
      %2497 = vmatmul.mubr.bf16.gmra.mrb[0].mxu0 %v543
      %v2498 = vpop.f32.mrb[0].mxu0
      %v2499 = vadd.f32 %v2162, %v2498
      %v2500 = vpop.f32.mrb[0].mxu0
      %v2501 = vpop.f32.mrb[0].mxu0
      %v2502 = vadd.f32 %v2165, %v2501
      %v2503 = vpop.f32.mrb[0].mxu0
      %2504 = vmatprep.mubr.bf16.mxu0 0
      %2505 = vmatmul.mubr.bf16.gmra.mrb[0].mxu0 %v544
      %v2506 = vpop.f32.mrb[0].mxu0
      %v2507 = vadd.f32 %v2170, %v2506
      %v2508 = vpop.f32.mrb[0].mxu0
      %v2509 = vpop.f32.mrb[0].mxu0
      %v2510 = vadd.f32 %v2173, %v2509
      %v2511 = vpop.f32.mrb[0].mxu0
      %2512 = vmatprep.mubr.bf16.mxu0 0
      %2513 = vmatmul.mubr.bf16.gmra.mrb[0].mxu0 %v545
      %v2514 = vpop.f32.mrb[0].mxu0
      %v2515 = vadd.f32 %v2178, %v2514
      %v2516 = vpop.f32.mrb[0].mxu0
      %v2517 = vpop.f32.mrb[0].mxu0
      %v2518 = vadd.f32 %v2181, %v2517
      %v2519 = vpop.f32.mrb[0].mxu0
      %2520 = vmatprep.mubr.bf16.mxu0 0
      %2521 = vmatmul.mubr.bf16.gmra.mrb[0].mxu0 %v546
      %v2522 = vpop.f32.mrb[0].mxu0
      %v2523 = vadd.f32 %v2186, %v2522
      %v2524 = vpop.f32.mrb[0].mxu0
      %v2525 = vpop.f32.mrb[0].mxu0
      %v2526 = vadd.f32 %v2189, %v2525
      %v2527 = vpop.f32.mrb[0].mxu0
      %2528 = vmatprep.mubr.bf16.mxu0 0
      %2529 = vmatmul.mubr.bf16.gmra.mrb[0].mxu0 %v547
      %v2530 = vpop.f32.mrb[0].mxu0
      %v2531 = vadd.f32 %v2194, %v2530
      %v2532 = vpop.f32.mrb[0].mxu0
      %v2533 = vpop.f32.mrb[0].mxu0
      %v2534 = vadd.f32 %v2197, %v2533
      %v2535 = vpop.f32.mrb[0].mxu0
      %2536 = vmatprep.mubr.bf16.mxu0 0
      %2537 = vmatmul.mubr.bf16.gmra.mrb[0].mxu0 %v548
      %v2538 = vpop.f32.mrb[0].mxu0
      %v2539 = vadd.f32 %v2202, %v2538
      %v2540 = vpop.f32.mrb[0].mxu0
      %v2541 = vpop.f32.mrb[0].mxu0
      %v2542 = vadd.f32 %v2205, %v2541
      %v2543 = vpop.f32.mrb[0].mxu0
      %2544 = vmatprep.mubr.bf16.mxu0 0
      %2545 = vmatmul.mubr.bf16.gmra.mrb[0].mxu0 %v549
      %v2546 = vpop.f32.mrb[0].mxu0
      %v2547 = vadd.f32 %v2210, %v2546
      %v2548 = vpop.f32.mrb[0].mxu0
      %v2549 = vpop.f32.mrb[0].mxu0
      %v2550 = vadd.f32 %v2213, %v2549
      %v2551 = vpop.f32.mrb[0].mxu0
      %2552 = vmatprep.mubr.bf16.mxu0 0
      %2553 = vmatmul.mubr.bf16.gmra.mrb[0].mxu0 %v550
      %v2554 = vpop.f32.mrb[0].mxu0
      %v2555 = vadd.f32 %v2218, %v2554
      %v2556 = vpop.f32.mrb[0].mxu0
      %v2557 = vpop.f32.mrb[0].mxu0
      %v2558 = vadd.f32 %v2221, %v2557
      %v2559 = vpop.f32.mrb[0].mxu0
      %2560 = vmatprep.mubr.bf16.mxu0 0
      %2561 = vmatmul.mubr.bf16.gmra.mrb[0].mxu0 %v551
      %v2562 = vpop.f32.mrb[0].mxu0
      %v2563 = vadd.f32 %v2226, %v2562
      %v2564 = vpop.f32.mrb[0].mxu0
      %v2565 = vpop.f32.mrb[0].mxu0
      %v2566 = vadd.f32 %v2229, %v2565
      %v2567 = vpop.f32.mrb[0].mxu0
      %2568 = vmatprep.mubr.bf16.mxu0 0
      %2569 = vmatmul.mubr.bf16.gmra.mrb[0].mxu0 %v552
      %v2570 = vpop.f32.mrb[0].mxu0
      %v2571 = vadd.f32 %v2234, %v2570
      %v2572 = vpop.f32.mrb[0].mxu0
      %v2573 = vpop.f32.mrb[0].mxu0
      %v2574 = vadd.f32 %v2237, %v2573
      %v2575 = vpop.f32.mrb[0].mxu0
      %2576 = vmatprep.mubr.bf16.mxu0 0
      %2577 = vmatmul.mubr.bf16.gmra.mrb[0].mxu0 %v553
      %v2578 = vpop.f32.mrb[0].mxu0
      %v2579 = vadd.f32 %v2242, %v2578
      %v2580 = vpop.f32.mrb[0].mxu0
      %v2581 = vpop.f32.mrb[0].mxu0
      %v2582 = vadd.f32 %v2245, %v2581
      %v2583 = vpop.f32.mrb[0].mxu0
      %2584 = vmatprep.mubr.bf16.mxu0 0
      %2585 = vmatmul.mubr.bf16.gmra.mrb[0].mxu0 %v554
      %v2586 = vpop.f32.mrb[0].mxu0
      %v2587 = vadd.f32 %v2250, %v2586
      %v2588 = vpop.f32.mrb[0].mxu0
      %v2589 = vpop.f32.mrb[0].mxu0
      %v2590 = vadd.f32 %v2253, %v2589
      %v2591 = vpop.f32.mrb[0].mxu0
      %2592 = vmatprep.mubr.bf16.mxu0 0
      %2593 = vmatmul.mubr.bf16.gmra.mrb[0].mxu0 %v555
      %v2594 = vpop.f32.mrb[0].mxu0
      %v2595 = vadd.f32 %v2258, %v2594
      %v2596 = vpop.f32.mrb[0].mxu0
      %v2597 = vpop.f32.mrb[0].mxu0
      %v2598 = vadd.f32 %v2261, %v2597
      %v2599 = vpop.f32.mrb[0].mxu0
      %2600 = vdwg.mxu0
      %s2601 = sadd.s32 112, %s626
      %s2602 = smul.addr %s2601, 4
      %s2603 = scalar_lea.vmem %s1, %s2602
      %v2604 = vld [vmem:[%s2603] sm:$0xf]
      %v2605 = vld [vmem:[%s2603 + $0x4] sm:$0xf]
      %v2606 = vld [vmem:[%s2603 + $0x8] sm:$0xf]
      %v2607 = vld [vmem:[%s2603 + $0xc] sm:$0xf]
      %v2608 = vld [vmem:[%s2603 + $0x10] sm:$0xf]
      %v2609 = vld [vmem:[%s2603 + $0x14] sm:$0xf]
      %v2610 = vld [vmem:[%s2603 + $0x18] sm:$0xf]
      %v2611 = vld [vmem:[%s2603 + $0x1c] sm:$0xf]
      %v2612 = vld [vmem:[%s2603 + $0x20] sm:$0xf]
      %v2613 = vld [vmem:[%s2603 + $0x24] sm:$0xf]
      %v2614 = vld [vmem:[%s2603 + $0x28] sm:$0xf]
      %v2615 = vld [vmem:[%s2603 + $0x2c] sm:$0xf]
      %v2616 = vld [vmem:[%s2603 + $0x30] sm:$0xf]
      %v2617 = vld [vmem:[%s2603 + $0x34] sm:$0xf]
      %v2618 = vld [vmem:[%s2603 + $0x38] sm:$0xf]
      %v2619 = vld [vmem:[%s2603 + $0x3c] sm:$0xf]
      %v2636 = vunpack.c.l.b16 %v2604
      %v2637 = vunpack.c.l.b16 %v2605
      %v2638 = vunpack.c.l.b16 %v2606
      %v2639 = vunpack.c.l.b16 %v2607
      %v2640 = vunpack.c.l.b16 %v2608
      %v2641 = vunpack.c.l.b16 %v2609
      %v2642 = vunpack.c.l.b16 %v2610
      %v2643 = vunpack.c.l.b16 %v2611
      %v2644 = vunpack.c.l.b16 %v2612
      %v2645 = vunpack.c.l.b16 %v2613
      %v2646 = vunpack.c.l.b16 %v2614
      %v2647 = vunpack.c.l.b16 %v2615
      %v2648 = vunpack.c.l.b16 %v2616
      %v2649 = vunpack.c.l.b16 %v2617
      %v2650 = vunpack.c.l.b16 %v2618
      %v2651 = vunpack.c.l.b16 %v2619
      %v2652 = vpack.c.b16 %v2637, %v2636
      %v2653 = vpack.c.b16 %v2639, %v2638
      %v2654 = vpack.c.b16 %v2641, %v2640
      %v2655 = vpack.c.b16 %v2643, %v2642
      %v2656 = vpack.c.b16 %v2645, %v2644
      %v2657 = vpack.c.b16 %v2647, %v2646
      %v2658 = vpack.c.b16 %v2649, %v2648
      %v2659 = vpack.c.b16 %v2651, %v2650
      %2668 = vmatprep.subr.bf16.mxu0 0
      %2669 = vmatpush1.bf16.msra.mxu0 %v2652
      %2670 = vmatprep.subr.bf16.mxu0 0
      %2671 = vmatpush1.bf16.msra.mxu0 %v2653
      %2672 = vmatprep.subr.bf16.mxu0 0
      %2673 = vmatpush1.bf16.msra.mxu0 %v2654
      %2674 = vmatprep.subr.bf16.mxu0 0
      %2675 = vmatpush1.bf16.msra.mxu0 %v2655
      %2676 = vmatprep.subr.bf16.mxu0 0
      %2677 = vmatpush1.bf16.msra.mxu0 %v2656
      %2678 = vmatprep.subr.bf16.mxu0 0
      %2679 = vmatpush1.bf16.msra.mxu0 %v2657
      %2680 = vmatprep.subr.bf16.mxu0 0
      %2681 = vmatpush1.bf16.msra.mxu0 %v2658
      %2682 = vmatprep.subr.bf16.mxu0 0
      %2683 = vmatpush1.bf16.msra.mxu0 %v2659
      %2684 = vmatprep.subr.bf16.mxu0 0
      %2685 = vmatpush1.bf16.msra.mxu0 0
      %2686 = vmatprep.subr.bf16.mxu0 0
      %2687 = vmatpush1.bf16.msra.mxu0 0
      %2688 = vmatprep.subr.bf16.mxu0 0
      %2689 = vmatpush1.bf16.msra.mxu0 0
      %2690 = vmatprep.subr.bf16.mxu0 0
      %2691 = vmatpush1.bf16.msra.mxu0 0
      %2692 = vmatprep.subr.bf16.mxu0 0
      %2693 = vmatpush1.bf16.msra.mxu0 0
      %2694 = vmatprep.subr.bf16.mxu0 0
      %2695 = vmatpush1.bf16.msra.mxu0 0
      %2696 = vmatprep.subr.bf16.mxu0 0
      %2697 = vmatpush1.bf16.msra.mxu0 0
      %2698 = vmatprep.subr.bf16.mxu0 0
      %2699 = vmatpush1.bf16.msra.mxu0 0
      %2700 = vmatprep.mubr.bf16.mxu0 0
      %2701 = vmatmul.mubr.bf16.gmra.mrb[0].mxu0 %v594
      %v2702 = vpop.f32.mrb[0].mxu0
      %v2703 = vadd.f32 0.0, %v2702
      %v2704 = vpop.f32.mrb[0].mxu0
      %v2705 = vpop.f32.mrb[0].mxu0
      %v2706 = vadd.f32 0.0, %v2705
      %v2707 = vpop.f32.mrb[0].mxu0
      %2708 = vmatprep.mubr.bf16.mxu0 0
      %2709 = vmatmul.mubr.bf16.gmra.mrb[0].mxu0 %v595
      %v2710 = vpop.f32.mrb[0].mxu0
      %v2711 = vadd.f32 0.0, %v2710
      %v2712 = vpop.f32.mrb[0].mxu0
      %v2713 = vpop.f32.mrb[0].mxu0
      %v2714 = vadd.f32 0.0, %v2713
      %v2715 = vpop.f32.mrb[0].mxu0
      %2716 = vmatprep.mubr.bf16.mxu0 0
      %2717 = vmatmul.mubr.bf16.gmra.mrb[0].mxu0 %v596
      %v2718 = vpop.f32.mrb[0].mxu0
      %v2719 = vadd.f32 0.0, %v2718
      %v2720 = vpop.f32.mrb[0].mxu0
      %v2721 = vpop.f32.mrb[0].mxu0
      %v2722 = vadd.f32 0.0, %v2721
      %v2723 = vpop.f32.mrb[0].mxu0
      %2724 = vmatprep.mubr.bf16.mxu0 0
      %2725 = vmatmul.mubr.bf16.gmra.mrb[0].mxu0 %v597
      %v2726 = vpop.f32.mrb[0].mxu0
      %v2727 = vadd.f32 0.0, %v2726
      %v2728 = vpop.f32.mrb[0].mxu0
      %v2729 = vpop.f32.mrb[0].mxu0
      %v2730 = vadd.f32 0.0, %v2729
      %v2731 = vpop.f32.mrb[0].mxu0
      %2732 = vmatprep.mubr.bf16.mxu0 0
      %2733 = vmatmul.mubr.bf16.gmra.mrb[0].mxu0 %v598
      %v2734 = vpop.f32.mrb[0].mxu0
      %v2735 = vadd.f32 0.0, %v2734
      %v2736 = vpop.f32.mrb[0].mxu0
      %v2737 = vpop.f32.mrb[0].mxu0
      %v2738 = vadd.f32 0.0, %v2737
      %v2739 = vpop.f32.mrb[0].mxu0
      %2740 = vmatprep.mubr.bf16.mxu0 0
      %2741 = vmatmul.mubr.bf16.gmra.mrb[0].mxu0 %v599
      %v2742 = vpop.f32.mrb[0].mxu0
      %v2743 = vadd.f32 0.0, %v2742
      %v2744 = vpop.f32.mrb[0].mxu0
      %v2745 = vpop.f32.mrb[0].mxu0
      %v2746 = vadd.f32 0.0, %v2745
      %v2747 = vpop.f32.mrb[0].mxu0
      %2748 = vmatprep.mubr.bf16.mxu0 0
      %2749 = vmatmul.mubr.bf16.gmra.mrb[0].mxu0 %v600
      %v2750 = vpop.f32.mrb[0].mxu0
      %v2751 = vadd.f32 0.0, %v2750
      %v2752 = vpop.f32.mrb[0].mxu0
      %v2753 = vpop.f32.mrb[0].mxu0
      %v2754 = vadd.f32 0.0, %v2753
      %v2755 = vpop.f32.mrb[0].mxu0
      %2756 = vmatprep.mubr.bf16.mxu0 0
      %2757 = vmatmul.mubr.bf16.gmra.mrb[0].mxu0 %v601
      %v2758 = vpop.f32.mrb[0].mxu0
      %v2759 = vadd.f32 0.0, %v2758
      %v2760 = vpop.f32.mrb[0].mxu0
      %v2761 = vpop.f32.mrb[0].mxu0
      %v2762 = vadd.f32 0.0, %v2761
      %v2763 = vpop.f32.mrb[0].mxu0
      %2764 = vmatprep.mubr.bf16.mxu0 0
      %2765 = vmatmul.mubr.bf16.gmra.mrb[0].mxu0 %v602
      %v2766 = vpop.f32.mrb[0].mxu0
      %v2767 = vadd.f32 0.0, %v2766
      %v2768 = vpop.f32.mrb[0].mxu0
      %v2769 = vpop.f32.mrb[0].mxu0
      %v2770 = vadd.f32 0.0, %v2769
      %v2771 = vpop.f32.mrb[0].mxu0
      %2772 = vmatprep.mubr.bf16.mxu0 0
      %2773 = vmatmul.mubr.bf16.gmra.mrb[0].mxu0 %v603
      %v2774 = vpop.f32.mrb[0].mxu0
      %v2775 = vadd.f32 0.0, %v2774
      %v2776 = vpop.f32.mrb[0].mxu0
      %v2777 = vpop.f32.mrb[0].mxu0
      %v2778 = vadd.f32 0.0, %v2777
      %v2779 = vpop.f32.mrb[0].mxu0
      %2780 = vmatprep.mubr.bf16.mxu0 0
      %2781 = vmatmul.mubr.bf16.gmra.mrb[0].mxu0 %v604
      %v2782 = vpop.f32.mrb[0].mxu0
      %v2783 = vadd.f32 0.0, %v2782
      %v2784 = vpop.f32.mrb[0].mxu0
      %v2785 = vpop.f32.mrb[0].mxu0
      %v2786 = vadd.f32 0.0, %v2785
      %v2787 = vpop.f32.mrb[0].mxu0
      %2788 = vmatprep.mubr.bf16.mxu0 0
      %2789 = vmatmul.mubr.bf16.gmra.mrb[0].mxu0 %v605
      %v2790 = vpop.f32.mrb[0].mxu0
      %v2791 = vadd.f32 0.0, %v2790
      %v2792 = vpop.f32.mrb[0].mxu0
      %v2793 = vpop.f32.mrb[0].mxu0
      %v2794 = vadd.f32 0.0, %v2793
      %v2795 = vpop.f32.mrb[0].mxu0
      %2796 = vmatprep.mubr.bf16.mxu0 0
      %2797 = vmatmul.mubr.bf16.gmra.mrb[0].mxu0 %v606
      %v2798 = vpop.f32.mrb[0].mxu0
      %v2799 = vadd.f32 0.0, %v2798
      %v2800 = vpop.f32.mrb[0].mxu0
      %v2801 = vpop.f32.mrb[0].mxu0
      %v2802 = vadd.f32 0.0, %v2801
      %v2803 = vpop.f32.mrb[0].mxu0
      %2804 = vmatprep.mubr.bf16.mxu0 0
      %2805 = vmatmul.mubr.bf16.gmra.mrb[0].mxu0 %v607
      %v2806 = vpop.f32.mrb[0].mxu0
      %v2807 = vadd.f32 0.0, %v2806
      %v2808 = vpop.f32.mrb[0].mxu0
      %v2809 = vpop.f32.mrb[0].mxu0
      %v2810 = vadd.f32 0.0, %v2809
      %v2811 = vpop.f32.mrb[0].mxu0
      %2812 = vmatprep.mubr.bf16.mxu0 0
      %2813 = vmatmul.mubr.bf16.gmra.mrb[0].mxu0 %v608
      %v2814 = vpop.f32.mrb[0].mxu0
      %v2815 = vadd.f32 0.0, %v2814
      %v2816 = vpop.f32.mrb[0].mxu0
      %v2817 = vpop.f32.mrb[0].mxu0
      %v2818 = vadd.f32 0.0, %v2817
      %v2819 = vpop.f32.mrb[0].mxu0
      %2820 = vmatprep.mubr.bf16.mxu0 0
      %2821 = vmatmul.mubr.bf16.gmra.mrb[0].mxu0 %v609
      %v2822 = vpop.f32.mrb[0].mxu0
      %v2823 = vadd.f32 0.0, %v2822
      %v2824 = vpop.f32.mrb[0].mxu0
      %v2825 = vpop.f32.mrb[0].mxu0
      %v2826 = vadd.f32 0.0, %v2825
      %v2827 = vpop.f32.mrb[0].mxu0
      %2828 = vmatprep.mubr.bf16.mxu0 0
      %2829 = vmatmul.mubr.bf16.gmra.mrb[0].mxu0 %v610
      %v2830 = vpop.f32.mrb[0].mxu0
      %v2831 = vadd.f32 0.0, %v2830
      %v2832 = vpop.f32.mrb[0].mxu0
      %v2833 = vpop.f32.mrb[0].mxu0
      %v2834 = vadd.f32 0.0, %v2833
      %v2835 = vpop.f32.mrb[0].mxu0
      %2836 = vmatprep.mubr.bf16.mxu0 0
      %2837 = vmatmul.mubr.bf16.gmra.mrb[0].mxu0 %v611
      %v2838 = vpop.f32.mrb[0].mxu0
      %v2839 = vadd.f32 0.0, %v2838
      %v2840 = vpop.f32.mrb[0].mxu0
      %v2841 = vpop.f32.mrb[0].mxu0
      %v2842 = vadd.f32 0.0, %v2841
      %v2843 = vpop.f32.mrb[0].mxu0
      %2844 = vmatprep.mubr.bf16.mxu0 0
      %2845 = vmatmul.mubr.bf16.gmra.mrb[0].mxu0 %v612
      %v2846 = vpop.f32.mrb[0].mxu0
      %v2847 = vadd.f32 0.0, %v2846
      %v2848 = vpop.f32.mrb[0].mxu0
      %v2849 = vpop.f32.mrb[0].mxu0
      %v2850 = vadd.f32 0.0, %v2849
      %v2851 = vpop.f32.mrb[0].mxu0
      %2852 = vmatprep.mubr.bf16.mxu0 0
      %2853 = vmatmul.mubr.bf16.gmra.mrb[0].mxu0 %v613
      %v2854 = vpop.f32.mrb[0].mxu0
      %v2855 = vadd.f32 0.0, %v2854
      %v2856 = vpop.f32.mrb[0].mxu0
      %v2857 = vpop.f32.mrb[0].mxu0
      %v2858 = vadd.f32 0.0, %v2857
      %v2859 = vpop.f32.mrb[0].mxu0
      %2860 = vmatprep.mubr.bf16.mxu0 0
      %2861 = vmatmul.mubr.bf16.gmra.mrb[0].mxu0 %v614
      %v2862 = vpop.f32.mrb[0].mxu0
      %v2863 = vadd.f32 0.0, %v2862
      %v2864 = vpop.f32.mrb[0].mxu0
      %v2865 = vpop.f32.mrb[0].mxu0
      %v2866 = vadd.f32 0.0, %v2865
      %v2867 = vpop.f32.mrb[0].mxu0
      %2868 = vmatprep.mubr.bf16.mxu0 0
      %2869 = vmatmul.mubr.bf16.gmra.mrb[0].mxu0 %v615
      %v2870 = vpop.f32.mrb[0].mxu0
      %v2871 = vadd.f32 0.0, %v2870
      %v2872 = vpop.f32.mrb[0].mxu0
      %v2873 = vpop.f32.mrb[0].mxu0
      %v2874 = vadd.f32 0.0, %v2873
      %v2875 = vpop.f32.mrb[0].mxu0
      %2876 = vmatprep.mubr.bf16.mxu0 0
      %2877 = vmatmul.mubr.bf16.gmra.mrb[0].mxu0 %v616
      %v2878 = vpop.f32.mrb[0].mxu0
      %v2879 = vadd.f32 0.0, %v2878
      %v2880 = vpop.f32.mrb[0].mxu0
      %v2881 = vpop.f32.mrb[0].mxu0
      %v2882 = vadd.f32 0.0, %v2881
      %v2883 = vpop.f32.mrb[0].mxu0
      %2884 = vmatprep.mubr.bf16.mxu0 0
      %2885 = vmatmul.mubr.bf16.gmra.mrb[0].mxu0 %v617
      %v2886 = vpop.f32.mrb[0].mxu0
      %v2887 = vadd.f32 0.0, %v2886
      %v2888 = vpop.f32.mrb[0].mxu0
      %v2889 = vpop.f32.mrb[0].mxu0
      %v2890 = vadd.f32 0.0, %v2889
      %v2891 = vpop.f32.mrb[0].mxu0
      %2892 = vmatprep.mubr.bf16.mxu0 0
      %2893 = vmatmul.mubr.bf16.gmra.mrb[0].mxu0 %v618
      %v2894 = vpop.f32.mrb[0].mxu0
      %v2895 = vadd.f32 0.0, %v2894
      %v2896 = vpop.f32.mrb[0].mxu0
      %v2897 = vpop.f32.mrb[0].mxu0
      %v2898 = vadd.f32 0.0, %v2897
      %v2899 = vpop.f32.mrb[0].mxu0
      %2900 = vmatprep.mubr.bf16.mxu0 0
      %2901 = vmatmul.mubr.bf16.gmra.mrb[0].mxu0 %v619
      %v2902 = vpop.f32.mrb[0].mxu0
      %v2903 = vadd.f32 0.0, %v2902
      %v2904 = vpop.f32.mrb[0].mxu0
      %v2905 = vpop.f32.mrb[0].mxu0
      %v2906 = vadd.f32 0.0, %v2905
      %v2907 = vpop.f32.mrb[0].mxu0
      %2908 = vmatprep.mubr.bf16.mxu0 0
      %2909 = vmatmul.mubr.bf16.gmra.mrb[0].mxu0 %v620
      %v2910 = vpop.f32.mrb[0].mxu0
      %v2911 = vadd.f32 0.0, %v2910
      %v2912 = vpop.f32.mrb[0].mxu0
      %v2913 = vpop.f32.mrb[0].mxu0
      %v2914 = vadd.f32 0.0, %v2913
      %v2915 = vpop.f32.mrb[0].mxu0
      %2916 = vmatprep.mubr.bf16.mxu0 0
      %2917 = vmatmul.mubr.bf16.gmra.mrb[0].mxu0 %v621
      %v2918 = vpop.f32.mrb[0].mxu0
      %v2919 = vadd.f32 0.0, %v2918
      %v2920 = vpop.f32.mrb[0].mxu0
      %v2921 = vpop.f32.mrb[0].mxu0
      %v2922 = vadd.f32 0.0, %v2921
      %v2923 = vpop.f32.mrb[0].mxu0
      %2924 = vmatprep.mubr.bf16.mxu0 0
      %2925 = vmatmul.mubr.bf16.gmra.mrb[0].mxu0 %v622
      %v2926 = vpop.f32.mrb[0].mxu0
      %v2927 = vadd.f32 0.0, %v2926
      %v2928 = vpop.f32.mrb[0].mxu0
      %v2929 = vpop.f32.mrb[0].mxu0
      %v2930 = vadd.f32 0.0, %v2929
      %v2931 = vpop.f32.mrb[0].mxu0
      %2932 = vmatprep.mubr.bf16.mxu0 0
      %2933 = vmatmul.mubr.bf16.gmra.mrb[0].mxu0 %v623
      %v2934 = vpop.f32.mrb[0].mxu0
      %v2935 = vadd.f32 0.0, %v2934
      %v2936 = vpop.f32.mrb[0].mxu0
      %v2937 = vpop.f32.mrb[0].mxu0
      %v2938 = vadd.f32 0.0, %v2937
      %v2939 = vpop.f32.mrb[0].mxu0
      %2940 = vmatprep.mubr.bf16.mxu0 0
      %2941 = vmatmul.mubr.bf16.gmra.mrb[0].mxu0 %v624
      %v2942 = vpop.f32.mrb[0].mxu0
      %v2943 = vadd.f32 0.0, %v2942
      %v2944 = vpop.f32.mrb[0].mxu0
      %v2945 = vpop.f32.mrb[0].mxu0
      %v2946 = vadd.f32 0.0, %v2945
      %v2947 = vpop.f32.mrb[0].mxu0
      %2948 = vmatprep.mubr.bf16.mxu0 0
      %2949 = vmatmul.mubr.bf16.gmra.mrb[0].mxu0 %v625
      %v2950 = vpop.f32.mrb[0].mxu0
      %v2951 = vadd.f32 0.0, %v2950
      %v2952 = vpop.f32.mrb[0].mxu0
      %v2953 = vpop.f32.mrb[0].mxu0
      %v2954 = vadd.f32 0.0, %v2953
      %v2955 = vpop.f32.mrb[0].mxu0
      %2956 = vdwg.mxu0
      %v2957 = vadd.f32 %v2347, %v2703
      %v2958 = vadd.f32 %v2350, %v2706
      %v2959 = vadd.f32 %v2355, %v2711
      %v2960 = vadd.f32 %v2358, %v2714
      %v2961 = vadd.f32 %v2363, %v2719
      %v2962 = vadd.f32 %v2366, %v2722
      %v2963 = vadd.f32 %v2371, %v2727
      %v2964 = vadd.f32 %v2374, %v2730
      %v2965 = vadd.f32 %v2379, %v2735
      %v2966 = vadd.f32 %v2382, %v2738
      %v2967 = vadd.f32 %v2387, %v2743
      %v2968 = vadd.f32 %v2390, %v2746
      %v2969 = vadd.f32 %v2395, %v2751
      %v2970 = vadd.f32 %v2398, %v2754
      %v2971 = vadd.f32 %v2403, %v2759
      %v2972 = vadd.f32 %v2406, %v2762
      %v2973 = vadd.f32 %v2411, %v2767
      %v2974 = vadd.f32 %v2414, %v2770
      %v2975 = vadd.f32 %v2419, %v2775
      %v2976 = vadd.f32 %v2422, %v2778
      %v2977 = vadd.f32 %v2427, %v2783
      %v2978 = vadd.f32 %v2430, %v2786
      %v2979 = vadd.f32 %v2435, %v2791
      %v2980 = vadd.f32 %v2438, %v2794
      %v2981 = vadd.f32 %v2443, %v2799
      %v2982 = vadd.f32 %v2446, %v2802
      %v2983 = vadd.f32 %v2451, %v2807
      %v2984 = vadd.f32 %v2454, %v2810
      %v2985 = vadd.f32 %v2459, %v2815
      %v2986 = vadd.f32 %v2462, %v2818
      %v2987 = vadd.f32 %v2467, %v2823
      %v2988 = vadd.f32 %v2470, %v2826
      %v2989 = vadd.f32 %v2475, %v2831
      %v2990 = vadd.f32 %v2478, %v2834
      %v2991 = vadd.f32 %v2483, %v2839
      %v2992 = vadd.f32 %v2486, %v2842
      %v2993 = vadd.f32 %v2491, %v2847
      %v2994 = vadd.f32 %v2494, %v2850
      %v2995 = vadd.f32 %v2499, %v2855
      %v2996 = vadd.f32 %v2502, %v2858
      %v2997 = vadd.f32 %v2507, %v2863
      %v2998 = vadd.f32 %v2510, %v2866
      %v2999 = vadd.f32 %v2515, %v2871
      %v3000 = vadd.f32 %v2518, %v2874
      %v3001 = vadd.f32 %v2523, %v2879
      %v3002 = vadd.f32 %v2526, %v2882
      %v3003 = vadd.f32 %v2531, %v2887
      %v3004 = vadd.f32 %v2534, %v2890
      %v3005 = vadd.f32 %v2539, %v2895
      %v3006 = vadd.f32 %v2542, %v2898
      %v3007 = vadd.f32 %v2547, %v2903
      %v3008 = vadd.f32 %v2550, %v2906
      %v3009 = vadd.f32 %v2555, %v2911
      %v3010 = vadd.f32 %v2558, %v2914
      %v3011 = vadd.f32 %v2563, %v2919
      %v3012 = vadd.f32 %v2566, %v2922
      %v3013 = vadd.f32 %v2571, %v2927
      %v3014 = vadd.f32 %v2574, %v2930
      %v3015 = vadd.f32 %v2579, %v2935
      %v3016 = vadd.f32 %v2582, %v2938
      %v3017 = vadd.f32 %v2587, %v2943
      %v3018 = vadd.f32 %v2590, %v2946
      %v3019 = vadd.f32 %v2595, %v2951
      %v3020 = vadd.f32 %v2598, %v2954
      %v3021 = vadd.f32 %v1888, %v2957
      %v3022 = vadd.f32 %v1887, %v2958
      %v3023 = vadd.f32 %v1886, %v2959
      %v3024 = vadd.f32 %v1885, %v2960
      %v3025 = vadd.f32 %v1884, %v2961
      %v3026 = vadd.f32 %v1883, %v2962
      %v3027 = vadd.f32 %v1882, %v2963
      %v3028 = vadd.f32 %v1881, %v2964
      %v3029 = vadd.f32 %v1880, %v2965
      %v3030 = vadd.f32 %v1879, %v2966
      %v3031 = vadd.f32 %v1878, %v2967
      %v3032 = vadd.f32 %v1877, %v2968
      %v3033 = vadd.f32 %v1876, %v2969
      %v3034 = vadd.f32 %v1875, %v2970
      %v3035 = vadd.f32 %v1874, %v2971
      %v3036 = vadd.f32 %v1873, %v2972
      %v3037 = vadd.f32 %v1872, %v2973
      %v3038 = vadd.f32 %v1871, %v2974
      %v3039 = vadd.f32 %v1870, %v2975
      %v3040 = vadd.f32 %v1869, %v2976
      %v3041 = vadd.f32 %v1868, %v2977
      %v3042 = vadd.f32 %v1867, %v2978
      %v3043 = vadd.f32 %v1866, %v2979
      %v3044 = vadd.f32 %v1865, %v2980
      %v3045 = vadd.f32 %v1864, %v2981
      %v3046 = vadd.f32 %v1863, %v2982
      %v3047 = vadd.f32 %v1862, %v2983
      %v3048 = vadd.f32 %v1861, %v2984
      %v3049 = vadd.f32 %v1860, %v2985
      %v3050 = vadd.f32 %v1859, %v2986
      %v3051 = vadd.f32 %v1858, %v2987
      %v3052 = vadd.f32 %v1857, %v2988
      %v3053 = vadd.f32 %v1856, %v2989
      %v3054 = vadd.f32 %v1855, %v2990
      %v3055 = vadd.f32 %v1854, %v2991
      %v3056 = vadd.f32 %v1853, %v2992
      %v3057 = vadd.f32 %v1852, %v2993
      %v3058 = vadd.f32 %v1851, %v2994
      %v3059 = vadd.f32 %v1850, %v2995
      %v3060 = vadd.f32 %v1849, %v2996
      %v3061 = vadd.f32 %v1848, %v2997
      %v3062 = vadd.f32 %v1847, %v2998
      %v3063 = vadd.f32 %v1846, %v2999
      %v3064 = vadd.f32 %v1845, %v3000
      %v3065 = vadd.f32 %v1844, %v3001
      %v3066 = vadd.f32 %v1843, %v3002
      %v3067 = vadd.f32 %v1842, %v3003
      %v3068 = vadd.f32 %v1841, %v3004
      %v3069 = vadd.f32 %v1840, %v3005
      %v3070 = vadd.f32 %v1839, %v3006
      %v3071 = vadd.f32 %v1838, %v3007
      %v3072 = vadd.f32 %v1837, %v3008
      %v3073 = vadd.f32 %v1836, %v3009
      %v3074 = vadd.f32 %v1835, %v3010
      %v3075 = vadd.f32 %v1834, %v3011
      %v3076 = vadd.f32 %v1833, %v3012
      %v3077 = vadd.f32 %v1832, %v3013
      %v3078 = vadd.f32 %v1831, %v3014
      %v3079 = vadd.f32 %v1830, %v3015
      %v3080 = vadd.f32 %v1829, %v3016
      %v3081 = vadd.f32 %v1828, %v3017
      %v3082 = vadd.f32 %v1827, %v3018
      %v3083 = vadd.f32 %v1826, %v3019
      %v3084 = vadd.f32 %v1825, %v3020
      %s3085 = sadd.s32 32, %s626
      %s3086 = smul.addr %s3085, 4
      %s3087 = scalar_lea.vmem %s1, %s3086
      %v3088 = vld [vmem:[%s3087] sm:$0xf]
      %v3089 = vld [vmem:[%s3087 + $0x4] sm:$0xf]
      %v3090 = vld [vmem:[%s3087 + $0x8] sm:$0xf]
      %v3091 = vld [vmem:[%s3087 + $0xc] sm:$0xf]
      %v3092 = vld [vmem:[%s3087 + $0x10] sm:$0xf]
      %v3093 = vld [vmem:[%s3087 + $0x14] sm:$0xf]
      %v3094 = vld [vmem:[%s3087 + $0x18] sm:$0xf]
      %v3095 = vld [vmem:[%s3087 + $0x1c] sm:$0xf]
      %v3096 = vld [vmem:[%s3087 + $0x20] sm:$0xf]
      %v3097 = vld [vmem:[%s3087 + $0x24] sm:$0xf]
      %v3098 = vld [vmem:[%s3087 + $0x28] sm:$0xf]
      %v3099 = vld [vmem:[%s3087 + $0x2c] sm:$0xf]
      %v3100 = vld [vmem:[%s3087 + $0x30] sm:$0xf]
      %v3101 = vld [vmem:[%s3087 + $0x34] sm:$0xf]
      %v3102 = vld [vmem:[%s3087 + $0x38] sm:$0xf]
      %v3103 = vld [vmem:[%s3087 + $0x3c] sm:$0xf]
      %s3104 = sadd.s32 80, %s626
      %s3105 = smul.addr %s3104, 4
      %s3106 = scalar_lea.vmem %s1, %s3105
      %v3107 = vld [vmem:[%s3106] sm:$0xf]
      %v3108 = vld [vmem:[%s3106 + $0x4] sm:$0xf]
      %v3109 = vld [vmem:[%s3106 + $0x8] sm:$0xf]
      %v3110 = vld [vmem:[%s3106 + $0xc] sm:$0xf]
      %v3111 = vld [vmem:[%s3106 + $0x10] sm:$0xf]
      %v3112 = vld [vmem:[%s3106 + $0x14] sm:$0xf]
      %v3113 = vld [vmem:[%s3106 + $0x18] sm:$0xf]
      %v3114 = vld [vmem:[%s3106 + $0x1c] sm:$0xf]
      %v3115 = vld [vmem:[%s3106 + $0x20] sm:$0xf]
      %v3116 = vld [vmem:[%s3106 + $0x24] sm:$0xf]
      %v3117 = vld [vmem:[%s3106 + $0x28] sm:$0xf]
      %v3118 = vld [vmem:[%s3106 + $0x2c] sm:$0xf]
      %v3119 = vld [vmem:[%s3106 + $0x30] sm:$0xf]
      %v3120 = vld [vmem:[%s3106 + $0x34] sm:$0xf]
      %v3121 = vld [vmem:[%s3106 + $0x38] sm:$0xf]
      %v3122 = vld [vmem:[%s3106 + $0x3c] sm:$0xf]
      %v3139 = vunpack.c.l.b16 %v3107
      %v3140 = vunpack.c.l.b16 %v3108
      %v3141 = vunpack.c.l.b16 %v3109
      %v3142 = vunpack.c.l.b16 %v3110
      %v3143 = vunpack.c.l.b16 %v3111
      %v3144 = vunpack.c.l.b16 %v3112
      %v3145 = vunpack.c.l.b16 %v3113
      %v3146 = vunpack.c.l.b16 %v3114
      %v3147 = vunpack.c.l.b16 %v3115
      %v3148 = vunpack.c.l.b16 %v3116
      %v3149 = vunpack.c.l.b16 %v3117
      %v3150 = vunpack.c.l.b16 %v3118
      %v3151 = vunpack.c.l.b16 %v3119
      %v3152 = vunpack.c.l.b16 %v3120
      %v3153 = vunpack.c.l.b16 %v3121
      %v3154 = vunpack.c.l.b16 %v3122
      %v3155 = vpack.c.b16 %v3140, %v3139
      %v3156 = vpack.c.b16 %v3142, %v3141
      %v3157 = vpack.c.b16 %v3144, %v3143
      %v3158 = vpack.c.b16 %v3146, %v3145
      %v3159 = vpack.c.b16 %v3148, %v3147
      %v3160 = vpack.c.b16 %v3150, %v3149
      %v3161 = vpack.c.b16 %v3152, %v3151
      %v3162 = vpack.c.b16 %v3154, %v3153
      %3171 = vmatprep.subr.bf16.mxu0 0
      %3172 = vmatpush1.bf16.msra.mxu0 %v3155
      %3173 = vmatprep.subr.bf16.mxu0 0
      %3174 = vmatpush1.bf16.msra.mxu0 %v3156
      %3175 = vmatprep.subr.bf16.mxu0 0
      %3176 = vmatpush1.bf16.msra.mxu0 %v3157
      %3177 = vmatprep.subr.bf16.mxu0 0
      %3178 = vmatpush1.bf16.msra.mxu0 %v3158
      %3179 = vmatprep.subr.bf16.mxu0 0
      %3180 = vmatpush1.bf16.msra.mxu0 %v3159
      %3181 = vmatprep.subr.bf16.mxu0 0
      %3182 = vmatpush1.bf16.msra.mxu0 %v3160
      %3183 = vmatprep.subr.bf16.mxu0 0
      %3184 = vmatpush1.bf16.msra.mxu0 %v3161
      %3185 = vmatprep.subr.bf16.mxu0 0
      %3186 = vmatpush1.bf16.msra.mxu0 %v3162
      %3187 = vmatprep.subr.bf16.mxu0 0
      %3188 = vmatpush1.bf16.msra.mxu0 0
      %3189 = vmatprep.subr.bf16.mxu0 0
      %3190 = vmatpush1.bf16.msra.mxu0 0
      %3191 = vmatprep.subr.bf16.mxu0 0
      %3192 = vmatpush1.bf16.msra.mxu0 0
      %3193 = vmatprep.subr.bf16.mxu0 0
      %3194 = vmatpush1.bf16.msra.mxu0 0
      %3195 = vmatprep.subr.bf16.mxu0 0
      %3196 = vmatpush1.bf16.msra.mxu0 0
      %3197 = vmatprep.subr.bf16.mxu0 0
      %3198 = vmatpush1.bf16.msra.mxu0 0
      %3199 = vmatprep.subr.bf16.mxu0 0
      %3200 = vmatpush1.bf16.msra.mxu0 0
      %3201 = vmatprep.subr.bf16.mxu0 0
      %3202 = vmatpush1.bf16.msra.mxu0 0
      %3203 = vmatprep.mubr.bf16.mxu0 0
      %3204 = vmatmul.mubr.bf16.gmra.mrb[0].mxu0 %v559
      %v3205 = vpop.f32.mrb[0].mxu0
      %v3206 = vadd.f32 0.0, %v3205
      %v3207 = vpop.f32.mrb[0].mxu0
      %v3208 = vpop.f32.mrb[0].mxu0
      %v3209 = vadd.f32 0.0, %v3208
      %v3210 = vpop.f32.mrb[0].mxu0
      %3211 = vmatprep.mubr.bf16.mxu0 0
      %3212 = vmatmul.mubr.bf16.gmra.mrb[0].mxu0 %v560
      %v3213 = vpop.f32.mrb[0].mxu0
      %v3214 = vadd.f32 0.0, %v3213
      %v3215 = vpop.f32.mrb[0].mxu0
      %v3216 = vpop.f32.mrb[0].mxu0
      %v3217 = vadd.f32 0.0, %v3216
      %v3218 = vpop.f32.mrb[0].mxu0
      %3219 = vmatprep.mubr.bf16.mxu0 0
      %3220 = vmatmul.mubr.bf16.gmra.mrb[0].mxu0 %v561
      %v3221 = vpop.f32.mrb[0].mxu0
      %v3222 = vadd.f32 0.0, %v3221
      %v3223 = vpop.f32.mrb[0].mxu0
      %v3224 = vpop.f32.mrb[0].mxu0
      %v3225 = vadd.f32 0.0, %v3224
      %v3226 = vpop.f32.mrb[0].mxu0
      %3227 = vmatprep.mubr.bf16.mxu0 0
      %3228 = vmatmul.mubr.bf16.gmra.mrb[0].mxu0 %v562
      %v3229 = vpop.f32.mrb[0].mxu0
      %v3230 = vadd.f32 0.0, %v3229
      %v3231 = vpop.f32.mrb[0].mxu0
      %v3232 = vpop.f32.mrb[0].mxu0
      %v3233 = vadd.f32 0.0, %v3232
      %v3234 = vpop.f32.mrb[0].mxu0
      %3235 = vmatprep.mubr.bf16.mxu0 0
      %3236 = vmatmul.mubr.bf16.gmra.mrb[0].mxu0 %v563
      %v3237 = vpop.f32.mrb[0].mxu0
      %v3238 = vadd.f32 0.0, %v3237
      %v3239 = vpop.f32.mrb[0].mxu0
      %v3240 = vpop.f32.mrb[0].mxu0
      %v3241 = vadd.f32 0.0, %v3240
      %v3242 = vpop.f32.mrb[0].mxu0
      %3243 = vmatprep.mubr.bf16.mxu0 0
      %3244 = vmatmul.mubr.bf16.gmra.mrb[0].mxu0 %v564
      %v3245 = vpop.f32.mrb[0].mxu0
      %v3246 = vadd.f32 0.0, %v3245
      %v3247 = vpop.f32.mrb[0].mxu0
      %v3248 = vpop.f32.mrb[0].mxu0
      %v3249 = vadd.f32 0.0, %v3248
      %v3250 = vpop.f32.mrb[0].mxu0
      %3251 = vmatprep.mubr.bf16.mxu0 0
      %3252 = vmatmul.mubr.bf16.gmra.mrb[0].mxu0 %v565
      %v3253 = vpop.f32.mrb[0].mxu0
      %v3254 = vadd.f32 0.0, %v3253
      %v3255 = vpop.f32.mrb[0].mxu0
      %v3256 = vpop.f32.mrb[0].mxu0
      %v3257 = vadd.f32 0.0, %v3256
      %v3258 = vpop.f32.mrb[0].mxu0
      %3259 = vmatprep.mubr.bf16.mxu0 0
      %3260 = vmatmul.mubr.bf16.gmra.mrb[0].mxu0 %v566
      %v3261 = vpop.f32.mrb[0].mxu0
      %v3262 = vadd.f32 0.0, %v3261
      %v3263 = vpop.f32.mrb[0].mxu0
      %v3264 = vpop.f32.mrb[0].mxu0
      %v3265 = vadd.f32 0.0, %v3264
      %v3266 = vpop.f32.mrb[0].mxu0
      %3267 = vmatprep.mubr.bf16.mxu0 0
      %3268 = vmatmul.mubr.bf16.gmra.mrb[0].mxu0 %v567
      %v3269 = vpop.f32.mrb[0].mxu0
      %v3270 = vadd.f32 0.0, %v3269
      %v3271 = vpop.f32.mrb[0].mxu0
      %v3272 = vpop.f32.mrb[0].mxu0
      %v3273 = vadd.f32 0.0, %v3272
      %v3274 = vpop.f32.mrb[0].mxu0
      %3275 = vmatprep.mubr.bf16.mxu0 0
      %3276 = vmatmul.mubr.bf16.gmra.mrb[0].mxu0 %v568
      %v3277 = vpop.f32.mrb[0].mxu0
      %v3278 = vadd.f32 0.0, %v3277
      %v3279 = vpop.f32.mrb[0].mxu0
      %v3280 = vpop.f32.mrb[0].mxu0
      %v3281 = vadd.f32 0.0, %v3280
      %v3282 = vpop.f32.mrb[0].mxu0
      %3283 = vmatprep.mubr.bf16.mxu0 0
      %3284 = vmatmul.mubr.bf16.gmra.mrb[0].mxu0 %v569
      %v3285 = vpop.f32.mrb[0].mxu0
      %v3286 = vadd.f32 0.0, %v3285
      %v3287 = vpop.f32.mrb[0].mxu0
      %v3288 = vpop.f32.mrb[0].mxu0
      %v3289 = vadd.f32 0.0, %v3288
      %v3290 = vpop.f32.mrb[0].mxu0
      %3291 = vmatprep.mubr.bf16.mxu0 0
      %3292 = vmatmul.mubr.bf16.gmra.mrb[0].mxu0 %v570
      %v3293 = vpop.f32.mrb[0].mxu0
      %v3294 = vadd.f32 0.0, %v3293
      %v3295 = vpop.f32.mrb[0].mxu0
      %v3296 = vpop.f32.mrb[0].mxu0
      %v3297 = vadd.f32 0.0, %v3296
      %v3298 = vpop.f32.mrb[0].mxu0
      %3299 = vmatprep.mubr.bf16.mxu0 0
      %3300 = vmatmul.mubr.bf16.gmra.mrb[0].mxu0 %v571
      %v3301 = vpop.f32.mrb[0].mxu0
      %v3302 = vadd.f32 0.0, %v3301
      %v3303 = vpop.f32.mrb[0].mxu0
      %v3304 = vpop.f32.mrb[0].mxu0
      %v3305 = vadd.f32 0.0, %v3304
      %v3306 = vpop.f32.mrb[0].mxu0
      %3307 = vmatprep.mubr.bf16.mxu0 0
      %3308 = vmatmul.mubr.bf16.gmra.mrb[0].mxu0 %v572
      %v3309 = vpop.f32.mrb[0].mxu0
      %v3310 = vadd.f32 0.0, %v3309
      %v3311 = vpop.f32.mrb[0].mxu0
      %v3312 = vpop.f32.mrb[0].mxu0
      %v3313 = vadd.f32 0.0, %v3312
      %v3314 = vpop.f32.mrb[0].mxu0
      %3315 = vmatprep.mubr.bf16.mxu0 0
      %3316 = vmatmul.mubr.bf16.gmra.mrb[0].mxu0 %v573
      %v3317 = vpop.f32.mrb[0].mxu0
      %v3318 = vadd.f32 0.0, %v3317
      %v3319 = vpop.f32.mrb[0].mxu0
      %v3320 = vpop.f32.mrb[0].mxu0
      %v3321 = vadd.f32 0.0, %v3320
      %v3322 = vpop.f32.mrb[0].mxu0
      %3323 = vmatprep.mubr.bf16.mxu0 0
      %3324 = vmatmul.mubr.bf16.gmra.mrb[0].mxu0 %v574
      %v3325 = vpop.f32.mrb[0].mxu0
      %v3326 = vadd.f32 0.0, %v3325
      %v3327 = vpop.f32.mrb[0].mxu0
      %v3328 = vpop.f32.mrb[0].mxu0
      %v3329 = vadd.f32 0.0, %v3328
      %v3330 = vpop.f32.mrb[0].mxu0
      %3331 = vmatprep.mubr.bf16.mxu0 0
      %3332 = vmatmul.mubr.bf16.gmra.mrb[0].mxu0 %v575
      %v3333 = vpop.f32.mrb[0].mxu0
      %v3334 = vadd.f32 0.0, %v3333
      %v3335 = vpop.f32.mrb[0].mxu0
      %v3336 = vpop.f32.mrb[0].mxu0
      %v3337 = vadd.f32 0.0, %v3336
      %v3338 = vpop.f32.mrb[0].mxu0
      %3339 = vmatprep.mubr.bf16.mxu0 0
      %3340 = vmatmul.mubr.bf16.gmra.mrb[0].mxu0 %v576
      %v3341 = vpop.f32.mrb[0].mxu0
      %v3342 = vadd.f32 0.0, %v3341
      %v3343 = vpop.f32.mrb[0].mxu0
      %v3344 = vpop.f32.mrb[0].mxu0
      %v3345 = vadd.f32 0.0, %v3344
      %v3346 = vpop.f32.mrb[0].mxu0
      %3347 = vmatprep.mubr.bf16.mxu0 0
      %3348 = vmatmul.mubr.bf16.gmra.mrb[0].mxu0 %v577
      %v3349 = vpop.f32.mrb[0].mxu0
      %v3350 = vadd.f32 0.0, %v3349
      %v3351 = vpop.f32.mrb[0].mxu0
      %v3352 = vpop.f32.mrb[0].mxu0
      %v3353 = vadd.f32 0.0, %v3352
      %v3354 = vpop.f32.mrb[0].mxu0
      %3355 = vmatprep.mubr.bf16.mxu0 0
      %3356 = vmatmul.mubr.bf16.gmra.mrb[0].mxu0 %v578
      %v3357 = vpop.f32.mrb[0].mxu0
      %v3358 = vadd.f32 0.0, %v3357
      %v3359 = vpop.f32.mrb[0].mxu0
      %v3360 = vpop.f32.mrb[0].mxu0
      %v3361 = vadd.f32 0.0, %v3360
      %v3362 = vpop.f32.mrb[0].mxu0
      %3363 = vmatprep.mubr.bf16.mxu0 0
      %3364 = vmatmul.mubr.bf16.gmra.mrb[0].mxu0 %v579
      %v3365 = vpop.f32.mrb[0].mxu0
      %v3366 = vadd.f32 0.0, %v3365
      %v3367 = vpop.f32.mrb[0].mxu0
      %v3368 = vpop.f32.mrb[0].mxu0
      %v3369 = vadd.f32 0.0, %v3368
      %v3370 = vpop.f32.mrb[0].mxu0
      %3371 = vmatprep.mubr.bf16.mxu0 0
      %3372 = vmatmul.mubr.bf16.gmra.mrb[0].mxu0 %v580
      %v3373 = vpop.f32.mrb[0].mxu0
      %v3374 = vadd.f32 0.0, %v3373
      %v3375 = vpop.f32.mrb[0].mxu0
      %v3376 = vpop.f32.mrb[0].mxu0
      %v3377 = vadd.f32 0.0, %v3376
      %v3378 = vpop.f32.mrb[0].mxu0
      %3379 = vmatprep.mubr.bf16.mxu0 0
      %3380 = vmatmul.mubr.bf16.gmra.mrb[0].mxu0 %v581
      %v3381 = vpop.f32.mrb[0].mxu0
      %v3382 = vadd.f32 0.0, %v3381
      %v3383 = vpop.f32.mrb[0].mxu0
      %v3384 = vpop.f32.mrb[0].mxu0
      %v3385 = vadd.f32 0.0, %v3384
      %v3386 = vpop.f32.mrb[0].mxu0
      %3387 = vmatprep.mubr.bf16.mxu0 0
      %3388 = vmatmul.mubr.bf16.gmra.mrb[0].mxu0 %v582
      %v3389 = vpop.f32.mrb[0].mxu0
      %v3390 = vadd.f32 0.0, %v3389
      %v3391 = vpop.f32.mrb[0].mxu0
      %v3392 = vpop.f32.mrb[0].mxu0
      %v3393 = vadd.f32 0.0, %v3392
      %v3394 = vpop.f32.mrb[0].mxu0
      %3395 = vmatprep.mubr.bf16.mxu0 0
      %3396 = vmatmul.mubr.bf16.gmra.mrb[0].mxu0 %v583
      %v3397 = vpop.f32.mrb[0].mxu0
      %v3398 = vadd.f32 0.0, %v3397
      %v3399 = vpop.f32.mrb[0].mxu0
      %v3400 = vpop.f32.mrb[0].mxu0
      %v3401 = vadd.f32 0.0, %v3400
      %v3402 = vpop.f32.mrb[0].mxu0
      %3403 = vmatprep.mubr.bf16.mxu0 0
      %3404 = vmatmul.mubr.bf16.gmra.mrb[0].mxu0 %v584
      %v3405 = vpop.f32.mrb[0].mxu0
      %v3406 = vadd.f32 0.0, %v3405
      %v3407 = vpop.f32.mrb[0].mxu0
      %v3408 = vpop.f32.mrb[0].mxu0
      %v3409 = vadd.f32 0.0, %v3408
      %v3410 = vpop.f32.mrb[0].mxu0
      %3411 = vmatprep.mubr.bf16.mxu0 0
      %3412 = vmatmul.mubr.bf16.gmra.mrb[0].mxu0 %v585
      %v3413 = vpop.f32.mrb[0].mxu0
      %v3414 = vadd.f32 0.0, %v3413
      %v3415 = vpop.f32.mrb[0].mxu0
      %v3416 = vpop.f32.mrb[0].mxu0
      %v3417 = vadd.f32 0.0, %v3416
      %v3418 = vpop.f32.mrb[0].mxu0
      %3419 = vmatprep.mubr.bf16.mxu0 0
      %3420 = vmatmul.mubr.bf16.gmra.mrb[0].mxu0 %v586
      %v3421 = vpop.f32.mrb[0].mxu0
      %v3422 = vadd.f32 0.0, %v3421
      %v3423 = vpop.f32.mrb[0].mxu0
      %v3424 = vpop.f32.mrb[0].mxu0
      %v3425 = vadd.f32 0.0, %v3424
      %v3426 = vpop.f32.mrb[0].mxu0
      %3427 = vmatprep.mubr.bf16.mxu0 0
      %3428 = vmatmul.mubr.bf16.gmra.mrb[0].mxu0 %v587
      %v3429 = vpop.f32.mrb[0].mxu0
      %v3430 = vadd.f32 0.0, %v3429
      %v3431 = vpop.f32.mrb[0].mxu0
      %v3432 = vpop.f32.mrb[0].mxu0
      %v3433 = vadd.f32 0.0, %v3432
      %v3434 = vpop.f32.mrb[0].mxu0
      %3435 = vmatprep.mubr.bf16.mxu0 0
      %3436 = vmatmul.mubr.bf16.gmra.mrb[0].mxu0 %v588
      %v3437 = vpop.f32.mrb[0].mxu0
      %v3438 = vadd.f32 0.0, %v3437
      %v3439 = vpop.f32.mrb[0].mxu0
      %v3440 = vpop.f32.mrb[0].mxu0
      %v3441 = vadd.f32 0.0, %v3440
      %v3442 = vpop.f32.mrb[0].mxu0
      %3443 = vmatprep.mubr.bf16.mxu0 0
      %3444 = vmatmul.mubr.bf16.gmra.mrb[0].mxu0 %v589
      %v3445 = vpop.f32.mrb[0].mxu0
      %v3446 = vadd.f32 0.0, %v3445
      %v3447 = vpop.f32.mrb[0].mxu0
      %v3448 = vpop.f32.mrb[0].mxu0
      %v3449 = vadd.f32 0.0, %v3448
      %v3450 = vpop.f32.mrb[0].mxu0
      %3451 = vmatprep.mubr.bf16.mxu0 0
      %3452 = vmatmul.mubr.bf16.gmra.mrb[0].mxu0 %v590
      %v3453 = vpop.f32.mrb[0].mxu0
      %v3454 = vadd.f32 0.0, %v3453
      %v3455 = vpop.f32.mrb[0].mxu0
      %v3456 = vpop.f32.mrb[0].mxu0
      %v3457 = vadd.f32 0.0, %v3456
      %v3458 = vpop.f32.mrb[0].mxu0
      %3459 = vdwg.mxu0
      %v3476 = vunpack.c.l.b16 %v3088
      %v3477 = vunpack.c.l.b16 %v3089
      %v3478 = vunpack.c.l.b16 %v3090
      %v3479 = vunpack.c.l.b16 %v3091
      %v3480 = vunpack.c.l.b16 %v3092
      %v3481 = vunpack.c.l.b16 %v3093
      %v3482 = vunpack.c.l.b16 %v3094
      %v3483 = vunpack.c.l.b16 %v3095
      %v3484 = vunpack.c.l.b16 %v3096
      %v3485 = vunpack.c.l.b16 %v3097
      %v3486 = vunpack.c.l.b16 %v3098
      %v3487 = vunpack.c.l.b16 %v3099
      %v3488 = vunpack.c.l.b16 %v3100
      %v3489 = vunpack.c.l.b16 %v3101
      %v3490 = vunpack.c.l.b16 %v3102
      %v3491 = vunpack.c.l.b16 %v3103
      %v3492 = vpack.c.b16 %v3477, %v3476
      %v3493 = vpack.c.b16 %v3479, %v3478
      %v3494 = vpack.c.b16 %v3481, %v3480
      %v3495 = vpack.c.b16 %v3483, %v3482
      %v3496 = vpack.c.b16 %v3485, %v3484
      %v3497 = vpack.c.b16 %v3487, %v3486
      %v3498 = vpack.c.b16 %v3489, %v3488
      %v3499 = vpack.c.b16 %v3491, %v3490
      %3508 = vmatprep.subr.bf16.mxu0 0
      %3509 = vmatpush1.bf16.msra.mxu0 %v3492
      %3510 = vmatprep.subr.bf16.mxu0 0
      %3511 = vmatpush1.bf16.msra.mxu0 %v3493
      %3512 = vmatprep.subr.bf16.mxu0 0
      %3513 = vmatpush1.bf16.msra.mxu0 %v3494
      %3514 = vmatprep.subr.bf16.mxu0 0
      %3515 = vmatpush1.bf16.msra.mxu0 %v3495
      %3516 = vmatprep.subr.bf16.mxu0 0
      %3517 = vmatpush1.bf16.msra.mxu0 %v3496
      %3518 = vmatprep.subr.bf16.mxu0 0
      %3519 = vmatpush1.bf16.msra.mxu0 %v3497
      %3520 = vmatprep.subr.bf16.mxu0 0
      %3521 = vmatpush1.bf16.msra.mxu0 %v3498
      %3522 = vmatprep.subr.bf16.mxu0 0
      %3523 = vmatpush1.bf16.msra.mxu0 %v3499
      %3524 = vmatprep.subr.bf16.mxu0 0
      %3525 = vmatpush1.bf16.msra.mxu0 0
      %3526 = vmatprep.subr.bf16.mxu0 0
      %3527 = vmatpush1.bf16.msra.mxu0 0
      %3528 = vmatprep.subr.bf16.mxu0 0
      %3529 = vmatpush1.bf16.msra.mxu0 0
      %3530 = vmatprep.subr.bf16.mxu0 0
      %3531 = vmatpush1.bf16.msra.mxu0 0
      %3532 = vmatprep.subr.bf16.mxu0 0
      %3533 = vmatpush1.bf16.msra.mxu0 0
      %3534 = vmatprep.subr.bf16.mxu0 0
      %3535 = vmatpush1.bf16.msra.mxu0 0
      %3536 = vmatprep.subr.bf16.mxu0 0
      %3537 = vmatpush1.bf16.msra.mxu0 0
      %3538 = vmatprep.subr.bf16.mxu0 0
      %3539 = vmatpush1.bf16.msra.mxu0 0
      %3540 = vmatprep.mubr.bf16.mxu0 0
      %3541 = vmatmul.mubr.bf16.gmra.mrb[0].mxu0 %v524
      %v3542 = vpop.f32.mrb[0].mxu0
      %v3543 = vadd.f32 %v3206, %v3542
      %v3544 = vpop.f32.mrb[0].mxu0
      %v3545 = vpop.f32.mrb[0].mxu0
      %v3546 = vadd.f32 %v3209, %v3545
      %v3547 = vpop.f32.mrb[0].mxu0
      %3548 = vmatprep.mubr.bf16.mxu0 0
      %3549 = vmatmul.mubr.bf16.gmra.mrb[0].mxu0 %v525
      %v3550 = vpop.f32.mrb[0].mxu0
      %v3551 = vadd.f32 %v3214, %v3550
      %v3552 = vpop.f32.mrb[0].mxu0
      %v3553 = vpop.f32.mrb[0].mxu0
      %v3554 = vadd.f32 %v3217, %v3553
      %v3555 = vpop.f32.mrb[0].mxu0
      %3556 = vmatprep.mubr.bf16.mxu0 0
      %3557 = vmatmul.mubr.bf16.gmra.mrb[0].mxu0 %v526
      %v3558 = vpop.f32.mrb[0].mxu0
      %v3559 = vadd.f32 %v3222, %v3558
      %v3560 = vpop.f32.mrb[0].mxu0
      %v3561 = vpop.f32.mrb[0].mxu0
      %v3562 = vadd.f32 %v3225, %v3561
      %v3563 = vpop.f32.mrb[0].mxu0
      %3564 = vmatprep.mubr.bf16.mxu0 0
      %3565 = vmatmul.mubr.bf16.gmra.mrb[0].mxu0 %v527
      %v3566 = vpop.f32.mrb[0].mxu0
      %v3567 = vadd.f32 %v3230, %v3566
      %v3568 = vpop.f32.mrb[0].mxu0
      %v3569 = vpop.f32.mrb[0].mxu0
      %v3570 = vadd.f32 %v3233, %v3569
      %v3571 = vpop.f32.mrb[0].mxu0
      %3572 = vmatprep.mubr.bf16.mxu0 0
      %3573 = vmatmul.mubr.bf16.gmra.mrb[0].mxu0 %v528
      %v3574 = vpop.f32.mrb[0].mxu0
      %v3575 = vadd.f32 %v3238, %v3574
      %v3576 = vpop.f32.mrb[0].mxu0
      %v3577 = vpop.f32.mrb[0].mxu0
      %v3578 = vadd.f32 %v3241, %v3577
      %v3579 = vpop.f32.mrb[0].mxu0
      %3580 = vmatprep.mubr.bf16.mxu0 0
      %3581 = vmatmul.mubr.bf16.gmra.mrb[0].mxu0 %v529
      %v3582 = vpop.f32.mrb[0].mxu0
      %v3583 = vadd.f32 %v3246, %v3582
      %v3584 = vpop.f32.mrb[0].mxu0
      %v3585 = vpop.f32.mrb[0].mxu0
      %v3586 = vadd.f32 %v3249, %v3585
      %v3587 = vpop.f32.mrb[0].mxu0
      %3588 = vmatprep.mubr.bf16.mxu0 0
      %3589 = vmatmul.mubr.bf16.gmra.mrb[0].mxu0 %v530
      %v3590 = vpop.f32.mrb[0].mxu0
      %v3591 = vadd.f32 %v3254, %v3590
      %v3592 = vpop.f32.mrb[0].mxu0
      %v3593 = vpop.f32.mrb[0].mxu0
      %v3594 = vadd.f32 %v3257, %v3593
      %v3595 = vpop.f32.mrb[0].mxu0
      %3596 = vmatprep.mubr.bf16.mxu0 0
      %3597 = vmatmul.mubr.bf16.gmra.mrb[0].mxu0 %v531
      %v3598 = vpop.f32.mrb[0].mxu0
      %v3599 = vadd.f32 %v3262, %v3598
      %v3600 = vpop.f32.mrb[0].mxu0
      %v3601 = vpop.f32.mrb[0].mxu0
      %v3602 = vadd.f32 %v3265, %v3601
      %v3603 = vpop.f32.mrb[0].mxu0
      %3604 = vmatprep.mubr.bf16.mxu0 0
      %3605 = vmatmul.mubr.bf16.gmra.mrb[0].mxu0 %v532
      %v3606 = vpop.f32.mrb[0].mxu0
      %v3607 = vadd.f32 %v3270, %v3606
      %v3608 = vpop.f32.mrb[0].mxu0
      %v3609 = vpop.f32.mrb[0].mxu0
      %v3610 = vadd.f32 %v3273, %v3609
      %v3611 = vpop.f32.mrb[0].mxu0
      %3612 = vmatprep.mubr.bf16.mxu0 0
      %3613 = vmatmul.mubr.bf16.gmra.mrb[0].mxu0 %v533
      %v3614 = vpop.f32.mrb[0].mxu0
      %v3615 = vadd.f32 %v3278, %v3614
      %v3616 = vpop.f32.mrb[0].mxu0
      %v3617 = vpop.f32.mrb[0].mxu0
      %v3618 = vadd.f32 %v3281, %v3617
      %v3619 = vpop.f32.mrb[0].mxu0
      %3620 = vmatprep.mubr.bf16.mxu0 0
      %3621 = vmatmul.mubr.bf16.gmra.mrb[0].mxu0 %v534
      %v3622 = vpop.f32.mrb[0].mxu0
      %v3623 = vadd.f32 %v3286, %v3622
      %v3624 = vpop.f32.mrb[0].mxu0
      %v3625 = vpop.f32.mrb[0].mxu0
      %v3626 = vadd.f32 %v3289, %v3625
      %v3627 = vpop.f32.mrb[0].mxu0
      %3628 = vmatprep.mubr.bf16.mxu0 0
      %3629 = vmatmul.mubr.bf16.gmra.mrb[0].mxu0 %v535
      %v3630 = vpop.f32.mrb[0].mxu0
      %v3631 = vadd.f32 %v3294, %v3630
      %v3632 = vpop.f32.mrb[0].mxu0
      %v3633 = vpop.f32.mrb[0].mxu0
      %v3634 = vadd.f32 %v3297, %v3633
      %v3635 = vpop.f32.mrb[0].mxu0
      %3636 = vmatprep.mubr.bf16.mxu0 0
      %3637 = vmatmul.mubr.bf16.gmra.mrb[0].mxu0 %v536
      %v3638 = vpop.f32.mrb[0].mxu0
      %v3639 = vadd.f32 %v3302, %v3638
      %v3640 = vpop.f32.mrb[0].mxu0
      %v3641 = vpop.f32.mrb[0].mxu0
      %v3642 = vadd.f32 %v3305, %v3641
      %v3643 = vpop.f32.mrb[0].mxu0
      %3644 = vmatprep.mubr.bf16.mxu0 0
      %3645 = vmatmul.mubr.bf16.gmra.mrb[0].mxu0 %v537
      %v3646 = vpop.f32.mrb[0].mxu0
      %v3647 = vadd.f32 %v3310, %v3646
      %v3648 = vpop.f32.mrb[0].mxu0
      %v3649 = vpop.f32.mrb[0].mxu0
      %v3650 = vadd.f32 %v3313, %v3649
      %v3651 = vpop.f32.mrb[0].mxu0
      %3652 = vmatprep.mubr.bf16.mxu0 0
      %3653 = vmatmul.mubr.bf16.gmra.mrb[0].mxu0 %v538
      %v3654 = vpop.f32.mrb[0].mxu0
      %v3655 = vadd.f32 %v3318, %v3654
      %v3656 = vpop.f32.mrb[0].mxu0
      %v3657 = vpop.f32.mrb[0].mxu0
      %v3658 = vadd.f32 %v3321, %v3657
      %v3659 = vpop.f32.mrb[0].mxu0
      %3660 = vmatprep.mubr.bf16.mxu0 0
      %3661 = vmatmul.mubr.bf16.gmra.mrb[0].mxu0 %v539
      %v3662 = vpop.f32.mrb[0].mxu0
      %v3663 = vadd.f32 %v3326, %v3662
      %v3664 = vpop.f32.mrb[0].mxu0
      %v3665 = vpop.f32.mrb[0].mxu0
      %v3666 = vadd.f32 %v3329, %v3665
      %v3667 = vpop.f32.mrb[0].mxu0
      %3668 = vmatprep.mubr.bf16.mxu0 0
      %3669 = vmatmul.mubr.bf16.gmra.mrb[0].mxu0 %v540
      %v3670 = vpop.f32.mrb[0].mxu0
      %v3671 = vadd.f32 %v3334, %v3670
      %v3672 = vpop.f32.mrb[0].mxu0
      %v3673 = vpop.f32.mrb[0].mxu0
      %v3674 = vadd.f32 %v3337, %v3673
      %v3675 = vpop.f32.mrb[0].mxu0
      %3676 = vmatprep.mubr.bf16.mxu0 0
      %3677 = vmatmul.mubr.bf16.gmra.mrb[0].mxu0 %v541
      %v3678 = vpop.f32.mrb[0].mxu0
      %v3679 = vadd.f32 %v3342, %v3678
      %v3680 = vpop.f32.mrb[0].mxu0
      %v3681 = vpop.f32.mrb[0].mxu0
      %v3682 = vadd.f32 %v3345, %v3681
      %v3683 = vpop.f32.mrb[0].mxu0
      %3684 = vmatprep.mubr.bf16.mxu0 0
      %3685 = vmatmul.mubr.bf16.gmra.mrb[0].mxu0 %v542
      %v3686 = vpop.f32.mrb[0].mxu0
      %v3687 = vadd.f32 %v3350, %v3686
      %v3688 = vpop.f32.mrb[0].mxu0
      %v3689 = vpop.f32.mrb[0].mxu0
      %v3690 = vadd.f32 %v3353, %v3689
      %v3691 = vpop.f32.mrb[0].mxu0
      %3692 = vmatprep.mubr.bf16.mxu0 0
      %3693 = vmatmul.mubr.bf16.gmra.mrb[0].mxu0 %v543
      %v3694 = vpop.f32.mrb[0].mxu0
      %v3695 = vadd.f32 %v3358, %v3694
      %v3696 = vpop.f32.mrb[0].mxu0
      %v3697 = vpop.f32.mrb[0].mxu0
      %v3698 = vadd.f32 %v3361, %v3697
      %v3699 = vpop.f32.mrb[0].mxu0
      %3700 = vmatprep.mubr.bf16.mxu0 0
      %3701 = vmatmul.mubr.bf16.gmra.mrb[0].mxu0 %v544
      %v3702 = vpop.f32.mrb[0].mxu0
      %v3703 = vadd.f32 %v3366, %v3702
      %v3704 = vpop.f32.mrb[0].mxu0
      %v3705 = vpop.f32.mrb[0].mxu0
      %v3706 = vadd.f32 %v3369, %v3705
      %v3707 = vpop.f32.mrb[0].mxu0
      %3708 = vmatprep.mubr.bf16.mxu0 0
      %3709 = vmatmul.mubr.bf16.gmra.mrb[0].mxu0 %v545
      %v3710 = vpop.f32.mrb[0].mxu0
      %v3711 = vadd.f32 %v3374, %v3710
      %v3712 = vpop.f32.mrb[0].mxu0
      %v3713 = vpop.f32.mrb[0].mxu0
      %v3714 = vadd.f32 %v3377, %v3713
      %v3715 = vpop.f32.mrb[0].mxu0
      %3716 = vmatprep.mubr.bf16.mxu0 0
      %3717 = vmatmul.mubr.bf16.gmra.mrb[0].mxu0 %v546
      %v3718 = vpop.f32.mrb[0].mxu0
      %v3719 = vadd.f32 %v3382, %v3718
      %v3720 = vpop.f32.mrb[0].mxu0
      %v3721 = vpop.f32.mrb[0].mxu0
      %v3722 = vadd.f32 %v3385, %v3721
      %v3723 = vpop.f32.mrb[0].mxu0
      %3724 = vmatprep.mubr.bf16.mxu0 0
      %3725 = vmatmul.mubr.bf16.gmra.mrb[0].mxu0 %v547
      %v3726 = vpop.f32.mrb[0].mxu0
      %v3727 = vadd.f32 %v3390, %v3726
      %v3728 = vpop.f32.mrb[0].mxu0
      %v3729 = vpop.f32.mrb[0].mxu0
      %v3730 = vadd.f32 %v3393, %v3729
      %v3731 = vpop.f32.mrb[0].mxu0
      %3732 = vmatprep.mubr.bf16.mxu0 0
      %3733 = vmatmul.mubr.bf16.gmra.mrb[0].mxu0 %v548
      %v3734 = vpop.f32.mrb[0].mxu0
      %v3735 = vadd.f32 %v3398, %v3734
      %v3736 = vpop.f32.mrb[0].mxu0
      %v3737 = vpop.f32.mrb[0].mxu0
      %v3738 = vadd.f32 %v3401, %v3737
      %v3739 = vpop.f32.mrb[0].mxu0
      %3740 = vmatprep.mubr.bf16.mxu0 0
      %3741 = vmatmul.mubr.bf16.gmra.mrb[0].mxu0 %v549
      %v3742 = vpop.f32.mrb[0].mxu0
      %v3743 = vadd.f32 %v3406, %v3742
      %v3744 = vpop.f32.mrb[0].mxu0
      %v3745 = vpop.f32.mrb[0].mxu0
      %v3746 = vadd.f32 %v3409, %v3745
      %v3747 = vpop.f32.mrb[0].mxu0
      %3748 = vmatprep.mubr.bf16.mxu0 0
      %3749 = vmatmul.mubr.bf16.gmra.mrb[0].mxu0 %v550
      %v3750 = vpop.f32.mrb[0].mxu0
      %v3751 = vadd.f32 %v3414, %v3750
      %v3752 = vpop.f32.mrb[0].mxu0
      %v3753 = vpop.f32.mrb[0].mxu0
      %v3754 = vadd.f32 %v3417, %v3753
      %v3755 = vpop.f32.mrb[0].mxu0
      %3756 = vmatprep.mubr.bf16.mxu0 0
      %3757 = vmatmul.mubr.bf16.gmra.mrb[0].mxu0 %v551
      %v3758 = vpop.f32.mrb[0].mxu0
      %v3759 = vadd.f32 %v3422, %v3758
      %v3760 = vpop.f32.mrb[0].mxu0
      %v3761 = vpop.f32.mrb[0].mxu0
      %v3762 = vadd.f32 %v3425, %v3761
      %v3763 = vpop.f32.mrb[0].mxu0
      %3764 = vmatprep.mubr.bf16.mxu0 0
      %3765 = vmatmul.mubr.bf16.gmra.mrb[0].mxu0 %v552
      %v3766 = vpop.f32.mrb[0].mxu0
      %v3767 = vadd.f32 %v3430, %v3766
      %v3768 = vpop.f32.mrb[0].mxu0
      %v3769 = vpop.f32.mrb[0].mxu0
      %v3770 = vadd.f32 %v3433, %v3769
      %v3771 = vpop.f32.mrb[0].mxu0
      %3772 = vmatprep.mubr.bf16.mxu0 0
      %3773 = vmatmul.mubr.bf16.gmra.mrb[0].mxu0 %v553
      %v3774 = vpop.f32.mrb[0].mxu0
      %v3775 = vadd.f32 %v3438, %v3774
      %v3776 = vpop.f32.mrb[0].mxu0
      %v3777 = vpop.f32.mrb[0].mxu0
      %v3778 = vadd.f32 %v3441, %v3777
      %v3779 = vpop.f32.mrb[0].mxu0
      %3780 = vmatprep.mubr.bf16.mxu0 0
      %3781 = vmatmul.mubr.bf16.gmra.mrb[0].mxu0 %v554
      %v3782 = vpop.f32.mrb[0].mxu0
      %v3783 = vadd.f32 %v3446, %v3782
      %v3784 = vpop.f32.mrb[0].mxu0
      %v3785 = vpop.f32.mrb[0].mxu0
      %v3786 = vadd.f32 %v3449, %v3785
      %v3787 = vpop.f32.mrb[0].mxu0
      %3788 = vmatprep.mubr.bf16.mxu0 0
      %3789 = vmatmul.mubr.bf16.gmra.mrb[0].mxu0 %v555
      %v3790 = vpop.f32.mrb[0].mxu0
      %v3791 = vadd.f32 %v3454, %v3790
      %v3792 = vpop.f32.mrb[0].mxu0
      %v3793 = vpop.f32.mrb[0].mxu0
      %v3794 = vadd.f32 %v3457, %v3793
      %v3795 = vpop.f32.mrb[0].mxu0
      %3796 = vdwg.mxu0
      %s3797 = sadd.s32 128, %s626
      %s3798 = smul.addr %s3797, 4
      %s3799 = scalar_lea.vmem %s1, %s3798
      %v3800 = vld [vmem:[%s3799] sm:$0xf]
      %v3801 = vld [vmem:[%s3799 + $0x4] sm:$0xf]
      %v3802 = vld [vmem:[%s3799 + $0x8] sm:$0xf]
      %v3803 = vld [vmem:[%s3799 + $0xc] sm:$0xf]
      %v3804 = vld [vmem:[%s3799 + $0x10] sm:$0xf]
      %v3805 = vld [vmem:[%s3799 + $0x14] sm:$0xf]
      %v3806 = vld [vmem:[%s3799 + $0x18] sm:$0xf]
      %v3807 = vld [vmem:[%s3799 + $0x1c] sm:$0xf]
      %v3808 = vld [vmem:[%s3799 + $0x20] sm:$0xf]
      %v3809 = vld [vmem:[%s3799 + $0x24] sm:$0xf]
      %v3810 = vld [vmem:[%s3799 + $0x28] sm:$0xf]
      %v3811 = vld [vmem:[%s3799 + $0x2c] sm:$0xf]
      %v3812 = vld [vmem:[%s3799 + $0x30] sm:$0xf]
      %v3813 = vld [vmem:[%s3799 + $0x34] sm:$0xf]
      %v3814 = vld [vmem:[%s3799 + $0x38] sm:$0xf]
      %v3815 = vld [vmem:[%s3799 + $0x3c] sm:$0xf]
      %v3832 = vunpack.c.l.b16 %v3800
      %v3833 = vunpack.c.l.b16 %v3801
      %v3834 = vunpack.c.l.b16 %v3802
      %v3835 = vunpack.c.l.b16 %v3803
      %v3836 = vunpack.c.l.b16 %v3804
      %v3837 = vunpack.c.l.b16 %v3805
      %v3838 = vunpack.c.l.b16 %v3806
      %v3839 = vunpack.c.l.b16 %v3807
      %v3840 = vunpack.c.l.b16 %v3808
      %v3841 = vunpack.c.l.b16 %v3809
      %v3842 = vunpack.c.l.b16 %v3810
      %v3843 = vunpack.c.l.b16 %v3811
      %v3844 = vunpack.c.l.b16 %v3812
      %v3845 = vunpack.c.l.b16 %v3813
      %v3846 = vunpack.c.l.b16 %v3814
      %v3847 = vunpack.c.l.b16 %v3815
      %v3848 = vpack.c.b16 %v3833, %v3832
      %v3849 = vpack.c.b16 %v3835, %v3834
      %v3850 = vpack.c.b16 %v3837, %v3836
      %v3851 = vpack.c.b16 %v3839, %v3838
      %v3852 = vpack.c.b16 %v3841, %v3840
      %v3853 = vpack.c.b16 %v3843, %v3842
      %v3854 = vpack.c.b16 %v3845, %v3844
      %v3855 = vpack.c.b16 %v3847, %v3846
      %3864 = vmatprep.subr.bf16.mxu0 0
      %3865 = vmatpush1.bf16.msra.mxu0 %v3848
      %3866 = vmatprep.subr.bf16.mxu0 0
      %3867 = vmatpush1.bf16.msra.mxu0 %v3849
      %3868 = vmatprep.subr.bf16.mxu0 0
      %3869 = vmatpush1.bf16.msra.mxu0 %v3850
      %3870 = vmatprep.subr.bf16.mxu0 0
      %3871 = vmatpush1.bf16.msra.mxu0 %v3851
      %3872 = vmatprep.subr.bf16.mxu0 0
      %3873 = vmatpush1.bf16.msra.mxu0 %v3852
      %3874 = vmatprep.subr.bf16.mxu0 0
      %3875 = vmatpush1.bf16.msra.mxu0 %v3853
      %3876 = vmatprep.subr.bf16.mxu0 0
      %3877 = vmatpush1.bf16.msra.mxu0 %v3854
      %3878 = vmatprep.subr.bf16.mxu0 0
      %3879 = vmatpush1.bf16.msra.mxu0 %v3855
      %3880 = vmatprep.subr.bf16.mxu0 0
      %3881 = vmatpush1.bf16.msra.mxu0 0
      %3882 = vmatprep.subr.bf16.mxu0 0
      %3883 = vmatpush1.bf16.msra.mxu0 0
      %3884 = vmatprep.subr.bf16.mxu0 0
      %3885 = vmatpush1.bf16.msra.mxu0 0
      %3886 = vmatprep.subr.bf16.mxu0 0
      %3887 = vmatpush1.bf16.msra.mxu0 0
      %3888 = vmatprep.subr.bf16.mxu0 0
      %3889 = vmatpush1.bf16.msra.mxu0 0
      %3890 = vmatprep.subr.bf16.mxu0 0
      %3891 = vmatpush1.bf16.msra.mxu0 0
      %3892 = vmatprep.subr.bf16.mxu0 0
      %3893 = vmatpush1.bf16.msra.mxu0 0
      %3894 = vmatprep.subr.bf16.mxu0 0
      %3895 = vmatpush1.bf16.msra.mxu0 0
      %3896 = vmatprep.mubr.bf16.mxu0 0
      %3897 = vmatmul.mubr.bf16.gmra.mrb[0].mxu0 %v594
      %v3898 = vpop.f32.mrb[0].mxu0
      %v3899 = vadd.f32 0.0, %v3898
      %v3900 = vpop.f32.mrb[0].mxu0
      %v3901 = vpop.f32.mrb[0].mxu0
      %v3902 = vadd.f32 0.0, %v3901
      %v3903 = vpop.f32.mrb[0].mxu0
      %3904 = vmatprep.mubr.bf16.mxu0 0
      %3905 = vmatmul.mubr.bf16.gmra.mrb[0].mxu0 %v595
      %v3906 = vpop.f32.mrb[0].mxu0
      %v3907 = vadd.f32 0.0, %v3906
      %v3908 = vpop.f32.mrb[0].mxu0
      %v3909 = vpop.f32.mrb[0].mxu0
      %v3910 = vadd.f32 0.0, %v3909
      %v3911 = vpop.f32.mrb[0].mxu0
      %3912 = vmatprep.mubr.bf16.mxu0 0
      %3913 = vmatmul.mubr.bf16.gmra.mrb[0].mxu0 %v596
      %v3914 = vpop.f32.mrb[0].mxu0
      %v3915 = vadd.f32 0.0, %v3914
      %v3916 = vpop.f32.mrb[0].mxu0
      %v3917 = vpop.f32.mrb[0].mxu0
      %v3918 = vadd.f32 0.0, %v3917
      %v3919 = vpop.f32.mrb[0].mxu0
      %3920 = vmatprep.mubr.bf16.mxu0 0
      %3921 = vmatmul.mubr.bf16.gmra.mrb[0].mxu0 %v597
      %v3922 = vpop.f32.mrb[0].mxu0
      %v3923 = vadd.f32 0.0, %v3922
      %v3924 = vpop.f32.mrb[0].mxu0
      %v3925 = vpop.f32.mrb[0].mxu0
      %v3926 = vadd.f32 0.0, %v3925
      %v3927 = vpop.f32.mrb[0].mxu0
      %3928 = vmatprep.mubr.bf16.mxu0 0
      %3929 = vmatmul.mubr.bf16.gmra.mrb[0].mxu0 %v598
      %v3930 = vpop.f32.mrb[0].mxu0
      %v3931 = vadd.f32 0.0, %v3930
      %v3932 = vpop.f32.mrb[0].mxu0
      %v3933 = vpop.f32.mrb[0].mxu0
      %v3934 = vadd.f32 0.0, %v3933
      %v3935 = vpop.f32.mrb[0].mxu0
      %3936 = vmatprep.mubr.bf16.mxu0 0
      %3937 = vmatmul.mubr.bf16.gmra.mrb[0].mxu0 %v599
      %v3938 = vpop.f32.mrb[0].mxu0
      %v3939 = vadd.f32 0.0, %v3938
      %v3940 = vpop.f32.mrb[0].mxu0
      %v3941 = vpop.f32.mrb[0].mxu0
      %v3942 = vadd.f32 0.0, %v3941
      %v3943 = vpop.f32.mrb[0].mxu0
      %3944 = vmatprep.mubr.bf16.mxu0 0
      %3945 = vmatmul.mubr.bf16.gmra.mrb[0].mxu0 %v600
      %v3946 = vpop.f32.mrb[0].mxu0
      %v3947 = vadd.f32 0.0, %v3946
      %v3948 = vpop.f32.mrb[0].mxu0
      %v3949 = vpop.f32.mrb[0].mxu0
      %v3950 = vadd.f32 0.0, %v3949
      %v3951 = vpop.f32.mrb[0].mxu0
      %3952 = vmatprep.mubr.bf16.mxu0 0
      %3953 = vmatmul.mubr.bf16.gmra.mrb[0].mxu0 %v601
      %v3954 = vpop.f32.mrb[0].mxu0
      %v3955 = vadd.f32 0.0, %v3954
      %v3956 = vpop.f32.mrb[0].mxu0
      %v3957 = vpop.f32.mrb[0].mxu0
      %v3958 = vadd.f32 0.0, %v3957
      %v3959 = vpop.f32.mrb[0].mxu0
      %3960 = vmatprep.mubr.bf16.mxu0 0
      %3961 = vmatmul.mubr.bf16.gmra.mrb[0].mxu0 %v602
      %v3962 = vpop.f32.mrb[0].mxu0
      %v3963 = vadd.f32 0.0, %v3962
      %v3964 = vpop.f32.mrb[0].mxu0
      %v3965 = vpop.f32.mrb[0].mxu0
      %v3966 = vadd.f32 0.0, %v3965
      %v3967 = vpop.f32.mrb[0].mxu0
      %3968 = vmatprep.mubr.bf16.mxu0 0
      %3969 = vmatmul.mubr.bf16.gmra.mrb[0].mxu0 %v603
      %v3970 = vpop.f32.mrb[0].mxu0
      %v3971 = vadd.f32 0.0, %v3970
      %v3972 = vpop.f32.mrb[0].mxu0
      %v3973 = vpop.f32.mrb[0].mxu0
      %v3974 = vadd.f32 0.0, %v3973
      %v3975 = vpop.f32.mrb[0].mxu0
      %3976 = vmatprep.mubr.bf16.mxu0 0
      %3977 = vmatmul.mubr.bf16.gmra.mrb[0].mxu0 %v604
      %v3978 = vpop.f32.mrb[0].mxu0
      %v3979 = vadd.f32 0.0, %v3978
      %v3980 = vpop.f32.mrb[0].mxu0
      %v3981 = vpop.f32.mrb[0].mxu0
      %v3982 = vadd.f32 0.0, %v3981
      %v3983 = vpop.f32.mrb[0].mxu0
      %3984 = vmatprep.mubr.bf16.mxu0 0
      %3985 = vmatmul.mubr.bf16.gmra.mrb[0].mxu0 %v605
      %v3986 = vpop.f32.mrb[0].mxu0
      %v3987 = vadd.f32 0.0, %v3986
      %v3988 = vpop.f32.mrb[0].mxu0
      %v3989 = vpop.f32.mrb[0].mxu0
      %v3990 = vadd.f32 0.0, %v3989
      %v3991 = vpop.f32.mrb[0].mxu0
      %3992 = vmatprep.mubr.bf16.mxu0 0
      %3993 = vmatmul.mubr.bf16.gmra.mrb[0].mxu0 %v606
      %v3994 = vpop.f32.mrb[0].mxu0
      %v3995 = vadd.f32 0.0, %v3994
      %v3996 = vpop.f32.mrb[0].mxu0
      %v3997 = vpop.f32.mrb[0].mxu0
      %v3998 = vadd.f32 0.0, %v3997
      %v3999 = vpop.f32.mrb[0].mxu0
      %4000 = vmatprep.mubr.bf16.mxu0 0
      %4001 = vmatmul.mubr.bf16.gmra.mrb[0].mxu0 %v607
      %v4002 = vpop.f32.mrb[0].mxu0
      %v4003 = vadd.f32 0.0, %v4002
      %v4004 = vpop.f32.mrb[0].mxu0
      %v4005 = vpop.f32.mrb[0].mxu0
      %v4006 = vadd.f32 0.0, %v4005
      %v4007 = vpop.f32.mrb[0].mxu0
      %4008 = vmatprep.mubr.bf16.mxu0 0
      %4009 = vmatmul.mubr.bf16.gmra.mrb[0].mxu0 %v608
      %v4010 = vpop.f32.mrb[0].mxu0
      %v4011 = vadd.f32 0.0, %v4010
      %v4012 = vpop.f32.mrb[0].mxu0
      %v4013 = vpop.f32.mrb[0].mxu0
      %v4014 = vadd.f32 0.0, %v4013
      %v4015 = vpop.f32.mrb[0].mxu0
      %4016 = vmatprep.mubr.bf16.mxu0 0
      %4017 = vmatmul.mubr.bf16.gmra.mrb[0].mxu0 %v609
      %v4018 = vpop.f32.mrb[0].mxu0
      %v4019 = vadd.f32 0.0, %v4018
      %v4020 = vpop.f32.mrb[0].mxu0
      %v4021 = vpop.f32.mrb[0].mxu0
      %v4022 = vadd.f32 0.0, %v4021
      %v4023 = vpop.f32.mrb[0].mxu0
      %4024 = vmatprep.mubr.bf16.mxu0 0
      %4025 = vmatmul.mubr.bf16.gmra.mrb[0].mxu0 %v610
      %v4026 = vpop.f32.mrb[0].mxu0
      %v4027 = vadd.f32 0.0, %v4026
      %v4028 = vpop.f32.mrb[0].mxu0
      %v4029 = vpop.f32.mrb[0].mxu0
      %v4030 = vadd.f32 0.0, %v4029
      %v4031 = vpop.f32.mrb[0].mxu0
      %4032 = vmatprep.mubr.bf16.mxu0 0
      %4033 = vmatmul.mubr.bf16.gmra.mrb[0].mxu0 %v611
      %v4034 = vpop.f32.mrb[0].mxu0
      %v4035 = vadd.f32 0.0, %v4034
      %v4036 = vpop.f32.mrb[0].mxu0
      %v4037 = vpop.f32.mrb[0].mxu0
      %v4038 = vadd.f32 0.0, %v4037
      %v4039 = vpop.f32.mrb[0].mxu0
      %4040 = vmatprep.mubr.bf16.mxu0 0
      %4041 = vmatmul.mubr.bf16.gmra.mrb[0].mxu0 %v612
      %v4042 = vpop.f32.mrb[0].mxu0
      %v4043 = vadd.f32 0.0, %v4042
      %v4044 = vpop.f32.mrb[0].mxu0
      %v4045 = vpop.f32.mrb[0].mxu0
      %v4046 = vadd.f32 0.0, %v4045
      %v4047 = vpop.f32.mrb[0].mxu0
      %4048 = vmatprep.mubr.bf16.mxu0 0
      %4049 = vmatmul.mubr.bf16.gmra.mrb[0].mxu0 %v613
      %v4050 = vpop.f32.mrb[0].mxu0
      %v4051 = vadd.f32 0.0, %v4050
      %v4052 = vpop.f32.mrb[0].mxu0
      %v4053 = vpop.f32.mrb[0].mxu0
      %v4054 = vadd.f32 0.0, %v4053
      %v4055 = vpop.f32.mrb[0].mxu0
      %4056 = vmatprep.mubr.bf16.mxu0 0
      %4057 = vmatmul.mubr.bf16.gmra.mrb[0].mxu0 %v614
      %v4058 = vpop.f32.mrb[0].mxu0
      %v4059 = vadd.f32 0.0, %v4058
      %v4060 = vpop.f32.mrb[0].mxu0
      %v4061 = vpop.f32.mrb[0].mxu0
      %v4062 = vadd.f32 0.0, %v4061
      %v4063 = vpop.f32.mrb[0].mxu0
      %4064 = vmatprep.mubr.bf16.mxu0 0
      %4065 = vmatmul.mubr.bf16.gmra.mrb[0].mxu0 %v615
      %v4066 = vpop.f32.mrb[0].mxu0
      %v4067 = vadd.f32 0.0, %v4066
      %v4068 = vpop.f32.mrb[0].mxu0
      %v4069 = vpop.f32.mrb[0].mxu0
      %v4070 = vadd.f32 0.0, %v4069
      %v4071 = vpop.f32.mrb[0].mxu0
      %4072 = vmatprep.mubr.bf16.mxu0 0
      %4073 = vmatmul.mubr.bf16.gmra.mrb[0].mxu0 %v616
      %v4074 = vpop.f32.mrb[0].mxu0
      %v4075 = vadd.f32 0.0, %v4074
      %v4076 = vpop.f32.mrb[0].mxu0
      %v4077 = vpop.f32.mrb[0].mxu0
      %v4078 = vadd.f32 0.0, %v4077
      %v4079 = vpop.f32.mrb[0].mxu0
      %4080 = vmatprep.mubr.bf16.mxu0 0
      %4081 = vmatmul.mubr.bf16.gmra.mrb[0].mxu0 %v617
      %v4082 = vpop.f32.mrb[0].mxu0
      %v4083 = vadd.f32 0.0, %v4082
      %v4084 = vpop.f32.mrb[0].mxu0
      %v4085 = vpop.f32.mrb[0].mxu0
      %v4086 = vadd.f32 0.0, %v4085
      %v4087 = vpop.f32.mrb[0].mxu0
      %4088 = vmatprep.mubr.bf16.mxu0 0
      %4089 = vmatmul.mubr.bf16.gmra.mrb[0].mxu0 %v618
      %v4090 = vpop.f32.mrb[0].mxu0
      %v4091 = vadd.f32 0.0, %v4090
      %v4092 = vpop.f32.mrb[0].mxu0
      %v4093 = vpop.f32.mrb[0].mxu0
      %v4094 = vadd.f32 0.0, %v4093
      %v4095 = vpop.f32.mrb[0].mxu0
      %4096 = vmatprep.mubr.bf16.mxu0 0
      %4097 = vmatmul.mubr.bf16.gmra.mrb[0].mxu0 %v619
      %v4098 = vpop.f32.mrb[0].mxu0
      %v4099 = vadd.f32 0.0, %v4098
      %v4100 = vpop.f32.mrb[0].mxu0
      %v4101 = vpop.f32.mrb[0].mxu0
      %v4102 = vadd.f32 0.0, %v4101
      %v4103 = vpop.f32.mrb[0].mxu0
      %4104 = vmatprep.mubr.bf16.mxu0 0
      %4105 = vmatmul.mubr.bf16.gmra.mrb[0].mxu0 %v620
      %v4106 = vpop.f32.mrb[0].mxu0
      %v4107 = vadd.f32 0.0, %v4106
      %v4108 = vpop.f32.mrb[0].mxu0
      %v4109 = vpop.f32.mrb[0].mxu0
      %v4110 = vadd.f32 0.0, %v4109
      %v4111 = vpop.f32.mrb[0].mxu0
      %4112 = vmatprep.mubr.bf16.mxu0 0
      %4113 = vmatmul.mubr.bf16.gmra.mrb[0].mxu0 %v621
      %v4114 = vpop.f32.mrb[0].mxu0
      %v4115 = vadd.f32 0.0, %v4114
      %v4116 = vpop.f32.mrb[0].mxu0
      %v4117 = vpop.f32.mrb[0].mxu0
      %v4118 = vadd.f32 0.0, %v4117
      %v4119 = vpop.f32.mrb[0].mxu0
      %4120 = vmatprep.mubr.bf16.mxu0 0
      %4121 = vmatmul.mubr.bf16.gmra.mrb[0].mxu0 %v622
      %v4122 = vpop.f32.mrb[0].mxu0
      %v4123 = vadd.f32 0.0, %v4122
      %v4124 = vpop.f32.mrb[0].mxu0
      %v4125 = vpop.f32.mrb[0].mxu0
      %v4126 = vadd.f32 0.0, %v4125
      %v4127 = vpop.f32.mrb[0].mxu0
      %4128 = vmatprep.mubr.bf16.mxu0 0
      %4129 = vmatmul.mubr.bf16.gmra.mrb[0].mxu0 %v623
      %v4130 = vpop.f32.mrb[0].mxu0
      %v4131 = vadd.f32 0.0, %v4130
      %v4132 = vpop.f32.mrb[0].mxu0
      %v4133 = vpop.f32.mrb[0].mxu0
      %v4134 = vadd.f32 0.0, %v4133
      %v4135 = vpop.f32.mrb[0].mxu0
      %4136 = vmatprep.mubr.bf16.mxu0 0
      %4137 = vmatmul.mubr.bf16.gmra.mrb[0].mxu0 %v624
      %v4138 = vpop.f32.mrb[0].mxu0
      %v4139 = vadd.f32 0.0, %v4138
      %v4140 = vpop.f32.mrb[0].mxu0
      %v4141 = vpop.f32.mrb[0].mxu0
      %v4142 = vadd.f32 0.0, %v4141
      %v4143 = vpop.f32.mrb[0].mxu0
      %4144 = vmatprep.mubr.bf16.mxu0 0
      %4145 = vmatmul.mubr.bf16.gmra.mrb[0].mxu0 %v625
      %v4146 = vpop.f32.mrb[0].mxu0
      %v4147 = vadd.f32 0.0, %v4146
      %v4148 = vpop.f32.mrb[0].mxu0
      %v4149 = vpop.f32.mrb[0].mxu0
      %v4150 = vadd.f32 0.0, %v4149
      %v4151 = vpop.f32.mrb[0].mxu0
      %4152 = vdwg.mxu0
      %v4153 = vadd.f32 %v3543, %v3899
      %v4154 = vadd.f32 %v3546, %v3902
      %v4155 = vadd.f32 %v3551, %v3907
      %v4156 = vadd.f32 %v3554, %v3910
      %v4157 = vadd.f32 %v3559, %v3915
      %v4158 = vadd.f32 %v3562, %v3918
      %v4159 = vadd.f32 %v3567, %v3923
      %v4160 = vadd.f32 %v3570, %v3926
      %v4161 = vadd.f32 %v3575, %v3931
      %v4162 = vadd.f32 %v3578, %v3934
      %v4163 = vadd.f32 %v3583, %v3939
      %v4164 = vadd.f32 %v3586, %v3942
      %v4165 = vadd.f32 %v3591, %v3947
      %v4166 = vadd.f32 %v3594, %v3950
      %v4167 = vadd.f32 %v3599, %v3955
      %v4168 = vadd.f32 %v3602, %v3958
      %v4169 = vadd.f32 %v3607, %v3963
      %v4170 = vadd.f32 %v3610, %v3966
      %v4171 = vadd.f32 %v3615, %v3971
      %v4172 = vadd.f32 %v3618, %v3974
      %v4173 = vadd.f32 %v3623, %v3979
      %v4174 = vadd.f32 %v3626, %v3982
      %v4175 = vadd.f32 %v3631, %v3987
      %v4176 = vadd.f32 %v3634, %v3990
      %v4177 = vadd.f32 %v3639, %v3995
      %v4178 = vadd.f32 %v3642, %v3998
      %v4179 = vadd.f32 %v3647, %v4003
      %v4180 = vadd.f32 %v3650, %v4006
      %v4181 = vadd.f32 %v3655, %v4011
      %v4182 = vadd.f32 %v3658, %v4014
      %v4183 = vadd.f32 %v3663, %v4019
      %v4184 = vadd.f32 %v3666, %v4022
      %v4185 = vadd.f32 %v3671, %v4027
      %v4186 = vadd.f32 %v3674, %v4030
      %v4187 = vadd.f32 %v3679, %v4035
      %v4188 = vadd.f32 %v3682, %v4038
      %v4189 = vadd.f32 %v3687, %v4043
      %v4190 = vadd.f32 %v3690, %v4046
      %v4191 = vadd.f32 %v3695, %v4051
      %v4192 = vadd.f32 %v3698, %v4054
      %v4193 = vadd.f32 %v3703, %v4059
      %v4194 = vadd.f32 %v3706, %v4062
      %v4195 = vadd.f32 %v3711, %v4067
      %v4196 = vadd.f32 %v3714, %v4070
      %v4197 = vadd.f32 %v3719, %v4075
      %v4198 = vadd.f32 %v3722, %v4078
      %v4199 = vadd.f32 %v3727, %v4083
      %v4200 = vadd.f32 %v3730, %v4086
      %v4201 = vadd.f32 %v3735, %v4091
      %v4202 = vadd.f32 %v3738, %v4094
      %v4203 = vadd.f32 %v3743, %v4099
      %v4204 = vadd.f32 %v3746, %v4102
      %v4205 = vadd.f32 %v3751, %v4107
      %v4206 = vadd.f32 %v3754, %v4110
      %v4207 = vadd.f32 %v3759, %v4115
      %v4208 = vadd.f32 %v3762, %v4118
      %v4209 = vadd.f32 %v3767, %v4123
      %v4210 = vadd.f32 %v3770, %v4126
      %v4211 = vadd.f32 %v3775, %v4131
      %v4212 = vadd.f32 %v3778, %v4134
      %v4213 = vadd.f32 %v3783, %v4139
      %v4214 = vadd.f32 %v3786, %v4142
      %v4215 = vadd.f32 %v3791, %v4147
      %v4216 = vadd.f32 %v3794, %v4150
      %v4217 = vrot.slane %v4153, 1
      %v4218 = vrot.slane %v4154, 1
      %v4219 = vrot.slane %v4155, 1
      %v4220 = vrot.slane %v4156, 1
      %v4221 = vrot.slane %v4157, 1
      %v4222 = vrot.slane %v4158, 1
      %v4223 = vrot.slane %v4159, 1
      %v4224 = vrot.slane %v4160, 1
      %v4225 = vrot.slane %v4161, 1
      %v4226 = vrot.slane %v4162, 1
      %v4227 = vrot.slane %v4163, 1
      %v4228 = vrot.slane %v4164, 1
      %v4229 = vrot.slane %v4165, 1
      %v4230 = vrot.slane %v4166, 1
      %v4231 = vrot.slane %v4167, 1
      %v4232 = vrot.slane %v4168, 1
      %v4233 = vrot.slane %v4169, 1
      %v4234 = vrot.slane %v4170, 1
      %v4235 = vrot.slane %v4171, 1
      %v4236 = vrot.slane %v4172, 1
      %v4237 = vrot.slane %v4173, 1
      %v4238 = vrot.slane %v4174, 1
      %v4239 = vrot.slane %v4175, 1
      %v4240 = vrot.slane %v4176, 1
      %v4241 = vrot.slane %v4177, 1
      %v4242 = vrot.slane %v4178, 1
      %v4243 = vrot.slane %v4179, 1
      %v4244 = vrot.slane %v4180, 1
      %v4245 = vrot.slane %v4181, 1
      %v4246 = vrot.slane %v4182, 1
      %v4247 = vrot.slane %v4183, 1
      %v4248 = vrot.slane %v4184, 1
      %v4249 = vrot.slane %v4185, 1
      %v4250 = vrot.slane %v4186, 1
      %v4251 = vrot.slane %v4187, 1
      %v4252 = vrot.slane %v4188, 1
      %v4253 = vrot.slane %v4189, 1
      %v4254 = vrot.slane %v4190, 1
      %v4255 = vrot.slane %v4191, 1
      %v4256 = vrot.slane %v4192, 1
      %v4257 = vrot.slane %v4193, 1
      %v4258 = vrot.slane %v4194, 1
      %v4259 = vrot.slane %v4195, 1
      %v4260 = vrot.slane %v4196, 1
      %v4261 = vrot.slane %v4197, 1
      %v4262 = vrot.slane %v4198, 1
      %v4263 = vrot.slane %v4199, 1
      %v4264 = vrot.slane %v4200, 1
      %v4265 = vrot.slane %v4201, 1
      %v4266 = vrot.slane %v4202, 1
      %v4267 = vrot.slane %v4203, 1
      %v4268 = vrot.slane %v4204, 1
      %v4269 = vrot.slane %v4205, 1
      %v4270 = vrot.slane %v4206, 1
      %v4271 = vrot.slane %v4207, 1
      %v4272 = vrot.slane %v4208, 1
      %v4273 = vrot.slane %v4209, 1
      %v4274 = vrot.slane %v4210, 1
      %v4275 = vrot.slane %v4211, 1
      %v4276 = vrot.slane %v4212, 1
      %v4277 = vrot.slane %v4213, 1
      %v4278 = vrot.slane %v4214, 1
      %v4279 = vrot.slane %v4215, 1
      %v4280 = vrot.slane %v4216, 1
      %vm4281 = vcmp.lt.s32.totalorder %v1823, 7
      %v4282 = vsel %vm4281, %v4279, %v4280
      %v4283 = vsel %vm4281, %v4278, %v4279
      %v4284 = vsel %vm4281, %v4277, %v4278
      %v4285 = vsel %vm4281, %v4276, %v4277
      %v4286 = vsel %vm4281, %v4275, %v4276
      %v4287 = vsel %vm4281, %v4274, %v4275
      %v4288 = vsel %vm4281, %v4273, %v4274
      %v4289 = vsel %vm4281, %v4272, %v4273
      %v4290 = vsel %vm4281, %v4271, %v4272
      %v4291 = vsel %vm4281, %v4270, %v4271
      %v4292 = vsel %vm4281, %v4269, %v4270
      %v4293 = vsel %vm4281, %v4268, %v4269
      %v4294 = vsel %vm4281, %v4267, %v4268
      %v4295 = vsel %vm4281, %v4266, %v4267
      %v4296 = vsel %vm4281, %v4265, %v4266
      %v4297 = vsel %vm4281, %v4264, %v4265
      %v4298 = vsel %vm4281, %v4263, %v4264
      %v4299 = vsel %vm4281, %v4262, %v4263
      %v4300 = vsel %vm4281, %v4261, %v4262
      %v4301 = vsel %vm4281, %v4260, %v4261
      %v4302 = vsel %vm4281, %v4259, %v4260
      %v4303 = vsel %vm4281, %v4258, %v4259
      %v4304 = vsel %vm4281, %v4257, %v4258
      %v4305 = vsel %vm4281, %v4256, %v4257
      %v4306 = vsel %vm4281, %v4255, %v4256
      %v4307 = vsel %vm4281, %v4254, %v4255
      %v4308 = vsel %vm4281, %v4253, %v4254
      %v4309 = vsel %vm4281, %v4252, %v4253
      %v4310 = vsel %vm4281, %v4251, %v4252
      %v4311 = vsel %vm4281, %v4250, %v4251
      %v4312 = vsel %vm4281, %v4249, %v4250
      %v4313 = vsel %vm4281, %v4248, %v4249
      %v4314 = vsel %vm4281, %v4247, %v4248
      %v4315 = vsel %vm4281, %v4246, %v4247
      %v4316 = vsel %vm4281, %v4245, %v4246
      %v4317 = vsel %vm4281, %v4244, %v4245
      %v4318 = vsel %vm4281, %v4243, %v4244
      %v4319 = vsel %vm4281, %v4242, %v4243
      %v4320 = vsel %vm4281, %v4241, %v4242
      %v4321 = vsel %vm4281, %v4240, %v4241
      %v4322 = vsel %vm4281, %v4239, %v4240
      %v4323 = vsel %vm4281, %v4238, %v4239
      %v4324 = vsel %vm4281, %v4237, %v4238
      %v4325 = vsel %vm4281, %v4236, %v4237
      %v4326 = vsel %vm4281, %v4235, %v4236
      %v4327 = vsel %vm4281, %v4234, %v4235
      %v4328 = vsel %vm4281, %v4233, %v4234
      %v4329 = vsel %vm4281, %v4232, %v4233
      %v4330 = vsel %vm4281, %v4231, %v4232
      %v4331 = vsel %vm4281, %v4230, %v4231
      %v4332 = vsel %vm4281, %v4229, %v4230
      %v4333 = vsel %vm4281, %v4228, %v4229
      %v4334 = vsel %vm4281, %v4227, %v4228
      %v4335 = vsel %vm4281, %v4226, %v4227
      %v4336 = vsel %vm4281, %v4225, %v4226
      %v4337 = vsel %vm4281, %v4224, %v4225
      %v4338 = vsel %vm4281, %v4223, %v4224
      %v4339 = vsel %vm4281, %v4222, %v4223
      %v4340 = vsel %vm4281, %v4221, %v4222
      %v4341 = vsel %vm4281, %v4220, %v4221
      %v4342 = vsel %vm4281, %v4219, %v4220
      %v4343 = vsel %vm4281, %v4218, %v4219
      %v4344 = vsel %vm4281, %v4217, %v4218
      %v4345 = vsel %vm4281, %v4280, %v4217
      %v4346 = vadd.f32 %v3021, %v4344
      %v4347 = vadd.f32 %v3022, %v4343
      %v4348 = vadd.f32 %v3023, %v4342
      %v4349 = vadd.f32 %v3024, %v4341
      %v4350 = vadd.f32 %v3025, %v4340
      %v4351 = vadd.f32 %v3026, %v4339
      %v4352 = vadd.f32 %v3027, %v4338
      %v4353 = vadd.f32 %v3028, %v4337
      %v4354 = vadd.f32 %v3029, %v4336
      %v4355 = vadd.f32 %v3030, %v4335
      %v4356 = vadd.f32 %v3031, %v4334
      %v4357 = vadd.f32 %v3032, %v4333
      %v4358 = vadd.f32 %v3033, %v4332
      %v4359 = vadd.f32 %v3034, %v4331
      %v4360 = vadd.f32 %v3035, %v4330
      %v4361 = vadd.f32 %v3036, %v4329
      %v4362 = vadd.f32 %v3037, %v4328
      %v4363 = vadd.f32 %v3038, %v4327
      %v4364 = vadd.f32 %v3039, %v4326
      %v4365 = vadd.f32 %v3040, %v4325
      %v4366 = vadd.f32 %v3041, %v4324
      %v4367 = vadd.f32 %v3042, %v4323
      %v4368 = vadd.f32 %v3043, %v4322
      %v4369 = vadd.f32 %v3044, %v4321
      %v4370 = vadd.f32 %v3045, %v4320
      %v4371 = vadd.f32 %v3046, %v4319
      %v4372 = vadd.f32 %v3047, %v4318
      %v4373 = vadd.f32 %v3048, %v4317
      %v4374 = vadd.f32 %v3049, %v4316
      %v4375 = vadd.f32 %v3050, %v4315
      %v4376 = vadd.f32 %v3051, %v4314
      %v4377 = vadd.f32 %v3052, %v4313
      %v4378 = vadd.f32 %v3053, %v4312
      %v4379 = vadd.f32 %v3054, %v4311
      %v4380 = vadd.f32 %v3055, %v4310
      %v4381 = vadd.f32 %v3056, %v4309
      %v4382 = vadd.f32 %v3057, %v4308
      %v4383 = vadd.f32 %v3058, %v4307
      %v4384 = vadd.f32 %v3059, %v4306
      %v4385 = vadd.f32 %v3060, %v4305
      %v4386 = vadd.f32 %v3061, %v4304
      %v4387 = vadd.f32 %v3062, %v4303
      %v4388 = vadd.f32 %v3063, %v4302
      %v4389 = vadd.f32 %v3064, %v4301
      %v4390 = vadd.f32 %v3065, %v4300
      %v4391 = vadd.f32 %v3066, %v4299
      %v4392 = vadd.f32 %v3067, %v4298
      %v4393 = vadd.f32 %v3068, %v4297
      %v4394 = vadd.f32 %v3069, %v4296
      %v4395 = vadd.f32 %v3070, %v4295
      %v4396 = vadd.f32 %v3071, %v4294
      %v4397 = vadd.f32 %v3072, %v4293
      %v4398 = vadd.f32 %v3073, %v4292
      %v4399 = vadd.f32 %v3074, %v4291
      %v4400 = vadd.f32 %v3075, %v4290
      %v4401 = vadd.f32 %v3076, %v4289
      %v4402 = vadd.f32 %v3077, %v4288
      %v4403 = vadd.f32 %v3078, %v4287
      %v4404 = vadd.f32 %v3079, %v4286
      %v4405 = vadd.f32 %v3080, %v4285
      %v4406 = vadd.f32 %v3081, %v4284
      %v4407 = vadd.f32 %v3082, %v4283
      %v4408 = vadd.f32 %v3083, %v4282
      %v4409 = vadd.f32 %v3084, %v4345
      %v4410 = vld [vmem:[#allocation3] sm:$0xff]
      %v4411 = vld [vmem:[#allocation3 + $0x8] sm:$0xff]
      %v4412 = vld [vmem:[#allocation3 + $0x10] sm:$0xff]
      %v4413 = vld [vmem:[#allocation3 + $0x18] sm:$0xff]
      %v4414 = vld [vmem:[#allocation3 + $0x20] sm:$0xff]
      %v4415 = vld [vmem:[#allocation3 + $0x28] sm:$0xff]
      %v4416 = vld [vmem:[#allocation3 + $0x30] sm:$0xff]
      %v4417 = vld [vmem:[#allocation3 + $0x38] sm:$0xff]
      %v4418 = vld [vmem:[#allocation3 + $0x40] sm:$0xff]
      %v4419 = vld [vmem:[#allocation3 + $0x48] sm:$0xff]
      %v4420 = vld [vmem:[#allocation3 + $0x50] sm:$0xff]
      %v4421 = vld [vmem:[#allocation3 + $0x58] sm:$0xff]
      %v4422 = vld [vmem:[#allocation3 + $0x60] sm:$0xff]
      %v4423 = vld [vmem:[#allocation3 + $0x68] sm:$0xff]
      %v4424 = vld [vmem:[#allocation3 + $0x70] sm:$0xff]
      %v4425 = vld [vmem:[#allocation3 + $0x78] sm:$0xff]
      %v4426 = vld [vmem:[#allocation3 + $0x80] sm:$0xff]
      %v4427 = vld [vmem:[#allocation3 + $0x88] sm:$0xff]
      %v4428 = vld [vmem:[#allocation3 + $0x90] sm:$0xff]
      %v4429 = vld [vmem:[#allocation3 + $0x98] sm:$0xff]
      %v4430 = vld [vmem:[#allocation3 + $0xa0] sm:$0xff]
      %v4431 = vld [vmem:[#allocation3 + $0xa8] sm:$0xff]
      %v4432 = vld [vmem:[#allocation3 + $0xb0] sm:$0xff]
      %v4433 = vld [vmem:[#allocation3 + $0xb8] sm:$0xff]
      %v4434 = vld [vmem:[#allocation3 + $0xc0] sm:$0xff]
      %v4435 = vld [vmem:[#allocation3 + $0xc8] sm:$0xff]
      %v4436 = vld [vmem:[#allocation3 + $0xd0] sm:$0xff]
      %v4437 = vld [vmem:[#allocation3 + $0xd8] sm:$0xff]
      %v4438 = vld [vmem:[#allocation3 + $0xe0] sm:$0xff]
      %v4439 = vld [vmem:[#allocation3 + $0xe8] sm:$0xff]
      %v4440 = vld [vmem:[#allocation3 + $0xf0] sm:$0xff]
      %v4441 = vld [vmem:[#allocation3 + $0xf8] sm:$0xff]
      %v4442 = vld [vmem:[#allocation3 + $0x100] sm:$0xff]
      %v4443 = vld [vmem:[#allocation3 + $0x108] sm:$0xff]
      %v4444 = vld [vmem:[#allocation3 + $0x110] sm:$0xff]
      %v4445 = vld [vmem:[#allocation3 + $0x118] sm:$0xff]
      %v4446 = vld [vmem:[#allocation3 + $0x120] sm:$0xff]
      %v4447 = vld [vmem:[#allocation3 + $0x128] sm:$0xff]
      %v4448 = vld [vmem:[#allocation3 + $0x130] sm:$0xff]
      %v4449 = vld [vmem:[#allocation3 + $0x138] sm:$0xff]
      %v4450 = vld [vmem:[#allocation3 + $0x140] sm:$0xff]
      %v4451 = vld [vmem:[#allocation3 + $0x148] sm:$0xff]
      %v4452 = vld [vmem:[#allocation3 + $0x150] sm:$0xff]
      %v4453 = vld [vmem:[#allocation3 + $0x158] sm:$0xff]
      %v4454 = vld [vmem:[#allocation3 + $0x160] sm:$0xff]
      %v4455 = vld [vmem:[#allocation3 + $0x168] sm:$0xff]
      %v4456 = vld [vmem:[#allocation3 + $0x170] sm:$0xff]
      %v4457 = vld [vmem:[#allocation3 + $0x178] sm:$0xff]
      %v4458 = vld [vmem:[#allocation3 + $0x180] sm:$0xff]
      %v4459 = vld [vmem:[#allocation3 + $0x188] sm:$0xff]
      %v4460 = vld [vmem:[#allocation3 + $0x190] sm:$0xff]
      %v4461 = vld [vmem:[#allocation3 + $0x198] sm:$0xff]
      %v4462 = vld [vmem:[#allocation3 + $0x1a0] sm:$0xff]
      %v4463 = vld [vmem:[#allocation3 + $0x1a8] sm:$0xff]
      %v4464 = vld [vmem:[#allocation3 + $0x1b0] sm:$0xff]
      %v4465 = vld [vmem:[#allocation3 + $0x1b8] sm:$0xff]
      %v4466 = vld [vmem:[#allocation3 + $0x1c0] sm:$0xff]
      %v4467 = vld [vmem:[#allocation3 + $0x1c8] sm:$0xff]
      %v4468 = vld [vmem:[#allocation3 + $0x1d0] sm:$0xff]
      %v4469 = vld [vmem:[#allocation3 + $0x1d8] sm:$0xff]
      %v4470 = vld [vmem:[#allocation3 + $0x1e0] sm:$0xff]
      %v4471 = vld [vmem:[#allocation3 + $0x1e8] sm:$0xff]
      %v4472 = vld [vmem:[#allocation3 + $0x1f0] sm:$0xff]
      %v4473 = vld [vmem:[#allocation3 + $0x1f8] sm:$0xff]
      %v4474 = vadd.f32 %v4410, %v4346
      %v4475 = vadd.f32 %v4411, %v4347
      %v4476 = vadd.f32 %v4412, %v4348
      %v4477 = vadd.f32 %v4413, %v4349
      %v4478 = vadd.f32 %v4414, %v4350
      %v4479 = vadd.f32 %v4415, %v4351
      %v4480 = vadd.f32 %v4416, %v4352
      %v4481 = vadd.f32 %v4417, %v4353
      %v4482 = vadd.f32 %v4418, %v4354
      %v4483 = vadd.f32 %v4419, %v4355
      %v4484 = vadd.f32 %v4420, %v4356
      %v4485 = vadd.f32 %v4421, %v4357
      %v4486 = vadd.f32 %v4422, %v4358
      %v4487 = vadd.f32 %v4423, %v4359
      %v4488 = vadd.f32 %v4424, %v4360
      %v4489 = vadd.f32 %v4425, %v4361
      %v4490 = vadd.f32 %v4426, %v4362
      %v4491 = vadd.f32 %v4427, %v4363
      %v4492 = vadd.f32 %v4428, %v4364
      %v4493 = vadd.f32 %v4429, %v4365
      %v4494 = vadd.f32 %v4430, %v4366
      %v4495 = vadd.f32 %v4431, %v4367
      %v4496 = vadd.f32 %v4432, %v4368
      %v4497 = vadd.f32 %v4433, %v4369
      %v4498 = vadd.f32 %v4434, %v4370
      %v4499 = vadd.f32 %v4435, %v4371
      %v4500 = vadd.f32 %v4436, %v4372
      %v4501 = vadd.f32 %v4437, %v4373
      %v4502 = vadd.f32 %v4438, %v4374
      %v4503 = vadd.f32 %v4439, %v4375
      %v4504 = vadd.f32 %v4440, %v4376
      %v4505 = vadd.f32 %v4441, %v4377
      %v4506 = vadd.f32 %v4442, %v4378
      %v4507 = vadd.f32 %v4443, %v4379
      %v4508 = vadd.f32 %v4444, %v4380
      %v4509 = vadd.f32 %v4445, %v4381
      %v4510 = vadd.f32 %v4446, %v4382
      %v4511 = vadd.f32 %v4447, %v4383
      %v4512 = vadd.f32 %v4448, %v4384
      %v4513 = vadd.f32 %v4449, %v4385
      %v4514 = vadd.f32 %v4450, %v4386
      %v4515 = vadd.f32 %v4451, %v4387
      %v4516 = vadd.f32 %v4452, %v4388
      %v4517 = vadd.f32 %v4453, %v4389
      %v4518 = vadd.f32 %v4454, %v4390
      %v4519 = vadd.f32 %v4455, %v4391
      %v4520 = vadd.f32 %v4456, %v4392
      %v4521 = vadd.f32 %v4457, %v4393
      %v4522 = vadd.f32 %v4458, %v4394
      %v4523 = vadd.f32 %v4459, %v4395
      %v4524 = vadd.f32 %v4460, %v4396
      %v4525 = vadd.f32 %v4461, %v4397
      %v4526 = vadd.f32 %v4462, %v4398
      %v4527 = vadd.f32 %v4463, %v4399
      %v4528 = vadd.f32 %v4464, %v4400
      %v4529 = vadd.f32 %v4465, %v4401
      %v4530 = vadd.f32 %v4466, %v4402
      %v4531 = vadd.f32 %v4467, %v4403
      %v4532 = vadd.f32 %v4468, %v4404
      %v4533 = vadd.f32 %v4469, %v4405
      %v4534 = vadd.f32 %v4470, %v4406
      %v4535 = vadd.f32 %v4471, %v4407
      %v4536 = vadd.f32 %v4472, %v4408
      %v4537 = vadd.f32 %v4473, %v4409
      %4538 = vst [vmem:[#allocation3] sm:$0xff] %v4474
      %4539 = vst [vmem:[#allocation3 + $0x8] sm:$0xff] %v4475
      %4540 = vst [vmem:[#allocation3 + $0x10] sm:$0xff] %v4476
      %4541 = vst [vmem:[#allocation3 + $0x18] sm:$0xff] %v4477
      %4542 = vst [vmem:[#allocation3 + $0x20] sm:$0xff] %v4478
      %4543 = vst [vmem:[#allocation3 + $0x28] sm:$0xff] %v4479
      %4544 = vst [vmem:[#allocation3 + $0x30] sm:$0xff] %v4480
      %4545 = vst [vmem:[#allocation3 + $0x38] sm:$0xff] %v4481
      %4546 = vst [vmem:[#allocation3 + $0x40] sm:$0xff] %v4482
      %4547 = vst [vmem:[#allocation3 + $0x48] sm:$0xff] %v4483
      %4548 = vst [vmem:[#allocation3 + $0x50] sm:$0xff] %v4484
      %4549 = vst [vmem:[#allocation3 + $0x58] sm:$0xff] %v4485
      %4550 = vst [vmem:[#allocation3 + $0x60] sm:$0xff] %v4486
      %4551 = vst [vmem:[#allocation3 + $0x68] sm:$0xff] %v4487
      %4552 = vst [vmem:[#allocation3 + $0x70] sm:$0xff] %v4488
      %4553 = vst [vmem:[#allocation3 + $0x78] sm:$0xff] %v4489
      %4554 = vst [vmem:[#allocation3 + $0x80] sm:$0xff] %v4490
      %4555 = vst [vmem:[#allocation3 + $0x88] sm:$0xff] %v4491
      %4556 = vst [vmem:[#allocation3 + $0x90] sm:$0xff] %v4492
      %4557 = vst [vmem:[#allocation3 + $0x98] sm:$0xff] %v4493
      %4558 = vst [vmem:[#allocation3 + $0xa0] sm:$0xff] %v4494
      %4559 = vst [vmem:[#allocation3 + $0xa8] sm:$0xff] %v4495
      %4560 = vst [vmem:[#allocation3 + $0xb0] sm:$0xff] %v4496
      %4561 = vst [vmem:[#allocation3 + $0xb8] sm:$0xff] %v4497
      %4562 = vst [vmem:[#allocation3 + $0xc0] sm:$0xff] %v4498
      %4563 = vst [vmem:[#allocation3 + $0xc8] sm:$0xff] %v4499
      %4564 = vst [vmem:[#allocation3 + $0xd0] sm:$0xff] %v4500
      %4565 = vst [vmem:[#allocation3 + $0xd8] sm:$0xff] %v4501
      %4566 = vst [vmem:[#allocation3 + $0xe0] sm:$0xff] %v4502
      %4567 = vst [vmem:[#allocation3 + $0xe8] sm:$0xff] %v4503
      %4568 = vst [vmem:[#allocation3 + $0xf0] sm:$0xff] %v4504
      %4569 = vst [vmem:[#allocation3 + $0xf8] sm:$0xff] %v4505
      %4570 = vst [vmem:[#allocation3 + $0x100] sm:$0xff] %v4506
      %4571 = vst [vmem:[#allocation3 + $0x108] sm:$0xff] %v4507
      %4572 = vst [vmem:[#allocation3 + $0x110] sm:$0xff] %v4508
      %4573 = vst [vmem:[#allocation3 + $0x118] sm:$0xff] %v4509
      %4574 = vst [vmem:[#allocation3 + $0x120] sm:$0xff] %v4510
      %4575 = vst [vmem:[#allocation3 + $0x128] sm:$0xff] %v4511
      %4576 = vst [vmem:[#allocation3 + $0x130] sm:$0xff] %v4512
      %4577 = vst [vmem:[#allocation3 + $0x138] sm:$0xff] %v4513
      %4578 = vst [vmem:[#allocation3 + $0x140] sm:$0xff] %v4514
      %4579 = vst [vmem:[#allocation3 + $0x148] sm:$0xff] %v4515
      %4580 = vst [vmem:[#allocation3 + $0x150] sm:$0xff] %v4516
      %4581 = vst [vmem:[#allocation3 + $0x158] sm:$0xff] %v4517
      %4582 = vst [vmem:[#allocation3 + $0x160] sm:$0xff] %v4518
      %4583 = vst [vmem:[#allocation3 + $0x168] sm:$0xff] %v4519
      %4584 = vst [vmem:[#allocation3 + $0x170] sm:$0xff] %v4520
      %4585 = vst [vmem:[#allocation3 + $0x178] sm:$0xff] %v4521
      %4586 = vst [vmem:[#allocation3 + $0x180] sm:$0xff] %v4522
      %4587 = vst [vmem:[#allocation3 + $0x188] sm:$0xff] %v4523
      %4588 = vst [vmem:[#allocation3 + $0x190] sm:$0xff] %v4524
      %4589 = vst [vmem:[#allocation3 + $0x198] sm:$0xff] %v4525
      %4590 = vst [vmem:[#allocation3 + $0x1a0] sm:$0xff] %v4526
      %4591 = vst [vmem:[#allocation3 + $0x1a8] sm:$0xff] %v4527
      %4592 = vst [vmem:[#allocation3 + $0x1b0] sm:$0xff] %v4528
      %4593 = vst [vmem:[#allocation3 + $0x1b8] sm:$0xff] %v4529
      %4594 = vst [vmem:[#allocation3 + $0x1c0] sm:$0xff] %v4530
      %4595 = vst [vmem:[#allocation3 + $0x1c8] sm:$0xff] %v4531
      %4596 = vst [vmem:[#allocation3 + $0x1d0] sm:$0xff] %v4532
      %4597 = vst [vmem:[#allocation3 + $0x1d8] sm:$0xff] %v4533
      %4598 = vst [vmem:[#allocation3 + $0x1e0] sm:$0xff] %v4534
      %4599 = vst [vmem:[#allocation3 + $0x1e8] sm:$0xff] %v4535
      %4600 = vst [vmem:[#allocation3 + $0x1f0] sm:$0xff] %v4536
      %4601 = vst [vmem:[#allocation3 + $0x1f8] sm:$0xff] %v4537
      // Predicated region
      $region109: #{_lambda_.1} parent=31 // pred_check
        %p4602 = pneg %p197
      $region110: #{_lambda_.1} parent=31 // pred_check_branch
        %4604 = sbr.rel (%p4602) target = $region112
      $region111: #{_lambda_.1} parent=31 // pred_region
        %v4605 = vld [vmem:[#allocation3] sm:$0xff]
        %v4606 = vld [vmem:[#allocation3 + $0x8] sm:$0xff]
        %v4607 = vld [vmem:[#allocation3 + $0x10] sm:$0xff]
        %v4608 = vld [vmem:[#allocation3 + $0x18] sm:$0xff]
        %v4609 = vld [vmem:[#allocation3 + $0x20] sm:$0xff]
        %v4610 = vld [vmem:[#allocation3 + $0x28] sm:$0xff]
        %v4611 = vld [vmem:[#allocation3 + $0x30] sm:$0xff]
        %v4612 = vld [vmem:[#allocation3 + $0x38] sm:$0xff]
        %v4613 = vld [vmem:[#allocation3 + $0x40] sm:$0xff]
        %v4614 = vld [vmem:[#allocation3 + $0x48] sm:$0xff]
        %v4615 = vld [vmem:[#allocation3 + $0x50] sm:$0xff]
        %v4616 = vld [vmem:[#allocation3 + $0x58] sm:$0xff]
        %v4617 = vld [vmem:[#allocation3 + $0x60] sm:$0xff]
        %v4618 = vld [vmem:[#allocation3 + $0x68] sm:$0xff]
        %v4619 = vld [vmem:[#allocation3 + $0x70] sm:$0xff]
        %v4620 = vld [vmem:[#allocation3 + $0x78] sm:$0xff]
        %v4621 = vld [vmem:[#allocation3 + $0x80] sm:$0xff]
        %v4622 = vld [vmem:[#allocation3 + $0x88] sm:$0xff]
        %v4623 = vld [vmem:[#allocation3 + $0x90] sm:$0xff]
        %v4624 = vld [vmem:[#allocation3 + $0x98] sm:$0xff]
        %v4625 = vld [vmem:[#allocation3 + $0xa0] sm:$0xff]
        %v4626 = vld [vmem:[#allocation3 + $0xa8] sm:$0xff]
        %v4627 = vld [vmem:[#allocation3 + $0xb0] sm:$0xff]
        %v4628 = vld [vmem:[#allocation3 + $0xb8] sm:$0xff]
        %v4629 = vld [vmem:[#allocation3 + $0xc0] sm:$0xff]
        %v4630 = vld [vmem:[#allocation3 + $0xc8] sm:$0xff]
        %v4631 = vld [vmem:[#allocation3 + $0xd0] sm:$0xff]
        %v4632 = vld [vmem:[#allocation3 + $0xd8] sm:$0xff]
        %v4633 = vld [vmem:[#allocation3 + $0xe0] sm:$0xff]
        %v4634 = vld [vmem:[#allocation3 + $0xe8] sm:$0xff]
        %v4635 = vld [vmem:[#allocation3 + $0xf0] sm:$0xff]
        %v4636 = vld [vmem:[#allocation3 + $0xf8] sm:$0xff]
        %v4637 = vld [vmem:[#allocation3 + $0x100] sm:$0xff]
        %v4638 = vld [vmem:[#allocation3 + $0x108] sm:$0xff]
        %v4639 = vld [vmem:[#allocation3 + $0x110] sm:$0xff]
        %v4640 = vld [vmem:[#allocation3 + $0x118] sm:$0xff]
        %v4641 = vld [vmem:[#allocation3 + $0x120] sm:$0xff]
        %v4642 = vld [vmem:[#allocation3 + $0x128] sm:$0xff]
        %v4643 = vld [vmem:[#allocation3 + $0x130] sm:$0xff]
        %v4644 = vld [vmem:[#allocation3 + $0x138] sm:$0xff]
        %v4645 = vld [vmem:[#allocation3 + $0x140] sm:$0xff]
        %v4646 = vld [vmem:[#allocation3 + $0x148] sm:$0xff]
        %v4647 = vld [vmem:[#allocation3 + $0x150] sm:$0xff]
        %v4648 = vld [vmem:[#allocation3 + $0x158] sm:$0xff]
        %v4649 = vld [vmem:[#allocation3 + $0x160] sm:$0xff]
        %v4650 = vld [vmem:[#allocation3 + $0x168] sm:$0xff]
        %v4651 = vld [vmem:[#allocation3 + $0x170] sm:$0xff]
        %v4652 = vld [vmem:[#allocation3 + $0x178] sm:$0xff]
        %v4653 = vld [vmem:[#allocation3 + $0x180] sm:$0xff]
        %v4654 = vld [vmem:[#allocation3 + $0x188] sm:$0xff]
        %v4655 = vld [vmem:[#allocation3 + $0x190] sm:$0xff]
        %v4656 = vld [vmem:[#allocation3 + $0x198] sm:$0xff]
        %v4657 = vld [vmem:[#allocation3 + $0x1a0] sm:$0xff]
        %v4658 = vld [vmem:[#allocation3 + $0x1a8] sm:$0xff]
        %v4659 = vld [vmem:[#allocation3 + $0x1b0] sm:$0xff]
        %v4660 = vld [vmem:[#allocation3 + $0x1b8] sm:$0xff]
        %v4661 = vld [vmem:[#allocation3 + $0x1c0] sm:$0xff]
        %v4662 = vld [vmem:[#allocation3 + $0x1c8] sm:$0xff]
        %v4663 = vld [vmem:[#allocation3 + $0x1d0] sm:$0xff]
        %v4664 = vld [vmem:[#allocation3 + $0x1d8] sm:$0xff]
        %v4665 = vld [vmem:[#allocation3 + $0x1e0] sm:$0xff]
        %v4666 = vld [vmem:[#allocation3 + $0x1e8] sm:$0xff]
        %v4667 = vld [vmem:[#allocation3 + $0x1f0] sm:$0xff]
        %v4668 = vld [vmem:[#allocation3 + $0x1f8] sm:$0xff]
        %v4669 = vld [vmem:[%s2] sm:$0x1]
        %v4671 = vlaneseq
        %v4672 = vshrl.u32 %v4671, 7
        %v4673 = vsub.s32 0, %v4672
        %v4674 = vrot.slane %v4669, %v4673
        %v4676 = vmul.f32 %v4605, %v4674
        %v4677 = vmul.f32 %v4606, %v4674
        %v4678 = vmul.f32 %v4607, %v4674
        %v4679 = vmul.f32 %v4608, %v4674
        %v4680 = vmul.f32 %v4609, %v4674
        %v4681 = vmul.f32 %v4610, %v4674
        %v4682 = vmul.f32 %v4611, %v4674
        %v4683 = vmul.f32 %v4612, %v4674
        %v4684 = vmul.f32 %v4613, %v4674
        %v4685 = vmul.f32 %v4614, %v4674
        %v4686 = vmul.f32 %v4615, %v4674
        %v4687 = vmul.f32 %v4616, %v4674
        %v4688 = vmul.f32 %v4617, %v4674
        %v4689 = vmul.f32 %v4618, %v4674
        %v4690 = vmul.f32 %v4619, %v4674
        %v4691 = vmul.f32 %v4620, %v4674
        %v4692 = vmul.f32 %v4621, %v4674
        %v4693 = vmul.f32 %v4622, %v4674
        %v4694 = vmul.f32 %v4623, %v4674
        %v4695 = vmul.f32 %v4624, %v4674
        %v4696 = vmul.f32 %v4625, %v4674
        %v4697 = vmul.f32 %v4626, %v4674
        %v4698 = vmul.f32 %v4627, %v4674
        %v4699 = vmul.f32 %v4628, %v4674
        %v4700 = vmul.f32 %v4629, %v4674
        %v4701 = vmul.f32 %v4630, %v4674
        %v4702 = vmul.f32 %v4631, %v4674
        %v4703 = vmul.f32 %v4632, %v4674
        %v4704 = vmul.f32 %v4633, %v4674
        %v4705 = vmul.f32 %v4634, %v4674
        %v4706 = vmul.f32 %v4635, %v4674
        %v4707 = vmul.f32 %v4636, %v4674
        %v4708 = vmul.f32 %v4637, %v4674
        %v4709 = vmul.f32 %v4638, %v4674
        %v4710 = vmul.f32 %v4639, %v4674
        %v4711 = vmul.f32 %v4640, %v4674
        %v4712 = vmul.f32 %v4641, %v4674
        %v4713 = vmul.f32 %v4642, %v4674
        %v4714 = vmul.f32 %v4643, %v4674
        %v4715 = vmul.f32 %v4644, %v4674
        %v4716 = vmul.f32 %v4645, %v4674
        %v4717 = vmul.f32 %v4646, %v4674
        %v4718 = vmul.f32 %v4647, %v4674
        %v4719 = vmul.f32 %v4648, %v4674
        %v4720 = vmul.f32 %v4649, %v4674
        %v4721 = vmul.f32 %v4650, %v4674
        %v4722 = vmul.f32 %v4651, %v4674
        %v4723 = vmul.f32 %v4652, %v4674
        %v4724 = vmul.f32 %v4653, %v4674
        %v4725 = vmul.f32 %v4654, %v4674
        %v4726 = vmul.f32 %v4655, %v4674
        %v4727 = vmul.f32 %v4656, %v4674
        %v4728 = vmul.f32 %v4657, %v4674
        %v4729 = vmul.f32 %v4658, %v4674
        %v4730 = vmul.f32 %v4659, %v4674
        %v4731 = vmul.f32 %v4660, %v4674
        %v4732 = vmul.f32 %v4661, %v4674
        %v4733 = vmul.f32 %v4662, %v4674
        %v4734 = vmul.f32 %v4663, %v4674
        %v4735 = vmul.f32 %v4664, %v4674
        %v4736 = vmul.f32 %v4665, %v4674
        %v4737 = vmul.f32 %v4666, %v4674
        %v4738 = vmul.f32 %v4667, %v4674
        %v4739 = vmul.f32 %v4668, %v4674
        %v4740 = vld [vmem:[%s3] sm:$0x1]
        %v4742 = vlaneseq
        %v4743 = vshrl.u32 %v4742, 7
        %v4744 = vsub.s32 0, %v4743
        %v4745 = vrot.slane %v4740, %v4744
        %v4747 = vadd.f32 %v4676, %v4745
        %v4748 = vadd.f32 %v4677, %v4745
        %v4749 = vadd.f32 %v4678, %v4745
        %v4750 = vadd.f32 %v4679, %v4745
        %v4751 = vadd.f32 %v4680, %v4745
        %v4752 = vadd.f32 %v4681, %v4745
        %v4753 = vadd.f32 %v4682, %v4745
        %v4754 = vadd.f32 %v4683, %v4745
        %v4755 = vadd.f32 %v4684, %v4745
        %v4756 = vadd.f32 %v4685, %v4745
        %v4757 = vadd.f32 %v4686, %v4745
        %v4758 = vadd.f32 %v4687, %v4745
        %v4759 = vadd.f32 %v4688, %v4745
        %v4760 = vadd.f32 %v4689, %v4745
        %v4761 = vadd.f32 %v4690, %v4745
        %v4762 = vadd.f32 %v4691, %v4745
        %v4763 = vadd.f32 %v4692, %v4745
        %v4764 = vadd.f32 %v4693, %v4745
        %v4765 = vadd.f32 %v4694, %v4745
        %v4766 = vadd.f32 %v4695, %v4745
        %v4767 = vadd.f32 %v4696, %v4745
        %v4768 = vadd.f32 %v4697, %v4745
        %v4769 = vadd.f32 %v4698, %v4745
        %v4770 = vadd.f32 %v4699, %v4745
        %v4771 = vadd.f32 %v4700, %v4745
        %v4772 = vadd.f32 %v4701, %v4745
        %v4773 = vadd.f32 %v4702, %v4745
        %v4774 = vadd.f32 %v4703, %v4745
        %v4775 = vadd.f32 %v4704, %v4745
        %v4776 = vadd.f32 %v4705, %v4745
        %v4777 = vadd.f32 %v4706, %v4745
        %v4778 = vadd.f32 %v4707, %v4745
        %v4779 = vadd.f32 %v4708, %v4745
        %v4780 = vadd.f32 %v4709, %v4745
        %v4781 = vadd.f32 %v4710, %v4745
        %v4782 = vadd.f32 %v4711, %v4745
        %v4783 = vadd.f32 %v4712, %v4745
        %v4784 = vadd.f32 %v4713, %v4745
        %v4785 = vadd.f32 %v4714, %v4745
        %v4786 = vadd.f32 %v4715, %v4745
        %v4787 = vadd.f32 %v4716, %v4745
        %v4788 = vadd.f32 %v4717, %v4745
        %v4789 = vadd.f32 %v4718, %v4745
        %v4790 = vadd.f32 %v4719, %v4745
        %v4791 = vadd.f32 %v4720, %v4745
        %v4792 = vadd.f32 %v4721, %v4745
        %v4793 = vadd.f32 %v4722, %v4745
        %v4794 = vadd.f32 %v4723, %v4745
        %v4795 = vadd.f32 %v4724, %v4745
        %v4796 = vadd.f32 %v4725, %v4745
        %v4797 = vadd.f32 %v4726, %v4745
        %v4798 = vadd.f32 %v4727, %v4745
        %v4799 = vadd.f32 %v4728, %v4745
        %v4800 = vadd.f32 %v4729, %v4745
        %v4801 = vadd.f32 %v4730, %v4745
        %v4802 = vadd.f32 %v4731, %v4745
        %v4803 = vadd.f32 %v4732, %v4745
        %v4804 = vadd.f32 %v4733, %v4745
        %v4805 = vadd.f32 %v4734, %v4745
        %v4806 = vadd.f32 %v4735, %v4745
        %v4807 = vadd.f32 %v4736, %v4745
        %v4808 = vadd.f32 %v4737, %v4745
        %v4809 = vadd.f32 %v4738, %v4745
        %v4810 = vadd.f32 %v4739, %v4745
        %vm4811 = vcmp.ge.f32.partialorder %v4747, 0.0
        %vm4812 = vcmp.ge.f32.partialorder %v4748, 0.0
        %vm4813 = vcmp.ge.f32.partialorder %v4749, 0.0
        %vm4814 = vcmp.ge.f32.partialorder %v4750, 0.0
        %vm4815 = vcmp.ge.f32.partialorder %v4751, 0.0
        %vm4816 = vcmp.ge.f32.partialorder %v4752, 0.0
        %vm4817 = vcmp.ge.f32.partialorder %v4753, 0.0
        %vm4818 = vcmp.ge.f32.partialorder %v4754, 0.0
        %vm4819 = vcmp.ge.f32.partialorder %v4755, 0.0
        %vm4820 = vcmp.ge.f32.partialorder %v4756, 0.0
        %vm4821 = vcmp.ge.f32.partialorder %v4757, 0.0
        %vm4822 = vcmp.ge.f32.partialorder %v4758, 0.0
        %vm4823 = vcmp.ge.f32.partialorder %v4759, 0.0
        %vm4824 = vcmp.ge.f32.partialorder %v4760, 0.0
        %vm4825 = vcmp.ge.f32.partialorder %v4761, 0.0
        %vm4826 = vcmp.ge.f32.partialorder %v4762, 0.0
        %vm4827 = vcmp.ge.f32.partialorder %v4763, 0.0
        %vm4828 = vcmp.ge.f32.partialorder %v4764, 0.0
        %vm4829 = vcmp.ge.f32.partialorder %v4765, 0.0
        %vm4830 = vcmp.ge.f32.partialorder %v4766, 0.0
        %vm4831 = vcmp.ge.f32.partialorder %v4767, 0.0
        %vm4832 = vcmp.ge.f32.partialorder %v4768, 0.0
        %vm4833 = vcmp.ge.f32.partialorder %v4769, 0.0
        %vm4834 = vcmp.ge.f32.partialorder %v4770, 0.0
        %vm4835 = vcmp.ge.f32.partialorder %v4771, 0.0
        %vm4836 = vcmp.ge.f32.partialorder %v4772, 0.0
        %vm4837 = vcmp.ge.f32.partialorder %v4773, 0.0
        %vm4838 = vcmp.ge.f32.partialorder %v4774, 0.0
        %vm4839 = vcmp.ge.f32.partialorder %v4775, 0.0
        %vm4840 = vcmp.ge.f32.partialorder %v4776, 0.0
        %vm4841 = vcmp.ge.f32.partialorder %v4777, 0.0
        %vm4842 = vcmp.ge.f32.partialorder %v4778, 0.0
        %vm4843 = vcmp.ge.f32.partialorder %v4779, 0.0
        %vm4844 = vcmp.ge.f32.partialorder %v4780, 0.0
        %vm4845 = vcmp.ge.f32.partialorder %v4781, 0.0
        %vm4846 = vcmp.ge.f32.partialorder %v4782, 0.0
        %vm4847 = vcmp.ge.f32.partialorder %v4783, 0.0
        %vm4848 = vcmp.ge.f32.partialorder %v4784, 0.0
        %vm4849 = vcmp.ge.f32.partialorder %v4785, 0.0
        %vm4850 = vcmp.ge.f32.partialorder %v4786, 0.0
        %vm4851 = vcmp.ge.f32.partialorder %v4787, 0.0
        %vm4852 = vcmp.ge.f32.partialorder %v4788, 0.0
        %vm4853 = vcmp.ge.f32.partialorder %v4789, 0.0
        %vm4854 = vcmp.ge.f32.partialorder %v4790, 0.0
        %vm4855 = vcmp.ge.f32.partialorder %v4791, 0.0
        %vm4856 = vcmp.ge.f32.partialorder %v4792, 0.0
        %vm4857 = vcmp.ge.f32.partialorder %v4793, 0.0
        %vm4858 = vcmp.ge.f32.partialorder %v4794, 0.0
        %vm4859 = vcmp.ge.f32.partialorder %v4795, 0.0
        %vm4860 = vcmp.ge.f32.partialorder %v4796, 0.0
        %vm4861 = vcmp.ge.f32.partialorder %v4797, 0.0
        %vm4862 = vcmp.ge.f32.partialorder %v4798, 0.0
        %vm4863 = vcmp.ge.f32.partialorder %v4799, 0.0
        %vm4864 = vcmp.ge.f32.partialorder %v4800, 0.0
        %vm4865 = vcmp.ge.f32.partialorder %v4801, 0.0
        %vm4866 = vcmp.ge.f32.partialorder %v4802, 0.0
        %vm4867 = vcmp.ge.f32.partialorder %v4803, 0.0
        %vm4868 = vcmp.ge.f32.partialorder %v4804, 0.0
        %vm4869 = vcmp.ge.f32.partialorder %v4805, 0.0
        %vm4870 = vcmp.ge.f32.partialorder %v4806, 0.0
        %vm4871 = vcmp.ge.f32.partialorder %v4807, 0.0
        %vm4872 = vcmp.ge.f32.partialorder %v4808, 0.0
        %vm4873 = vcmp.ge.f32.partialorder %v4809, 0.0
        %vm4874 = vcmp.ge.f32.partialorder %v4810, 0.0
        %v4875 = vmul.f32 %v4747, 0.01
        %v4876 = vmul.f32 %v4748, 0.01
        %v4877 = vmul.f32 %v4749, 0.01
        %v4878 = vmul.f32 %v4750, 0.01
        %v4879 = vmul.f32 %v4751, 0.01
        %v4880 = vmul.f32 %v4752, 0.01
        %v4881 = vmul.f32 %v4753, 0.01
        %v4882 = vmul.f32 %v4754, 0.01
        %v4883 = vmul.f32 %v4755, 0.01
        %v4884 = vmul.f32 %v4756, 0.01
        %v4885 = vmul.f32 %v4757, 0.01
        %v4886 = vmul.f32 %v4758, 0.01
        %v4887 = vmul.f32 %v4759, 0.01
        %v4888 = vmul.f32 %v4760, 0.01
        %v4889 = vmul.f32 %v4761, 0.01
        %v4890 = vmul.f32 %v4762, 0.01
        %v4891 = vmul.f32 %v4763, 0.01
        %v4892 = vmul.f32 %v4764, 0.01
        %v4893 = vmul.f32 %v4765, 0.01
        %v4894 = vmul.f32 %v4766, 0.01
        %v4895 = vmul.f32 %v4767, 0.01
        %v4896 = vmul.f32 %v4768, 0.01
        %v4897 = vmul.f32 %v4769, 0.01
        %v4898 = vmul.f32 %v4770, 0.01
        %v4899 = vmul.f32 %v4771, 0.01
        %v4900 = vmul.f32 %v4772, 0.01
        %v4901 = vmul.f32 %v4773, 0.01
        %v4902 = vmul.f32 %v4774, 0.01
        %v4903 = vmul.f32 %v4775, 0.01
        %v4904 = vmul.f32 %v4776, 0.01
        %v4905 = vmul.f32 %v4777, 0.01
        %v4906 = vmul.f32 %v4778, 0.01
        %v4907 = vmul.f32 %v4779, 0.01
        %v4908 = vmul.f32 %v4780, 0.01
        %v4909 = vmul.f32 %v4781, 0.01
        %v4910 = vmul.f32 %v4782, 0.01
        %v4911 = vmul.f32 %v4783, 0.01
        %v4912 = vmul.f32 %v4784, 0.01
        %v4913 = vmul.f32 %v4785, 0.01
        %v4914 = vmul.f32 %v4786, 0.01
        %v4915 = vmul.f32 %v4787, 0.01
        %v4916 = vmul.f32 %v4788, 0.01
        %v4917 = vmul.f32 %v4789, 0.01
        %v4918 = vmul.f32 %v4790, 0.01
        %v4919 = vmul.f32 %v4791, 0.01
        %v4920 = vmul.f32 %v4792, 0.01
        %v4921 = vmul.f32 %v4793, 0.01
        %v4922 = vmul.f32 %v4794, 0.01
        %v4923 = vmul.f32 %v4795, 0.01
        %v4924 = vmul.f32 %v4796, 0.01
        %v4925 = vmul.f32 %v4797, 0.01
        %v4926 = vmul.f32 %v4798, 0.01
        %v4927 = vmul.f32 %v4799, 0.01
        %v4928 = vmul.f32 %v4800, 0.01
        %v4929 = vmul.f32 %v4801, 0.01
        %v4930 = vmul.f32 %v4802, 0.01
        %v4931 = vmul.f32 %v4803, 0.01
        %v4932 = vmul.f32 %v4804, 0.01
        %v4933 = vmul.f32 %v4805, 0.01
        %v4934 = vmul.f32 %v4806, 0.01
        %v4935 = vmul.f32 %v4807, 0.01
        %v4936 = vmul.f32 %v4808, 0.01
        %v4937 = vmul.f32 %v4809, 0.01
        %v4938 = vmul.f32 %v4810, 0.01
        %v4939 = vsel %vm4811, %v4747, %v4875
        %v4940 = vsel %vm4812, %v4748, %v4876
        %v4941 = vsel %vm4813, %v4749, %v4877
        %v4942 = vsel %vm4814, %v4750, %v4878
        %v4943 = vsel %vm4815, %v4751, %v4879
        %v4944 = vsel %vm4816, %v4752, %v4880
        %v4945 = vsel %vm4817, %v4753, %v4881
        %v4946 = vsel %vm4818, %v4754, %v4882
        %v4947 = vsel %vm4819, %v4755, %v4883
        %v4948 = vsel %vm4820, %v4756, %v4884
        %v4949 = vsel %vm4821, %v4757, %v4885
        %v4950 = vsel %vm4822, %v4758, %v4886
        %v4951 = vsel %vm4823, %v4759, %v4887
        %v4952 = vsel %vm4824, %v4760, %v4888
        %v4953 = vsel %vm4825, %v4761, %v4889
        %v4954 = vsel %vm4826, %v4762, %v4890
        %v4955 = vsel %vm4827, %v4763, %v4891
        %v4956 = vsel %vm4828, %v4764, %v4892
        %v4957 = vsel %vm4829, %v4765, %v4893
        %v4958 = vsel %vm4830, %v4766, %v4894
        %v4959 = vsel %vm4831, %v4767, %v4895
        %v4960 = vsel %vm4832, %v4768, %v4896
        %v4961 = vsel %vm4833, %v4769, %v4897
        %v4962 = vsel %vm4834, %v4770, %v4898
        %v4963 = vsel %vm4835, %v4771, %v4899
        %v4964 = vsel %vm4836, %v4772, %v4900
        %v4965 = vsel %vm4837, %v4773, %v4901
        %v4966 = vsel %vm4838, %v4774, %v4902
        %v4967 = vsel %vm4839, %v4775, %v4903
        %v4968 = vsel %vm4840, %v4776, %v4904
        %v4969 = vsel %vm4841, %v4777, %v4905
        %v4970 = vsel %vm4842, %v4778, %v4906
        %v4971 = vsel %vm4843, %v4779, %v4907
        %v4972 = vsel %vm4844, %v4780, %v4908
        %v4973 = vsel %vm4845, %v4781, %v4909
        %v4974 = vsel %vm4846, %v4782, %v4910
        %v4975 = vsel %vm4847, %v4783, %v4911
        %v4976 = vsel %vm4848, %v4784, %v4912
        %v4977 = vsel %vm4849, %v4785, %v4913
        %v4978 = vsel %vm4850, %v4786, %v4914
        %v4979 = vsel %vm4851, %v4787, %v4915
        %v4980 = vsel %vm4852, %v4788, %v4916
        %v4981 = vsel %vm4853, %v4789, %v4917
        %v4982 = vsel %vm4854, %v4790, %v4918
        %v4983 = vsel %vm4855, %v4791, %v4919
        %v4984 = vsel %vm4856, %v4792, %v4920
        %v4985 = vsel %vm4857, %v4793, %v4921
        %v4986 = vsel %vm4858, %v4794, %v4922
        %v4987 = vsel %vm4859, %v4795, %v4923
        %v4988 = vsel %vm4860, %v4796, %v4924
        %v4989 = vsel %vm4861, %v4797, %v4925
        %v4990 = vsel %vm4862, %v4798, %v4926
        %v4991 = vsel %vm4863, %v4799, %v4927
        %v4992 = vsel %vm4864, %v4800, %v4928
        %v4993 = vsel %vm4865, %v4801, %v4929
        %v4994 = vsel %vm4866, %v4802, %v4930
        %v4995 = vsel %vm4867, %v4803, %v4931
        %v4996 = vsel %vm4868, %v4804, %v4932
        %v4997 = vsel %vm4869, %v4805, %v4933
        %v4998 = vsel %vm4870, %v4806, %v4934
        %v4999 = vsel %vm4871, %v4807, %v4935
        %v5000 = vsel %vm4872, %v4808, %v4936
        %v5001 = vsel %vm4873, %v4809, %v4937
        %v5002 = vsel %vm4874, %v4810, %v4938
        %v5003 = vpack.c.bf16 %v4940, %v4939
        %v5004 = vpack.c.bf16 %v4942, %v4941
        %v5005 = vpack.c.bf16 %v4944, %v4943
        %v5006 = vpack.c.bf16 %v4946, %v4945
        %v5007 = vpack.c.bf16 %v4948, %v4947
        %v5008 = vpack.c.bf16 %v4950, %v4949
        %v5009 = vpack.c.bf16 %v4952, %v4951
        %v5010 = vpack.c.bf16 %v4954, %v4953
        %v5011 = vpack.c.bf16 %v4956, %v4955
        %v5012 = vpack.c.bf16 %v4958, %v4957
        %v5013 = vpack.c.bf16 %v4960, %v4959
        %v5014 = vpack.c.bf16 %v4962, %v4961
        %v5015 = vpack.c.bf16 %v4964, %v4963
        %v5016 = vpack.c.bf16 %v4966, %v4965
        %v5017 = vpack.c.bf16 %v4968, %v4967
        %v5018 = vpack.c.bf16 %v4970, %v4969
        %v5019 = vpack.c.bf16 %v4972, %v4971
        %v5020 = vpack.c.bf16 %v4974, %v4973
        %v5021 = vpack.c.bf16 %v4976, %v4975
        %v5022 = vpack.c.bf16 %v4978, %v4977
        %v5023 = vpack.c.bf16 %v4980, %v4979
        %v5024 = vpack.c.bf16 %v4982, %v4981
        %v5025 = vpack.c.bf16 %v4984, %v4983
        %v5026 = vpack.c.bf16 %v4986, %v4985
        %v5027 = vpack.c.bf16 %v4988, %v4987
        %v5028 = vpack.c.bf16 %v4990, %v4989
        %v5029 = vpack.c.bf16 %v4992, %v4991
        %v5030 = vpack.c.bf16 %v4994, %v4993
        %v5031 = vpack.c.bf16 %v4996, %v4995
        %v5032 = vpack.c.bf16 %v4998, %v4997
        %v5033 = vpack.c.bf16 %v5000, %v4999
        %v5034 = vpack.c.bf16 %v5002, %v5001
        %v5067 = vunpack.c.l.b16 %v5003
        %v5068 = vunpack.c.h.b16 %v5003
        %v5069 = vunpack.c.l.b16 %v5004
        %v5070 = vunpack.c.h.b16 %v5004
        %v5071 = vunpack.c.l.b16 %v5005
        %v5072 = vunpack.c.h.b16 %v5005
        %v5073 = vunpack.c.l.b16 %v5006
        %v5074 = vunpack.c.h.b16 %v5006
        %v5075 = vunpack.c.l.b16 %v5007
        %v5076 = vunpack.c.h.b16 %v5007
        %v5077 = vunpack.c.l.b16 %v5008
        %v5078 = vunpack.c.h.b16 %v5008
        %v5079 = vunpack.c.l.b16 %v5009
        %v5080 = vunpack.c.h.b16 %v5009
        %v5081 = vunpack.c.l.b16 %v5010
        %v5082 = vunpack.c.h.b16 %v5010
        %v5083 = vunpack.c.l.b16 %v5011
        %v5084 = vunpack.c.h.b16 %v5011
        %v5085 = vunpack.c.l.b16 %v5012
        %v5086 = vunpack.c.h.b16 %v5012
        %v5087 = vunpack.c.l.b16 %v5013
        %v5088 = vunpack.c.h.b16 %v5013
        %v5089 = vunpack.c.l.b16 %v5014
        %v5090 = vunpack.c.h.b16 %v5014
        %v5091 = vunpack.c.l.b16 %v5015
        %v5092 = vunpack.c.h.b16 %v5015
        %v5093 = vunpack.c.l.b16 %v5016
        %v5094 = vunpack.c.h.b16 %v5016
        %v5095 = vunpack.c.l.b16 %v5017
        %v5096 = vunpack.c.h.b16 %v5017
        %v5097 = vunpack.c.l.b16 %v5018
        %v5098 = vunpack.c.h.b16 %v5018
        %v5099 = vunpack.c.l.b16 %v5019
        %v5100 = vunpack.c.h.b16 %v5019
        %v5101 = vunpack.c.l.b16 %v5020
        %v5102 = vunpack.c.h.b16 %v5020
        %v5103 = vunpack.c.l.b16 %v5021
        %v5104 = vunpack.c.h.b16 %v5021
        %v5105 = vunpack.c.l.b16 %v5022
        %v5106 = vunpack.c.h.b16 %v5022
        %v5107 = vunpack.c.l.b16 %v5023
        %v5108 = vunpack.c.h.b16 %v5023
        %v5109 = vunpack.c.l.b16 %v5024
        %v5110 = vunpack.c.h.b16 %v5024
        %v5111 = vunpack.c.l.b16 %v5025
        %v5112 = vunpack.c.h.b16 %v5025
        %v5113 = vunpack.c.l.b16 %v5026
        %v5114 = vunpack.c.h.b16 %v5026
        %v5115 = vunpack.c.l.b16 %v5027
        %v5116 = vunpack.c.h.b16 %v5027
        %v5117 = vunpack.c.l.b16 %v5028
        %v5118 = vunpack.c.h.b16 %v5028
        %v5119 = vunpack.c.l.b16 %v5029
        %v5120 = vunpack.c.h.b16 %v5029
        %v5121 = vunpack.c.l.b16 %v5030
        %v5122 = vunpack.c.h.b16 %v5030
        %v5123 = vunpack.c.l.b16 %v5031
        %v5124 = vunpack.c.h.b16 %v5031
        %v5125 = vunpack.c.l.b16 %v5032
        %v5126 = vunpack.c.h.b16 %v5032
        %v5127 = vunpack.c.l.b16 %v5033
        %v5128 = vunpack.c.h.b16 %v5033
        %v5129 = vunpack.c.l.b16 %v5034
        %v5130 = vunpack.c.h.b16 %v5034
        %v5131 = vpack.c.b16 %v5067, %v5067
        %v5132 = vpack.c.b16 %v5068, %v5068
        %v5133 = vpack.c.b16 %v5069, %v5069
        %v5134 = vpack.c.b16 %v5070, %v5070
        %v5135 = vpack.c.b16 %v5071, %v5071
        %v5136 = vpack.c.b16 %v5072, %v5072
        %v5137 = vpack.c.b16 %v5073, %v5073
        %v5138 = vpack.c.b16 %v5074, %v5074
        %v5139 = vpack.c.b16 %v5075, %v5075
        %v5140 = vpack.c.b16 %v5076, %v5076
        %v5141 = vpack.c.b16 %v5077, %v5077
        %v5142 = vpack.c.b16 %v5078, %v5078
        %v5143 = vpack.c.b16 %v5079, %v5079
        %v5144 = vpack.c.b16 %v5080, %v5080
        %v5145 = vpack.c.b16 %v5081, %v5081
        %v5146 = vpack.c.b16 %v5082, %v5082
        %v5147 = vpack.c.b16 %v5083, %v5083
        %v5148 = vpack.c.b16 %v5084, %v5084
        %v5149 = vpack.c.b16 %v5085, %v5085
        %v5150 = vpack.c.b16 %v5086, %v5086
        %v5151 = vpack.c.b16 %v5087, %v5087
        %v5152 = vpack.c.b16 %v5088, %v5088
        %v5153 = vpack.c.b16 %v5089, %v5089
        %v5154 = vpack.c.b16 %v5090, %v5090
        %v5155 = vpack.c.b16 %v5091, %v5091
        %v5156 = vpack.c.b16 %v5092, %v5092
        %v5157 = vpack.c.b16 %v5093, %v5093
        %v5158 = vpack.c.b16 %v5094, %v5094
        %v5159 = vpack.c.b16 %v5095, %v5095
        %v5160 = vpack.c.b16 %v5096, %v5096
        %v5161 = vpack.c.b16 %v5097, %v5097
        %v5162 = vpack.c.b16 %v5098, %v5098
        %v5163 = vpack.c.b16 %v5099, %v5099
        %v5164 = vpack.c.b16 %v5100, %v5100
        %v5165 = vpack.c.b16 %v5101, %v5101
        %v5166 = vpack.c.b16 %v5102, %v5102
        %v5167 = vpack.c.b16 %v5103, %v5103
        %v5168 = vpack.c.b16 %v5104, %v5104
        %v5169 = vpack.c.b16 %v5105, %v5105
        %v5170 = vpack.c.b16 %v5106, %v5106
        %v5171 = vpack.c.b16 %v5107, %v5107
        %v5172 = vpack.c.b16 %v5108, %v5108
        %v5173 = vpack.c.b16 %v5109, %v5109
        %v5174 = vpack.c.b16 %v5110, %v5110
        %v5175 = vpack.c.b16 %v5111, %v5111
        %v5176 = vpack.c.b16 %v5112, %v5112
        %v5177 = vpack.c.b16 %v5113, %v5113
        %v5178 = vpack.c.b16 %v5114, %v5114
        %v5179 = vpack.c.b16 %v5115, %v5115
        %v5180 = vpack.c.b16 %v5116, %v5116
        %v5181 = vpack.c.b16 %v5117, %v5117
        %v5182 = vpack.c.b16 %v5118, %v5118
        %v5183 = vpack.c.b16 %v5119, %v5119
        %v5184 = vpack.c.b16 %v5120, %v5120
        %v5185 = vpack.c.b16 %v5121, %v5121
        %v5186 = vpack.c.b16 %v5122, %v5122
        %v5187 = vpack.c.b16 %v5123, %v5123
        %v5188 = vpack.c.b16 %v5124, %v5124
        %v5189 = vpack.c.b16 %v5125, %v5125
        %v5190 = vpack.c.b16 %v5126, %v5126
        %v5191 = vpack.c.b16 %v5127, %v5127
        %v5192 = vpack.c.b16 %v5128, %v5128
        %v5193 = vpack.c.b16 %v5129, %v5129
        %v5194 = vpack.c.b16 %v5130, %v5130
        %5259 = vst [vmem:[%s182] sm:$0xf] %v5131
        %5260 = vst [vmem:[%s182 + $0x4] sm:$0xf] %v5132
        %5261 = vst [vmem:[%s182 + $0x8] sm:$0xf] %v5133
        %5262 = vst [vmem:[%s182 + $0xc] sm:$0xf] %v5134
        %5263 = vst [vmem:[%s182 + $0x10] sm:$0xf] %v5135
        %5264 = vst [vmem:[%s182 + $0x14] sm:$0xf] %v5136
        %5265 = vst [vmem:[%s182 + $0x18] sm:$0xf] %v5137
        %5266 = vst [vmem:[%s182 + $0x1c] sm:$0xf] %v5138
        %5267 = vst [vmem:[%s182 + $0x20] sm:$0xf] %v5139
        %5268 = vst [vmem:[%s182 + $0x24] sm:$0xf] %v5140
        %5269 = vst [vmem:[%s182 + $0x28] sm:$0xf] %v5141
        %5270 = vst [vmem:[%s182 + $0x2c] sm:$0xf] %v5142
        %5271 = vst [vmem:[%s182 + $0x30] sm:$0xf] %v5143
        %5272 = vst [vmem:[%s182 + $0x34] sm:$0xf] %v5144
        %5273 = vst [vmem:[%s182 + $0x38] sm:$0xf] %v5145
        %5274 = vst [vmem:[%s182 + $0x3c] sm:$0xf] %v5146
        %5275 = vst [vmem:[%s182 + $0x40] sm:$0xf] %v5147
        %5276 = vst [vmem:[%s182 + $0x44] sm:$0xf] %v5148
        %5277 = vst [vmem:[%s182 + $0x48] sm:$0xf] %v5149
        %5278 = vst [vmem:[%s182 + $0x4c] sm:$0xf] %v5150
        %5279 = vst [vmem:[%s182 + $0x50] sm:$0xf] %v5151
        %5280 = vst [vmem:[%s182 + $0x54] sm:$0xf] %v5152
        %5281 = vst [vmem:[%s182 + $0x58] sm:$0xf] %v5153
        %5282 = vst [vmem:[%s182 + $0x5c] sm:$0xf] %v5154
        %5283 = vst [vmem:[%s182 + $0x60] sm:$0xf] %v5155
        %5284 = vst [vmem:[%s182 + $0x64] sm:$0xf] %v5156
        %5285 = vst [vmem:[%s182 + $0x68] sm:$0xf] %v5157
        %5286 = vst [vmem:[%s182 + $0x6c] sm:$0xf] %v5158
        %5287 = vst [vmem:[%s182 + $0x70] sm:$0xf] %v5159
        %5288 = vst [vmem:[%s182 + $0x74] sm:$0xf] %v5160
        %5289 = vst [vmem:[%s182 + $0x78] sm:$0xf] %v5161
        %5290 = vst [vmem:[%s182 + $0x7c] sm:$0xf] %v5162
        %5291 = vst [vmem:[%s182 + $0x80] sm:$0xf] %v5163
        %5292 = vst [vmem:[%s182 + $0x84] sm:$0xf] %v5164
        %5293 = vst [vmem:[%s182 + $0x88] sm:$0xf] %v5165
        %5294 = vst [vmem:[%s182 + $0x8c] sm:$0xf] %v5166
        %5295 = vst [vmem:[%s182 + $0x90] sm:$0xf] %v5167
        %5296 = vst [vmem:[%s182 + $0x94] sm:$0xf] %v5168
        %5297 = vst [vmem:[%s182 + $0x98] sm:$0xf] %v5169
        %5298 = vst [vmem:[%s182 + $0x9c] sm:$0xf] %v5170
        %5299 = vst [vmem:[%s182 + $0xa0] sm:$0xf] %v5171
        %5300 = vst [vmem:[%s182 + $0xa4] sm:$0xf] %v5172
        %5301 = vst [vmem:[%s182 + $0xa8] sm:$0xf] %v5173
        %5302 = vst [vmem:[%s182 + $0xac] sm:$0xf] %v5174
        %5303 = vst [vmem:[%s182 + $0xb0] sm:$0xf] %v5175
        %5304 = vst [vmem:[%s182 + $0xb4] sm:$0xf] %v5176
        %5305 = vst [vmem:[%s182 + $0xb8] sm:$0xf] %v5177
        %5306 = vst [vmem:[%s182 + $0xbc] sm:$0xf] %v5178
        %5307 = vst [vmem:[%s182 + $0xc0] sm:$0xf] %v5179
        %5308 = vst [vmem:[%s182 + $0xc4] sm:$0xf] %v5180
        %5309 = vst [vmem:[%s182 + $0xc8] sm:$0xf] %v5181
        %5310 = vst [vmem:[%s182 + $0xcc] sm:$0xf] %v5182
        %5311 = vst [vmem:[%s182 + $0xd0] sm:$0xf] %v5183
        %5312 = vst [vmem:[%s182 + $0xd4] sm:$0xf] %v5184
        %5313 = vst [vmem:[%s182 + $0xd8] sm:$0xf] %v5185
        %5314 = vst [vmem:[%s182 + $0xdc] sm:$0xf] %v5186
        %5315 = vst [vmem:[%s182 + $0xe0] sm:$0xf] %v5187
        %5316 = vst [vmem:[%s182 + $0xe4] sm:$0xf] %v5188
        %5317 = vst [vmem:[%s182 + $0xe8] sm:$0xf] %v5189
        %5318 = vst [vmem:[%s182 + $0xec] sm:$0xf] %v5190
        %5319 = vst [vmem:[%s182 + $0xf0] sm:$0xf] %v5191
        %5320 = vst [vmem:[%s182 + $0xf4] sm:$0xf] %v5192
        %5321 = vst [vmem:[%s182 + $0xf8] sm:$0xf] %v5193
        %5322 = vst [vmem:[%s182 + $0xfc] sm:$0xf] %v5194
      $region112: #{_lambda_.1} parent=31 // pred_fallthru
        _
      %s5323 = smul.u32 16, %s21
      %p5324 = scmp.lt.s32.totalorder %s20, 1
      %s5325 = scalar_select %p5324, %s20, 1
      %p5326 = scmp.lt.s32.totalorder %s5323, 15
      %s5327 = scalar_select %p5326, %s5323, 15
      %s5328 = smul.addr %s5327, 4
      %s5329 = smul.addr %s5325, 64
      %s5330 = sadd.s32 %s5328, %s5329
      %s5331 = smul.addr %s5330, 4
      %s5332 = scalar_lea.vmem %s4, %s5331
      // Predicated region
      $region113: #{_lambda_.1} parent=31 // pred_check
        %p5333 = pneg %p117
      $region114: #{_lambda_.1} parent=31 // pred_check_branch
        %5335 = sbr.rel (%p5333) target = $region116
      $region115: #{_lambda_.1} parent=31 // pred_region
        %s5336 = smul.u32 16, %s21
      $region116: #{_lambda_.1} parent=31 // pred_fallthru
        _
    $region32: #{_lambda_.1} parent=5 // pred_fallthru
      _
    %p5337 = scmp.le.s32.totalorder 2, %s10
    // Predicated region
    $region117: #{_lambda_.1} parent=5 // pred_check
      %p5338 = pneg %p5337
    $region118: #{_lambda_.1} parent=5 // pred_check_branch
      %5340 = sbr.rel (%p5338) target = $region120
    $region119: #{_lambda_.1} parent=5 // pred_region
      %s5341 = ssub.s32 %s10, 2
      // Predicated region
      $region121: #{_lambda_.1} parent=119 // pred_check
        %p5342 = pneg %p123
      $region122: #{_lambda_.1} parent=119 // pred_check_branch
        %5344 = sbr.rel (%p5342) target = $region124
      $region123: #{_lambda_.1} parent=119 // pred_region
        %s5345 = smul.u32 16, %s24
        %p5346 = scmp.lt.s32.totalorder %s23, 1
        %s5347 = scalar_select %p5346, %s23, 1
        %p5348 = scmp.lt.s32.totalorder %s5345, 15
        %s5349 = scalar_select %p5348, %s5345, 15
        %s5350 = smul.addr %s5349, 4
        %s5351 = smul.addr %s5347, 64
        %s5352 = sadd.s32 %s5350, %s5351
        %s5353 = smul.addr %s5352, 4
        %s5354 = scalar_lea.vmem %s4, %s5353
      $region124: #{_lambda_.1} parent=119 // pred_fallthru
        _
    $region120: #{_lambda_.1} parent=5 // pred_fallthru
      _
  $region6: #{_lambda_.1} parent=0 // loop_footer
    %s14 = sadd.s32 1, %s10
  $region7: #{_lambda_.1} parent=0 // loop_footer_branch
    %9 = sbr.rel target = $region3
  $region8: #{_lambda_.1} parent=0 // loop_exit
    _
  %5355 = vsyncmov [#allocation4]
  %s5356 = vpop.sfrf %5355
  %p5357 = scmp.eq.s32.totalorder %s5356, 0
  %p5358 = pneg %p5357
  %5360 = shalt.err (%p5358)
  %s5361 = scalar_lea.sflag [#allocation4], 1
  %5362 = vsyncmov %s5361
  %s5363 = vpop.sfrf %5362
  %p5364 = scmp.eq.s32.totalorder %s5363, 0
  %p5365 = pneg %p5364
  %5367 = shalt.err (%p5365)

</llo_original>
